<compile_context>
chip_gen: v6e
topology: v6e:2x2x1
jax: 0.10.0
libtpu: 0.0.40
codegen_flags: <defaults>
</compile_context>

<pallas_src>
import functools
import math

import jax
import jax.numpy as jnp
from jax.experimental import pallas as pl
from jax.experimental.pallas import tpu as pltpu

EPS = 1e-6
NEG_INF = -1e9

# Perf knob (v6e/v7x): stream weights as bf16 (cast HOST-side in _pack_params)
# and run MXU matmuls at native bf16 rate with f32 accumulation.  Off by
# default to stay bit-faithful to the f32 reference.
_USE_BF16_MATMUL = False

# Row indices inside the packed per-layer "vector params" array (13, D).
(_V_LN0G, _V_LN0B, _V_BQ1, _V_BK1, _V_BO1,
 _V_LN1G, _V_LN1B, _V_BQ2, _V_BK2, _V_BO2,
 _V_LN2G, _V_LN2B, _V_B2) = range(13)

_VEC_KEYS = ("ln0_g", "ln0_b", "bq1", "bk1", "bo1",
             "ln1_g", "ln1_b", "bq2", "bk2", "bo2",
             "ln2_g", "ln2_b", "b2")
_WATTN_KEYS = ("wq1", "wk1", "wo1", "wq2", "wk2", "wo2")


# ----------------------------- in-kernel math -----------------------------

def _mm(a, b):
    if _USE_BF16_MATMUL:
        a = a.astype(jnp.bfloat16)
        if b.dtype != jnp.bfloat16:
            b = b.astype(jnp.bfloat16)
    return jnp.dot(a, b, preferred_element_type=jnp.float32)


def _bmm_nt(a, b):  # (B,M,D) x (B,N,D) -> (B,M,N)
    if _USE_BF16_MATMUL:
        a = a.astype(jnp.bfloat16)
        b = b.astype(jnp.bfloat16)
    return jnp.einsum("bmd,bnd->bmn", a, b, preferred_element_type=jnp.float32)


def _bmm_nn(a, b):  # (B,M,N) x (B,N,D) -> (B,M,D); kept f32 (attention context)
    return jnp.einsum("bmn,bnd->bmd", a, b, preferred_element_type=jnp.float32)


def _layer_norm(x, g, b):
    # Matches reference LayerNorm: a*(x-mean)/(std+eps)+b with unbiased std.
    d = x.shape[-1]
    mean = jnp.mean(x, axis=-1, keepdims=True)
    var = jnp.sum((x - mean) ** 2, axis=-1, keepdims=True) * (1.0 / (d - 1))
    # Exact reciprocal here: LN output feeds the residual stream 3x per layer.
    inv = pl.reciprocal(jnp.sqrt(var) + EPS, approx=False)
    return g * (x - mean) * inv + b


def _attention(q_in, kv_in, v_in, mask_add, wq, bq, wk, bk, wo, bo,
               scale, B, Sq, Sk):
    # Reference quirk: V is NOT projected (third linear's result is discarded).
    d = q_in.shape[-1]
    q = (_mm(q_in, wq) + bq).reshape(B, Sq, d)          # (B, Sq, D)
    k = (_mm(kv_in, wk) + bk).reshape(B, Sk, d)         # (B, Sk, D)
    v = v_in.reshape(B, Sk, d)                          # raw V input
    scores = _bmm_nt(q, k) * scale + mask_add           # additive mask (0 / -1e9)
    scores = scores - jnp.max(scores, axis=-1, keepdims=True)
    p = jnp.exp(scores)
    # Softmax denominator on the EUP slot (otherwise idle): approx is fine here.
    p = p * pl.reciprocal(jnp.sum(p, axis=-1, keepdims=True), approx=True)
    ctx = _bmm_nn(p, v).reshape(B * Sq, d)
    return _mm(ctx, wo) + bo


# ------------------------------- the kernel -------------------------------

def fused_decoder_kernel(x_ref, mem_ref, tmask_ref, smask_ref,
                         wattn_ref, vecs_ref, w1_ref, b1_ref, w2_ref, fin_ref,
                         out_ref, *, num_layers, B, S, S_src, scale,
                         apply_final_norm):
    x = x_ref[...]              # (B*S, D) activation (HBM buffer aliased to out)
    mem = mem_ref[...]          # (B*S_src, D)
    tmask = tmask_ref[...]      # (B, S, S)      additive f32 mask
    smask = smask_ref[...]      # (B, S, S_src)  additive f32 mask

    for l in range(num_layers):     # static unroll: whole stack in one grid step
        V = vecs_ref[l]             # (13, D) packed biases / LN params

        def vrow(i, V=V):
            return V[i:i + 1]       # (1, D)

        # Sublayer 0: pre-norm masked self-attention + residual.
        xn = _layer_norm(x, vrow(_V_LN0G), vrow(_V_LN0B))
        x = x + _attention(xn, xn, xn, tmask,
                           wattn_ref[l, 0], vrow(_V_BQ1),
                           wattn_ref[l, 1], vrow(_V_BK1),
                           wattn_ref[l, 2], vrow(_V_BO1),
                           scale, B, S, S)

        # Sublayer 1: pre-norm source attention + residual (memory used raw as K/V input).
        xn = _layer_norm(x, vrow(_V_LN1G), vrow(_V_LN1B))
        x = x + _attention(xn, mem, mem, smask,
                           wattn_ref[l, 3], vrow(_V_BQ2),
                           wattn_ref[l, 4], vrow(_V_BK2),
                           wattn_ref[l, 5], vrow(_V_BO2),
                           scale, B, S, S_src)

        # Sublayer 2: pre-norm feed-forward (no activation in the reference).
        xn = _layer_norm(x, vrow(_V_LN2G), vrow(_V_LN2B))
        hidden = _mm(xn, w1_ref[l]) + b1_ref[l]
        x = x + _mm(hidden, w2_ref[l]) + vrow(_V_B2)

    if apply_final_norm:
        fin = fin_ref[...]                       # (2, D): [gamma; beta]
        x = _layer_norm(x, fin[0:1], fin[1:2])

    out_ref[...] = x            # exactly one (B*S, D) store


# ------------------------------ host wrapper -------------------------------

def _pack_params(layer_params):
    wdt = jnp.bfloat16 if _USE_BF16_MATMUL else jnp.float32
    wattn = jnp.stack(
        [jnp.stack([p[k] for k in _WATTN_KEYS], axis=0) for p in layer_params],
        axis=0).astype(wdt)                                            # (N, 6, D, D)
    vecs = jnp.stack(
        [jnp.concatenate([p[k].reshape(1, -1) for k in _VEC_KEYS], axis=0)
         for p in layer_params], axis=0).astype(jnp.float32)           # (N, 13, D)
    w1 = jnp.stack([p["w1"] for p in layer_params], axis=0).astype(wdt)    # (N, D, FF)
    b1 = jnp.stack([p["b1"].reshape(1, -1) for p in layer_params],
                   axis=0).astype(jnp.float32)                             # (N, 1, FF)
    w2 = jnp.stack([p["w2"] for p in layer_params], axis=0).astype(wdt)    # (N, FF, D)
    return wattn, vecs, w1, b1, w2


@functools.partial(jax.jit, static_argnames=("h", "apply_final_norm"))
def decoder_forward(x, memory, src_mask, tgt_mask, layer_params,
                    final_g, final_b, h, apply_final_norm=True):
    B, S, D = x.shape
    S_src = memory.shape[1]
    N = len(layer_params)
    d_k = D // h                    # q.size(-1) in the reference (h must be 1)
    scale = 1.0 / math.sqrt(d_k)

    wattn, vecs, w1s, b1s, w2s = _pack_params(layer_params)
    fin = jnp.concatenate([final_g.reshape(1, D), final_b.reshape(1, D)], axis=0)

    # Fold batch into the matmul M dimension (activations as (B*S, D)).
    x2 = x.reshape(B * S, D).astype(jnp.float32)
    m2 = memory.reshape(B * S_src, D).astype(jnp.float32)

    # Additive masks (0 where attended, -1e9 where masked): removes the
    # per-score compare+select from the kernel and shrinks mask DMA.
    tmask = jnp.where(tgt_mask != 0, NEG_INF, 0.0).astype(jnp.float32)
    smask = jnp.where(src_mask != 0, NEG_INF, 0.0).astype(jnp.float32)

    kernel = functools.partial(fused_decoder_kernel, num_layers=N, B=B, S=S,
                               S_src=S_src, scale=scale,
                               apply_final_norm=apply_final_norm)

    out2 = pl.pallas_call(
        kernel,
        out_shape=jax.ShapeDtypeStruct((B * S, D), jnp.float32),
        # No grid / BlockSpecs: every operand is a single whole-array VMEM
        # block (< 128 KiB total at these shapes), so the whole N-layer stack
        # runs in ONE grid step with zero per-layer pipelining overhead.
        # (For realistic D, switch back to a layer-grid with streamed /
        #  bf16 weights so per-layer weight blocks fit v7x's 64 MiB VMEM.)
        input_output_aliases={0: 0},   # x2's HBM buffer is reused as the output
        compiler_params=pltpu.CompilerParams(vmem_limit_bytes=32 * 1024 * 1024),
    )(x2, m2, tmask, smask, wattn, vecs, w1s, b1s, w2s, fin)

    return out2.reshape(B, S, D)


# -------------------------- pure-JAX reference -----------------------------

def _reference_forward(x, memory, src_mask, tgt_mask, layer_params,
                       final_g, final_b, h, apply_final_norm=True):
    d_k = x.shape[-1] // h
    scale = 1.0 / math.sqrt(d_k)

    def ln(x, g, b):
        mean = jnp.mean(x, axis=-1, keepdims=True)
        var = jnp.sum((x - mean) ** 2, axis=-1, keepdims=True) / (x.shape[-1] - 1)
        return g * (x - mean) / (jnp.sqrt(var) + EPS) + b

    def attn(q_in, kv_in, v_in, mask, wq, bq, wk, bk, wo, bo):
        q = q_in @ wq + bq
        k = kv_in @ wk + bk
        s = jnp.einsum("bqd,bkd->bqk", q, k) * scale
        s = jnp.where(mask != 0, NEG_INF, s)
        p = jax.nn.softmax(s, axis=-1)
        ctx = jnp.einsum("bqk,bkd->bqd", p, v_in)
        return ctx @ wo + bo

    for p in layer_params:
        xn = ln(x, p["ln0_g"], p["ln0_b"])
        x = x + attn(xn, xn, xn, tgt_mask,
                     p["wq1"], p["bq1"], p["wk1"], p["bk1"], p["wo1"], p["bo1"])
        xn = ln(x, p["ln1_g"], p["ln1_b"])
        x = x + attn(xn, memory, memory, src_mask,
                     p["wq2"], p["bq2"], p["wk2"], p["bk2"], p["wo2"], p["bo2"])
        xn = ln(x, p["ln2_g"], p["ln2_b"])
        x = x + (xn @ p["w1"] + p["b1"]) @ p["w2"] + p["b2"]
    if apply_final_norm:
        x = ln(x, final_g, final_b)
    return x


# ------------------------------ param init --------------------------------

def init_layer_params(key, d_model, ff_model):
    ks = jax.random.split(key, 8)

    def lin(k, din, dout):
        kw, kb = jax.random.split(k)
        w = jax.random.normal(kw, (din, dout), jnp.float32) * (1.0 / math.sqrt(din))
        b = jax.random.normal(kb, (1, dout), jnp.float32) * 0.01
        return w, b

    wq1, bq1 = lin(ks[0], d_model, d_model)
    wk1, bk1 = lin(ks[1], d_model, d_model)
    wo1, bo1 = lin(ks[2], d_model, d_model)
    wq2, bq2 = lin(ks[3], d_model, d_model)
    wk2, bk2 = lin(ks[4], d_model, d_model)
    wo2, bo2 = lin(ks[5], d_model, d_model)
    w1, b1 = lin(ks[6], d_model, ff_model)
    w2, b2 = lin(ks[7], ff_model, d_model)

    ones = jnp.ones((1, d_model), jnp.float32)
    zeros = jnp.zeros((1, d_model), jnp.float32)
    return dict(
        ln0_g=ones, ln0_b=zeros,
        wq1=wq1, bq1=bq1, wk1=wk1, bk1=bk1, wo1=wo1, bo1=bo1,
        ln1_g=ones, ln1_b=zeros,
        wq2=wq2, bq2=bq2, wk2=wk2, bk2=bk2, wo2=wo2, bo2=bo2,
        ln2_g=ones, ln2_b=zeros,
        w1=w1, b1=b1, w2=w2, b2=b2,
    )


if __name__ == "__main__":
    # DecoderLayer(size=32, h=1, ff_model=64), stacked N=2 times + final norm.
    # h=1 is the only configuration in which the reference forward pass is
    # shape-consistent (see faithfulness notes at top).
    B, S, S_SRC, D, FF, N, H = 2, 8, 8, 32, 64, 2, 1

    key = jax.random.PRNGKey(0)
    kx, kmem, *layer_keys = jax.random.split(key, 2 + N)

    x = jax.random.normal(kx, (B, S, D), jnp.float32)
    memory = jax.random.normal(kmem, (B, S_SRC, D), jnp.float32)

    # Boolean-style masks (nonzero = position is masked / filled with -1e9).
    causal = (jnp.arange(S)[None, :] > jnp.arange(S)[:, None])
    tgt_mask = jnp.broadcast_to(causal, (B, S, S)).astype(jnp.int32)
    src_mask = jnp.zeros((B, S, S_SRC), jnp.int32)

    layer_params = [init_layer_params(k, D, FF) for k in layer_keys]
    final_g = jnp.ones((1, D), jnp.float32)
    final_b = jnp.zeros((1, D), jnp.float32)

    out = decoder_forward(x, memory, src_mask, tgt_mask, layer_params,
                          final_g, final_b, h=H)
    out = jax.block_until_ready(out)
    assert out.shape == (B, S, D) and out.dtype == jnp.float32

    # Correctness self-check vs. a pure-JAX reference.  Tolerance tightened
    # (5e-2 -> 2e-2) now that LayerNorm uses the exact reciprocal; the only
    # remaining approximation is the EUP softmax denominator.
    ref = _reference_forward(x, memory, src_mask, tgt_mask, layer_params,
                             final_g, final_b, H)
    err = float(jnp.max(jnp.abs(out - ref)))
    assert err < 2e-2, f"max abs error vs reference: {err}"

    print("KERNEL_OK")
</pallas_src>

<mosaic_0001>
module attributes {stable_mosaic.version = 11 : i64} {
  func.func @fused_decoder_kernel(%arg0: memref<16x32xf32, #tpu.memory_space<vmem>>, %arg1: memref<16x32xf32, #tpu.memory_space<vmem>>, %arg2: memref<2x8x8xf32, #tpu.memory_space<vmem>>, %arg3: memref<2x8x8xf32, #tpu.memory_space<vmem>>, %arg4: memref<2x6x32x32xf32, #tpu.memory_space<vmem>>, %arg5: memref<2x13x32xf32, #tpu.memory_space<vmem>>, %arg6: memref<2x32x64xf32, #tpu.memory_space<vmem>>, %arg7: memref<2x1x64xf32, #tpu.memory_space<vmem>>, %arg8: memref<2x64x32xf32, #tpu.memory_space<vmem>>, %arg9: memref<2x32xf32, #tpu.memory_space<vmem>>, %arg10: memref<16x32xf32, #tpu.memory_space<vmem>>) attributes {dimension_semantics = [], scalar_prefetch = 0 : i64, scratch_operands = 0 : i64, tpu.core_type = #tpu.core_type<tc>} {
    %c0 = arith.constant 0 : index
    %c0_0 = arith.constant 0 : index
    %0 = vector.load %arg0[%c0, %c0_0] : memref<16x32xf32, #tpu.memory_space<vmem>>, vector<16x32xf32>
    %c0_1 = arith.constant 0 : index
    %c0_2 = arith.constant 0 : index
    %1 = vector.load %arg1[%c0_1, %c0_2] : memref<16x32xf32, #tpu.memory_space<vmem>>, vector<16x32xf32>
    %c0_3 = arith.constant 0 : index
    %c0_4 = arith.constant 0 : index
    %c0_5 = arith.constant 0 : index
    %2 = vector.load %arg2[%c0_3, %c0_4, %c0_5] : memref<2x8x8xf32, #tpu.memory_space<vmem>>, vector<2x8x8xf32>
    %c0_6 = arith.constant 0 : index
    %c0_7 = arith.constant 0 : index
    %c0_8 = arith.constant 0 : index
    %3 = vector.load %arg3[%c0_6, %c0_7, %c0_8] : memref<2x8x8xf32, #tpu.memory_space<vmem>>, vector<2x8x8xf32>
    %c0_9 = arith.constant 0 : index
    %c0_10 = arith.constant 0 : index
    %c0_11 = arith.constant 0 : index
    %4 = vector.load %arg5[%c0_9, %c0_10, %c0_11] : memref<2x13x32xf32, #tpu.memory_space<vmem>>, vector<1x13x32xf32>
    %5 = vector.shape_cast %4 : vector<1x13x32xf32> to vector<13x32xf32>
    %6 = vector.extract_strided_slice %5 {offsets = [0, 0], sizes = [1, 32], strides = [1, 1]} : vector<13x32xf32> to vector<1x32xf32>
    %7 = vector.extract_strided_slice %5 {offsets = [1, 0], sizes = [1, 32], strides = [1, 1]} : vector<13x32xf32> to vector<1x32xf32>
    %cst = arith.constant dense<0.000000e+00> : vector<16xf32>
    %8 = vector.multi_reduction <add>, %0, %cst [1] : vector<16x32xf32> to vector<16xf32>
    %9 = vector.shape_cast %8 : vector<16xf32> to vector<16x1xf32>
    %cst_12 = arith.constant 3.200000e+01 : f32
    %10 = vector.broadcast %cst_12 : f32 to vector<16x1xf32>
    %11 = arith.divf %9, %10 : vector<16x1xf32>
    %12 = vector.broadcast %11 : vector<16x1xf32> to vector<16x32xf32>
    %13 = arith.subf %0, %12 : vector<16x32xf32>
    %14 = arith.mulf %13, %13 : vector<16x32xf32>
    %cst_13 = arith.constant dense<0.000000e+00> : vector<16xf32>
    %15 = vector.multi_reduction <add>, %14, %cst_13 [1] : vector<16x32xf32> to vector<16xf32>
    %16 = vector.shape_cast %15 : vector<16xf32> to vector<16x1xf32>
    %cst_14 = arith.constant 0.0322580636 : f32
    %17 = vector.broadcast %cst_14 : f32 to vector<16x1xf32>
    %18 = arith.mulf %16, %17 : vector<16x1xf32>
    %19 = math.sqrt %18 : vector<16x1xf32>
    %cst_15 = arith.constant 9.99999997E-7 : f32
    %20 = vector.broadcast %cst_15 : f32 to vector<16x1xf32>
    %21 = arith.addf %19, %20 : vector<16x1xf32>
    %22 = tpu.reciprocal %21 : vector<16x1xf32> -> vector<16x1xf32>
    %23 = vector.broadcast %11 : vector<16x1xf32> to vector<16x32xf32>
    %24 = arith.subf %0, %23 : vector<16x32xf32>
    %25 = vector.broadcast %6 : vector<1x32xf32> to vector<16x32xf32>
    %26 = arith.mulf %25, %24 : vector<16x32xf32>
    %27 = vector.broadcast %22 : vector<16x1xf32> to vector<16x32xf32>
    %28 = arith.mulf %26, %27 : vector<16x32xf32>
    %29 = vector.broadcast %7 : vector<1x32xf32> to vector<16x32xf32>
    %30 = arith.addf %28, %29 : vector<16x32xf32>
    %c0_16 = arith.constant 0 : index
    %c0_17 = arith.constant 0 : index
    %c0_18 = arith.constant 0 : index
    %c0_19 = arith.constant 0 : index
    %31 = vector.load %arg4[%c0_16, %c0_17, %c0_18, %c0_19] : memref<2x6x32x32xf32, #tpu.memory_space<vmem>>, vector<1x1x32x32xf32>
    %32 = vector.shape_cast %31 : vector<1x1x32x32xf32> to vector<32x32xf32>
    %33 = vector.extract_strided_slice %5 {offsets = [2, 0], sizes = [1, 32], strides = [1, 1]} : vector<13x32xf32> to vector<1x32xf32>
    %c0_20 = arith.constant 0 : index
    %c1 = arith.constant 1 : index
    %c0_21 = arith.constant 0 : index
    %c0_22 = arith.constant 0 : index
    %34 = vector.load %arg4[%c0_20, %c1, %c0_21, %c0_22] : memref<2x6x32x32xf32, #tpu.memory_space<vmem>>, vector<1x1x32x32xf32>
    %35 = vector.shape_cast %34 : vector<1x1x32x32xf32> to vector<32x32xf32>
    %36 = vector.extract_strided_slice %5 {offsets = [3, 0], sizes = [1, 32], strides = [1, 1]} : vector<13x32xf32> to vector<1x32xf32>
    %c0_23 = arith.constant 0 : index
    %c2 = arith.constant 2 : index
    %c0_24 = arith.constant 0 : index
    %c0_25 = arith.constant 0 : index
    %37 = vector.load %arg4[%c0_23, %c2, %c0_24, %c0_25] : memref<2x6x32x32xf32, #tpu.memory_space<vmem>>, vector<1x1x32x32xf32>
    %38 = vector.shape_cast %37 : vector<1x1x32x32xf32> to vector<32x32xf32>
    %39 = vector.extract_strided_slice %5 {offsets = [4, 0], sizes = [1, 32], strides = [1, 1]} : vector<13x32xf32> to vector<1x32xf32>
    %cst_26 = arith.constant dense<0.000000e+00> : vector<16x32xf32>
    %40 = tpu.matmul %30, %32, %cst_26 {dimension_numbers = #tpu.dot_dimension_numbers<[1], [0], [0], [1], [0, 0, 1, 1], [], []>} : vector<16x32xf32>, vector<32x32xf32>, vector<16x32xf32> -> vector<16x32xf32>
    %41 = vector.broadcast %33 : vector<1x32xf32> to vector<16x32xf32>
    %42 = arith.addf %40, %41 : vector<16x32xf32>
    %43 = vector.shape_cast %42 : vector<16x32xf32> to vector<2x8x32xf32>
    %cst_27 = arith.constant dense<0.000000e+00> : vector<16x32xf32>
    %44 = tpu.matmul %30, %35, %cst_27 {dimension_numbers = #tpu.dot_dimension_numbers<[1], [0], [0], [1], [0, 0, 1, 1], [], []>} : vector<16x32xf32>, vector<32x32xf32>, vector<16x32xf32> -> vector<16x32xf32>
    %45 = vector.broadcast %36 : vector<1x32xf32> to vector<16x32xf32>
    %46 = arith.addf %44, %45 : vector<16x32xf32>
    %47 = vector.shape_cast %46 : vector<16x32xf32> to vector<2x8x32xf32>
    %48 = vector.shape_cast %30 : vector<16x32xf32> to vector<2x8x32xf32>
    "tpu.trace_start"() <{level = 10 : i32, message = "bmd,bnd->bmn"}> : () -> ()
    %cst_28 = arith.constant dense<0.000000e+00> : vector<2x8x8xf32>
    %49 = tpu.matmul %43, %47, %cst_28 {dimension_numbers = #tpu.dot_dimension_numbers<[2], [2], [1], [1], [0, 0, 0, 1, 1, 1], [0], [0]>} : vector<2x8x32xf32>, vector<2x8x32xf32>, vector<2x8x8xf32> -> vector<2x8x8xf32>
    "tpu.trace_stop"() : () -> ()
    %cst_29 = arith.constant 0.176776692 : f32
    %50 = vector.broadcast %cst_29 : f32 to vector<2x8x8xf32>
    %51 = arith.mulf %49, %50 : vector<2x8x8xf32>
    %52 = arith.addf %51, %2 : vector<2x8x8xf32>
    %cst_30 = arith.constant dense<0xFF800000> : vector<2x8xf32>
    %53 = vector.multi_reduction <maximumf>, %52, %cst_30 [2] : vector<2x8x8xf32> to vector<2x8xf32>
    %54 = vector.shape_cast %53 : vector<2x8xf32> to vector<2x8x1xf32>
    %55 = vector.broadcast %54 : vector<2x8x1xf32> to vector<2x8x8xf32>
    %56 = arith.subf %52, %55 : vector<2x8x8xf32>
    %57 = math.exp %56 : vector<2x8x8xf32>
    %cst_31 = arith.constant dense<0.000000e+00> : vector<2x8xf32>
    %58 = vector.multi_reduction <add>, %57, %cst_31 [2] : vector<2x8x8xf32> to vector<2x8xf32>
    %59 = vector.shape_cast %58 : vector<2x8xf32> to vector<2x8x1xf32>
    %60 = tpu.reciprocal %59 {approx = true} : vector<2x8x1xf32> -> vector<2x8x1xf32>
    %61 = vector.broadcast %60 : vector<2x8x1xf32> to vector<2x8x8xf32>
    %62 = arith.mulf %57, %61 : vector<2x8x8xf32>
    "tpu.trace_start"() <{level = 10 : i32, message = "bmn,bnd->bmd"}> : () -> ()
    %cst_32 = arith.constant dense<0.000000e+00> : vector<2x8x32xf32>
    %63 = tpu.matmul %62, %48, %cst_32 {dimension_numbers = #tpu.dot_dimension_numbers<[2], [1], [1], [2], [0, 0, 0, 1, 1, 2], [0], [0]>} : vector<2x8x8xf32>, vector<2x8x32xf32>, vector<2x8x32xf32> -> vector<2x8x32xf32>
    "tpu.trace_stop"() : () -> ()
    %64 = vector.shape_cast %63 : vector<2x8x32xf32> to vector<16x32xf32>
    %cst_33 = arith.constant dense<0.000000e+00> : vector<16x32xf32>
    %65 = tpu.matmul %64, %38, %cst_33 {dimension_numbers = #tpu.dot_dimension_numbers<[1], [0], [0], [1], [0, 0, 1, 1], [], []>} : vector<16x32xf32>, vector<32x32xf32>, vector<16x32xf32> -> vector<16x32xf32>
    %66 = vector.broadcast %39 : vector<1x32xf32> to vector<16x32xf32>
    %67 = arith.addf %65, %66 : vector<16x32xf32>
    %68 = arith.addf %0, %67 : vector<16x32xf32>
    %69 = vector.extract_strided_slice %5 {offsets = [5, 0], sizes = [1, 32], strides = [1, 1]} : vector<13x32xf32> to vector<1x32xf32>
    %70 = vector.extract_strided_slice %5 {offsets = [6, 0], sizes = [1, 32], strides = [1, 1]} : vector<13x32xf32> to vector<1x32xf32>
    %cst_34 = arith.constant dense<0.000000e+00> : vector<16xf32>
    %71 = vector.multi_reduction <add>, %68, %cst_34 [1] : vector<16x32xf32> to vector<16xf32>
    %72 = vector.shape_cast %71 : vector<16xf32> to vector<16x1xf32>
    %cst_35 = arith.constant 3.200000e+01 : f32
    %73 = vector.broadcast %cst_35 : f32 to vector<16x1xf32>
    %74 = arith.divf %72, %73 : vector<16x1xf32>
    %75 = vector.broadcast %74 : vector<16x1xf32> to vector<16x32xf32>
    %76 = arith.subf %68, %75 : vector<16x32xf32>
    %77 = arith.mulf %76, %76 : vector<16x32xf32>
    %cst_36 = arith.constant dense<0.000000e+00> : vector<16xf32>
    %78 = vector.multi_reduction <add>, %77, %cst_36 [1] : vector<16x32xf32> to vector<16xf32>
    %79 = vector.shape_cast %78 : vector<16xf32> to vector<16x1xf32>
    %cst_37 = arith.constant 0.0322580636 : f32
    %80 = vector.broadcast %cst_37 : f32 to vector<16x1xf32>
    %81 = arith.mulf %79, %80 : vector<16x1xf32>
    %82 = math.sqrt %81 : vector<16x1xf32>
    %cst_38 = arith.constant 9.99999997E-7 : f32
    %83 = vector.broadcast %cst_38 : f32 to vector<16x1xf32>
    %84 = arith.addf %82, %83 : vector<16x1xf32>
    %85 = tpu.reciprocal %84 : vector<16x1xf32> -> vector<16x1xf32>
    %86 = vector.broadcast %74 : vector<16x1xf32> to vector<16x32xf32>
    %87 = arith.subf %68, %86 : vector<16x32xf32>
    %88 = vector.broadcast %69 : vector<1x32xf32> to vector<16x32xf32>
    %89 = arith.mulf %88, %87 : vector<16x32xf32>
    %90 = vector.broadcast %85 : vector<16x1xf32> to vector<16x32xf32>
    %91 = arith.mulf %89, %90 : vector<16x32xf32>
    %92 = vector.broadcast %70 : vector<1x32xf32> to vector<16x32xf32>
    %93 = arith.addf %91, %92 : vector<16x32xf32>
    %c0_39 = arith.constant 0 : index
    %c3 = arith.constant 3 : index
    %c0_40 = arith.constant 0 : index
    %c0_41 = arith.constant 0 : index
    %94 = vector.load %arg4[%c0_39, %c3, %c0_40, %c0_41] : memref<2x6x32x32xf32, #tpu.memory_space<vmem>>, vector<1x1x32x32xf32>
    %95 = vector.shape_cast %94 : vector<1x1x32x32xf32> to vector<32x32xf32>
    %96 = vector.extract_strided_slice %5 {offsets = [7, 0], sizes = [1, 32], strides = [1, 1]} : vector<13x32xf32> to vector<1x32xf32>
    %c0_42 = arith.constant 0 : index
    %c4 = arith.constant 4 : index
    %c0_43 = arith.constant 0 : index
    %c0_44 = arith.constant 0 : index
    %97 = vector.load %arg4[%c0_42, %c4, %c0_43, %c0_44] : memref<2x6x32x32xf32, #tpu.memory_space<vmem>>, vector<1x1x32x32xf32>
    %98 = vector.shape_cast %97 : vector<1x1x32x32xf32> to vector<32x32xf32>
    %99 = vector.extract_strided_slice %5 {offsets = [8, 0], sizes = [1, 32], strides = [1, 1]} : vector<13x32xf32> to vector<1x32xf32>
    %c0_45 = arith.constant 0 : index
    %c5 = arith.constant 5 : index
    %c0_46 = arith.constant 0 : index
    %c0_47 = arith.constant 0 : index
    %100 = vector.load %arg4[%c0_45, %c5, %c0_46, %c0_47] : memref<2x6x32x32xf32, #tpu.memory_space<vmem>>, vector<1x1x32x32xf32>
    %101 = vector.shape_cast %100 : vector<1x1x32x32xf32> to vector<32x32xf32>
    %102 = vector.extract_strided_slice %5 {offsets = [9, 0], sizes = [1, 32], strides = [1, 1]} : vector<13x32xf32> to vector<1x32xf32>
    %cst_48 = arith.constant dense<0.000000e+00> : vector<16x32xf32>
    %103 = tpu.matmul %93, %95, %cst_48 {dimension_numbers = #tpu.dot_dimension_numbers<[1], [0], [0], [1], [0, 0, 1, 1], [], []>} : vector<16x32xf32>, vector<32x32xf32>, vector<16x32xf32> -> vector<16x32xf32>
    %104 = vector.broadcast %96 : vector<1x32xf32> to vector<16x32xf32>
    %105 = arith.addf %103, %104 : vector<16x32xf32>
    %106 = vector.shape_cast %105 : vector<16x32xf32> to vector<2x8x32xf32>
    %cst_49 = arith.constant dense<0.000000e+00> : vector<16x32xf32>
    %107 = tpu.matmul %1, %98, %cst_49 {dimension_numbers = #tpu.dot_dimension_numbers<[1], [0], [0], [1], [0, 0, 1, 1], [], []>} : vector<16x32xf32>, vector<32x32xf32>, vector<16x32xf32> -> vector<16x32xf32>
    %108 = vector.broadcast %99 : vector<1x32xf32> to vector<16x32xf32>
    %109 = arith.addf %107, %108 : vector<16x32xf32>
    %110 = vector.shape_cast %109 : vector<16x32xf32> to vector<2x8x32xf32>
    %111 = vector.shape_cast %1 : vector<16x32xf32> to vector<2x8x32xf32>
    "tpu.trace_start"() <{level = 10 : i32, message = "bmd,bnd->bmn"}> : () -> ()
    %cst_50 = arith.constant dense<0.000000e+00> : vector<2x8x8xf32>
    %112 = tpu.matmul %106, %110, %cst_50 {dimension_numbers = #tpu.dot_dimension_numbers<[2], [2], [1], [1], [0, 0, 0, 1, 1, 1], [0], [0]>} : vector<2x8x32xf32>, vector<2x8x32xf32>, vector<2x8x8xf32> -> vector<2x8x8xf32>
    "tpu.trace_stop"() : () -> ()
    %cst_51 = arith.constant 0.176776692 : f32
    %113 = vector.broadcast %cst_51 : f32 to vector<2x8x8xf32>
    %114 = arith.mulf %112, %113 : vector<2x8x8xf32>
    %115 = arith.addf %114, %3 : vector<2x8x8xf32>
    %cst_52 = arith.constant dense<0xFF800000> : vector<2x8xf32>
    %116 = vector.multi_reduction <maximumf>, %115, %cst_52 [2] : vector<2x8x8xf32> to vector<2x8xf32>
    %117 = vector.shape_cast %116 : vector<2x8xf32> to vector<2x8x1xf32>
    %118 = vector.broadcast %117 : vector<2x8x1xf32> to vector<2x8x8xf32>
    %119 = arith.subf %115, %118 : vector<2x8x8xf32>
    %120 = math.exp %119 : vector<2x8x8xf32>
    %cst_53 = arith.constant dense<0.000000e+00> : vector<2x8xf32>
    %121 = vector.multi_reduction <add>, %120, %cst_53 [2] : vector<2x8x8xf32> to vector<2x8xf32>
    %122 = vector.shape_cast %121 : vector<2x8xf32> to vector<2x8x1xf32>
    %123 = tpu.reciprocal %122 {approx = true} : vector<2x8x1xf32> -> vector<2x8x1xf32>
    %124 = vector.broadcast %123 : vector<2x8x1xf32> to vector<2x8x8xf32>
    %125 = arith.mulf %120, %124 : vector<2x8x8xf32>
    "tpu.trace_start"() <{level = 10 : i32, message = "bmn,bnd->bmd"}> : () -> ()
    %cst_54 = arith.constant dense<0.000000e+00> : vector<2x8x32xf32>
    %126 = tpu.matmul %125, %111, %cst_54 {dimension_numbers = #tpu.dot_dimension_numbers<[2], [1], [1], [2], [0, 0, 0, 1, 1, 2], [0], [0]>} : vector<2x8x8xf32>, vector<2x8x32xf32>, vector<2x8x32xf32> -> vector<2x8x32xf32>
    "tpu.trace_stop"() : () -> ()
    %127 = vector.shape_cast %126 : vector<2x8x32xf32> to vector<16x32xf32>
    %cst_55 = arith.constant dense<0.000000e+00> : vector<16x32xf32>
    %128 = tpu.matmul %127, %101, %cst_55 {dimension_numbers = #tpu.dot_dimension_numbers<[1], [0], [0], [1], [0, 0, 1, 1], [], []>} : vector<16x32xf32>, vector<32x32xf32>, vector<16x32xf32> -> vector<16x32xf32>
    %129 = vector.broadcast %102 : vector<1x32xf32> to vector<16x32xf32>
    %130 = arith.addf %128, %129 : vector<16x32xf32>
    %131 = arith.addf %68, %130 : vector<16x32xf32>
    %132 = vector.extract_strided_slice %5 {offsets = [10, 0], sizes = [1, 32], strides = [1, 1]} : vector<13x32xf32> to vector<1x32xf32>
    %133 = vector.extract_strided_slice %5 {offsets = [11, 0], sizes = [1, 32], strides = [1, 1]} : vector<13x32xf32> to vector<1x32xf32>
    %cst_56 = arith.constant dense<0.000000e+00> : vector<16xf32>
    %134 = vector.multi_reduction <add>, %131, %cst_56 [1] : vector<16x32xf32> to vector<16xf32>
    %135 = vector.shape_cast %134 : vector<16xf32> to vector<16x1xf32>
    %cst_57 = arith.constant 3.200000e+01 : f32
    %136 = vector.broadcast %cst_57 : f32 to vector<16x1xf32>
    %137 = arith.divf %135, %136 : vector<16x1xf32>
    %138 = vector.broadcast %137 : vector<16x1xf32> to vector<16x32xf32>
    %139 = arith.subf %131, %138 : vector<16x32xf32>
    %140 = arith.mulf %139, %139 : vector<16x32xf32>
    %cst_58 = arith.constant dense<0.000000e+00> : vector<16xf32>
    %141 = vector.multi_reduction <add>, %140, %cst_58 [1] : vector<16x32xf32> to vector<16xf32>
    %142 = vector.shape_cast %141 : vector<16xf32> to vector<16x1xf32>
    %cst_59 = arith.constant 0.0322580636 : f32
    %143 = vector.broadcast %cst_59 : f32 to vector<16x1xf32>
    %144 = arith.mulf %142, %143 : vector<16x1xf32>
    %145 = math.sqrt %144 : vector<16x1xf32>
    %cst_60 = arith.constant 9.99999997E-7 : f32
    %146 = vector.broadcast %cst_60 : f32 to vector<16x1xf32>
    %147 = arith.addf %145, %146 : vector<16x1xf32>
    %148 = tpu.reciprocal %147 : vector<16x1xf32> -> vector<16x1xf32>
    %149 = vector.broadcast %137 : vector<16x1xf32> to vector<16x32xf32>
    %150 = arith.subf %131, %149 : vector<16x32xf32>
    %151 = vector.broadcast %132 : vector<1x32xf32> to vector<16x32xf32>
    %152 = arith.mulf %151, %150 : vector<16x32xf32>
    %153 = vector.broadcast %148 : vector<16x1xf32> to vector<16x32xf32>
    %154 = arith.mulf %152, %153 : vector<16x32xf32>
    %155 = vector.broadcast %133 : vector<1x32xf32> to vector<16x32xf32>
    %156 = arith.addf %154, %155 : vector<16x32xf32>
    %c0_61 = arith.constant 0 : index
    %c0_62 = arith.constant 0 : index
    %c0_63 = arith.constant 0 : index
    %157 = vector.load %arg6[%c0_61, %c0_62, %c0_63] : memref<2x32x64xf32, #tpu.memory_space<vmem>>, vector<1x32x64xf32>
    %158 = vector.shape_cast %157 : vector<1x32x64xf32> to vector<32x64xf32>
    %cst_64 = arith.constant dense<0.000000e+00> : vector<16x64xf32>
    %159 = tpu.matmul %156, %158, %cst_64 {dimension_numbers = #tpu.dot_dimension_numbers<[1], [0], [0], [1], [0, 0, 1, 1], [], []>} : vector<16x32xf32>, vector<32x64xf32>, vector<16x64xf32> -> vector<16x64xf32>
    %c0_65 = arith.constant 0 : index
    %c0_66 = arith.constant 0 : index
    %c0_67 = arith.constant 0 : index
    %160 = vector.load %arg7[%c0_65, %c0_66, %c0_67] : memref<2x1x64xf32, #tpu.memory_space<vmem>>, vector<1x1x64xf32>
    %161 = vector.shape_cast %160 : vector<1x1x64xf32> to vector<1x64xf32>
    %162 = vector.broadcast %161 : vector<1x64xf32> to vector<16x64xf32>
    %163 = arith.addf %159, %162 : vector<16x64xf32>
    %c0_68 = arith.constant 0 : index
    %c0_69 = arith.constant 0 : index
    %c0_70 = arith.constant 0 : index
    %164 = vector.load %arg8[%c0_68, %c0_69, %c0_70] : memref<2x64x32xf32, #tpu.memory_space<vmem>>, vector<1x64x32xf32>
    %165 = vector.shape_cast %164 : vector<1x64x32xf32> to vector<64x32xf32>
    %cst_71 = arith.constant dense<0.000000e+00> : vector<16x32xf32>
    %166 = tpu.matmul %163, %165, %cst_71 {dimension_numbers = #tpu.dot_dimension_numbers<[1], [0], [0], [1], [0, 0, 1, 1], [], []>} : vector<16x64xf32>, vector<64x32xf32>, vector<16x32xf32> -> vector<16x32xf32>
    %167 = arith.addf %131, %166 : vector<16x32xf32>
    %168 = vector.extract_strided_slice %5 {offsets = [12, 0], sizes = [1, 32], strides = [1, 1]} : vector<13x32xf32> to vector<1x32xf32>
    %169 = vector.broadcast %168 : vector<1x32xf32> to vector<16x32xf32>
    %170 = arith.addf %167, %169 : vector<16x32xf32>
    %c1_72 = arith.constant 1 : index
    %c0_73 = arith.constant 0 : index
    %c0_74 = arith.constant 0 : index
    %171 = vector.load %arg5[%c1_72, %c0_73, %c0_74] : memref<2x13x32xf32, #tpu.memory_space<vmem>>, vector<1x13x32xf32>
    %172 = vector.shape_cast %171 : vector<1x13x32xf32> to vector<13x32xf32>
    %173 = vector.extract_strided_slice %172 {offsets = [0, 0], sizes = [1, 32], strides = [1, 1]} : vector<13x32xf32> to vector<1x32xf32>
    %174 = vector.extract_strided_slice %172 {offsets = [1, 0], sizes = [1, 32], strides = [1, 1]} : vector<13x32xf32> to vector<1x32xf32>
    %cst_75 = arith.constant dense<0.000000e+00> : vector<16xf32>
    %175 = vector.multi_reduction <add>, %170, %cst_75 [1] : vector<16x32xf32> to vector<16xf32>
    %176 = vector.shape_cast %175 : vector<16xf32> to vector<16x1xf32>
    %cst_76 = arith.constant 3.200000e+01 : f32
    %177 = vector.broadcast %cst_76 : f32 to vector<16x1xf32>
    %178 = arith.divf %176, %177 : vector<16x1xf32>
    %179 = vector.broadcast %178 : vector<16x1xf32> to vector<16x32xf32>
    %180 = arith.subf %170, %179 : vector<16x32xf32>
    %181 = arith.mulf %180, %180 : vector<16x32xf32>
    %cst_77 = arith.constant dense<0.000000e+00> : vector<16xf32>
    %182 = vector.multi_reduction <add>, %181, %cst_77 [1] : vector<16x32xf32> to vector<16xf32>
    %183 = vector.shape_cast %182 : vector<16xf32> to vector<16x1xf32>
    %cst_78 = arith.constant 0.0322580636 : f32
    %184 = vector.broadcast %cst_78 : f32 to vector<16x1xf32>
    %185 = arith.mulf %183, %184 : vector<16x1xf32>
    %186 = math.sqrt %185 : vector<16x1xf32>
    %cst_79 = arith.constant 9.99999997E-7 : f32
    %187 = vector.broadcast %cst_79 : f32 to vector<16x1xf32>
    %188 = arith.addf %186, %187 : vector<16x1xf32>
    %189 = tpu.reciprocal %188 : vector<16x1xf32> -> vector<16x1xf32>
    %190 = vector.broadcast %178 : vector<16x1xf32> to vector<16x32xf32>
    %191 = arith.subf %170, %190 : vector<16x32xf32>
    %192 = vector.broadcast %173 : vector<1x32xf32> to vector<16x32xf32>
    %193 = arith.mulf %192, %191 : vector<16x32xf32>
    %194 = vector.broadcast %189 : vector<16x1xf32> to vector<16x32xf32>
    %195 = arith.mulf %193, %194 : vector<16x32xf32>
    %196 = vector.broadcast %174 : vector<1x32xf32> to vector<16x32xf32>
    %197 = arith.addf %195, %196 : vector<16x32xf32>
    %c1_80 = arith.constant 1 : index
    %c0_81 = arith.constant 0 : index
    %c0_82 = arith.constant 0 : index
    %c0_83 = arith.constant 0 : index
    %198 = vector.load %arg4[%c1_80, %c0_81, %c0_82, %c0_83] : memref<2x6x32x32xf32, #tpu.memory_space<vmem>>, vector<1x1x32x32xf32>
    %199 = vector.shape_cast %198 : vector<1x1x32x32xf32> to vector<32x32xf32>
    %200 = vector.extract_strided_slice %172 {offsets = [2, 0], sizes = [1, 32], strides = [1, 1]} : vector<13x32xf32> to vector<1x32xf32>
    %c1_84 = arith.constant 1 : index
    %c1_85 = arith.constant 1 : index
    %c0_86 = arith.constant 0 : index
    %c0_87 = arith.constant 0 : index
    %201 = vector.load %arg4[%c1_84, %c1_85, %c0_86, %c0_87] : memref<2x6x32x32xf32, #tpu.memory_space<vmem>>, vector<1x1x32x32xf32>
    %202 = vector.shape_cast %201 : vector<1x1x32x32xf32> to vector<32x32xf32>
    %203 = vector.extract_strided_slice %172 {offsets = [3, 0], sizes = [1, 32], strides = [1, 1]} : vector<13x32xf32> to vector<1x32xf32>
    %c1_88 = arith.constant 1 : index
    %c2_89 = arith.constant 2 : index
    %c0_90 = arith.constant 0 : index
    %c0_91 = arith.constant 0 : index
    %204 = vector.load %arg4[%c1_88, %c2_89, %c0_90, %c0_91] : memref<2x6x32x32xf32, #tpu.memory_space<vmem>>, vector<1x1x32x32xf32>
    %205 = vector.shape_cast %204 : vector<1x1x32x32xf32> to vector<32x32xf32>
    %206 = vector.extract_strided_slice %172 {offsets = [4, 0], sizes = [1, 32], strides = [1, 1]} : vector<13x32xf32> to vector<1x32xf32>
    %cst_92 = arith.constant dense<0.000000e+00> : vector<16x32xf32>
    %207 = tpu.matmul %197, %199, %cst_92 {dimension_numbers = #tpu.dot_dimension_numbers<[1], [0], [0], [1], [0, 0, 1, 1], [], []>} : vector<16x32xf32>, vector<32x32xf32>, vector<16x32xf32> -> vector<16x32xf32>
    %208 = vector.broadcast %200 : vector<1x32xf32> to vector<16x32xf32>
    %209 = arith.addf %207, %208 : vector<16x32xf32>
    %210 = vector.shape_cast %209 : vector<16x32xf32> to vector<2x8x32xf32>
    %cst_93 = arith.constant dense<0.000000e+00> : vector<16x32xf32>
    %211 = tpu.matmul %197, %202, %cst_93 {dimension_numbers = #tpu.dot_dimension_numbers<[1], [0], [0], [1], [0, 0, 1, 1], [], []>} : vector<16x32xf32>, vector<32x32xf32>, vector<16x32xf32> -> vector<16x32xf32>
    %212 = vector.broadcast %203 : vector<1x32xf32> to vector<16x32xf32>
    %213 = arith.addf %211, %212 : vector<16x32xf32>
    %214 = vector.shape_cast %213 : vector<16x32xf32> to vector<2x8x32xf32>
    %215 = vector.shape_cast %197 : vector<16x32xf32> to vector<2x8x32xf32>
    "tpu.trace_start"() <{level = 10 : i32, message = "bmd,bnd->bmn"}> : () -> ()
    %cst_94 = arith.constant dense<0.000000e+00> : vector<2x8x8xf32>
    %216 = tpu.matmul %210, %214, %cst_94 {dimension_numbers = #tpu.dot_dimension_numbers<[2], [2], [1], [1], [0, 0, 0, 1, 1, 1], [0], [0]>} : vector<2x8x32xf32>, vector<2x8x32xf32>, vector<2x8x8xf32> -> vector<2x8x8xf32>
    "tpu.trace_stop"() : () -> ()
    %cst_95 = arith.constant 0.176776692 : f32
    %217 = vector.broadcast %cst_95 : f32 to vector<2x8x8xf32>
    %218 = arith.mulf %216, %217 : vector<2x8x8xf32>
    %219 = arith.addf %218, %2 : vector<2x8x8xf32>
    %cst_96 = arith.constant dense<0xFF800000> : vector<2x8xf32>
    %220 = vector.multi_reduction <maximumf>, %219, %cst_96 [2] : vector<2x8x8xf32> to vector<2x8xf32>
    %221 = vector.shape_cast %220 : vector<2x8xf32> to vector<2x8x1xf32>
    %222 = vector.broadcast %221 : vector<2x8x1xf32> to vector<2x8x8xf32>
    %223 = arith.subf %219, %222 : vector<2x8x8xf32>
    %224 = math.exp %223 : vector<2x8x8xf32>
    %cst_97 = arith.constant dense<0.000000e+00> : vector<2x8xf32>
    %225 = vector.multi_reduction <add>, %224, %cst_97 [2] : vector<2x8x8xf32> to vector<2x8xf32>
    %226 = vector.shape_cast %225 : vector<2x8xf32> to vector<2x8x1xf32>
    %227 = tpu.reciprocal %226 {approx = true} : vector<2x8x1xf32> -> vector<2x8x1xf32>
    %228 = vector.broadcast %227 : vector<2x8x1xf32> to vector<2x8x8xf32>
    %229 = arith.mulf %224, %228 : vector<2x8x8xf32>
    "tpu.trace_start"() <{level = 10 : i32, message = "bmn,bnd->bmd"}> : () -> ()
    %cst_98 = arith.constant dense<0.000000e+00> : vector<2x8x32xf32>
    %230 = tpu.matmul %229, %215, %cst_98 {dimension_numbers = #tpu.dot_dimension_numbers<[2], [1], [1], [2], [0, 0, 0, 1, 1, 2], [0], [0]>} : vector<2x8x8xf32>, vector<2x8x32xf32>, vector<2x8x32xf32> -> vector<2x8x32xf32>
    "tpu.trace_stop"() : () -> ()
    %231 = vector.shape_cast %230 : vector<2x8x32xf32> to vector<16x32xf32>
    %cst_99 = arith.constant dense<0.000000e+00> : vector<16x32xf32>
    %232 = tpu.matmul %231, %205, %cst_99 {dimension_numbers = #tpu.dot_dimension_numbers<[1], [0], [0], [1], [0, 0, 1, 1], [], []>} : vector<16x32xf32>, vector<32x32xf32>, vector<16x32xf32> -> vector<16x32xf32>
    %233 = vector.broadcast %206 : vector<1x32xf32> to vector<16x32xf32>
    %234 = arith.addf %232, %233 : vector<16x32xf32>
    %235 = arith.addf %170, %234 : vector<16x32xf32>
    %236 = vector.extract_strided_slice %172 {offsets = [5, 0], sizes = [1, 32], strides = [1, 1]} : vector<13x32xf32> to vector<1x32xf32>
    %237 = vector.extract_strided_slice %172 {offsets = [6, 0], sizes = [1, 32], strides = [1, 1]} : vector<13x32xf32> to vector<1x32xf32>
    %cst_100 = arith.constant dense<0.000000e+00> : vector<16xf32>
    %238 = vector.multi_reduction <add>, %235, %cst_100 [1] : vector<16x32xf32> to vector<16xf32>
    %239 = vector.shape_cast %238 : vector<16xf32> to vector<16x1xf32>
    %cst_101 = arith.constant 3.200000e+01 : f32
    %240 = vector.broadcast %cst_101 : f32 to vector<16x1xf32>
    %241 = arith.divf %239, %240 : vector<16x1xf32>
    %242 = vector.broadcast %241 : vector<16x1xf32> to vector<16x32xf32>
    %243 = arith.subf %235, %242 : vector<16x32xf32>
    %244 = arith.mulf %243, %243 : vector<16x32xf32>
    %cst_102 = arith.constant dense<0.000000e+00> : vector<16xf32>
    %245 = vector.multi_reduction <add>, %244, %cst_102 [1] : vector<16x32xf32> to vector<16xf32>
    %246 = vector.shape_cast %245 : vector<16xf32> to vector<16x1xf32>
    %cst_103 = arith.constant 0.0322580636 : f32
    %247 = vector.broadcast %cst_103 : f32 to vector<16x1xf32>
    %248 = arith.mulf %246, %247 : vector<16x1xf32>
    %249 = math.sqrt %248 : vector<16x1xf32>
    %cst_104 = arith.constant 9.99999997E-7 : f32
    %250 = vector.broadcast %cst_104 : f32 to vector<16x1xf32>
    %251 = arith.addf %249, %250 : vector<16x1xf32>
    %252 = tpu.reciprocal %251 : vector<16x1xf32> -> vector<16x1xf32>
    %253 = vector.broadcast %241 : vector<16x1xf32> to vector<16x32xf32>
    %254 = arith.subf %235, %253 : vector<16x32xf32>
    %255 = vector.broadcast %236 : vector<1x32xf32> to vector<16x32xf32>
    %256 = arith.mulf %255, %254 : vector<16x32xf32>
    %257 = vector.broadcast %252 : vector<16x1xf32> to vector<16x32xf32>
    %258 = arith.mulf %256, %257 : vector<16x32xf32>
    %259 = vector.broadcast %237 : vector<1x32xf32> to vector<16x32xf32>
    %260 = arith.addf %258, %259 : vector<16x32xf32>
    %c1_105 = arith.constant 1 : index
    %c3_106 = arith.constant 3 : index
    %c0_107 = arith.constant 0 : index
    %c0_108 = arith.constant 0 : index
    %261 = vector.load %arg4[%c1_105, %c3_106, %c0_107, %c0_108] : memref<2x6x32x32xf32, #tpu.memory_space<vmem>>, vector<1x1x32x32xf32>
    %262 = vector.shape_cast %261 : vector<1x1x32x32xf32> to vector<32x32xf32>
    %263 = vector.extract_strided_slice %172 {offsets = [7, 0], sizes = [1, 32], strides = [1, 1]} : vector<13x32xf32> to vector<1x32xf32>
    %c1_109 = arith.constant 1 : index
    %c4_110 = arith.constant 4 : index
    %c0_111 = arith.constant 0 : index
    %c0_112 = arith.constant 0 : index
    %264 = vector.load %arg4[%c1_109, %c4_110, %c0_111, %c0_112] : memref<2x6x32x32xf32, #tpu.memory_space<vmem>>, vector<1x1x32x32xf32>
    %265 = vector.shape_cast %264 : vector<1x1x32x32xf32> to vector<32x32xf32>
    %266 = vector.extract_strided_slice %172 {offsets = [8, 0], sizes = [1, 32], strides = [1, 1]} : vector<13x32xf32> to vector<1x32xf32>
    %c1_113 = arith.constant 1 : index
    %c5_114 = arith.constant 5 : index
    %c0_115 = arith.constant 0 : index
    %c0_116 = arith.constant 0 : index
    %267 = vector.load %arg4[%c1_113, %c5_114, %c0_115, %c0_116] : memref<2x6x32x32xf32, #tpu.memory_space<vmem>>, vector<1x1x32x32xf32>
    %268 = vector.shape_cast %267 : vector<1x1x32x32xf32> to vector<32x32xf32>
    %269 = vector.extract_strided_slice %172 {offsets = [9, 0], sizes = [1, 32], strides = [1, 1]} : vector<13x32xf32> to vector<1x32xf32>
    %cst_117 = arith.constant dense<0.000000e+00> : vector<16x32xf32>
    %270 = tpu.matmul %260, %262, %cst_117 {dimension_numbers = #tpu.dot_dimension_numbers<[1], [0], [0], [1], [0, 0, 1, 1], [], []>} : vector<16x32xf32>, vector<32x32xf32>, vector<16x32xf32> -> vector<16x32xf32>
    %271 = vector.broadcast %263 : vector<1x32xf32> to vector<16x32xf32>
    %272 = arith.addf %270, %271 : vector<16x32xf32>
    %273 = vector.shape_cast %272 : vector<16x32xf32> to vector<2x8x32xf32>
    %cst_118 = arith.constant dense<0.000000e+00> : vector<16x32xf32>
    %274 = tpu.matmul %1, %265, %cst_118 {dimension_numbers = #tpu.dot_dimension_numbers<[1], [0], [0], [1], [0, 0, 1, 1], [], []>} : vector<16x32xf32>, vector<32x32xf32>, vector<16x32xf32> -> vector<16x32xf32>
    %275 = vector.broadcast %266 : vector<1x32xf32> to vector<16x32xf32>
    %276 = arith.addf %274, %275 : vector<16x32xf32>
    %277 = vector.shape_cast %276 : vector<16x32xf32> to vector<2x8x32xf32>
    %278 = vector.shape_cast %1 : vector<16x32xf32> to vector<2x8x32xf32>
    "tpu.trace_start"() <{level = 10 : i32, message = "bmd,bnd->bmn"}> : () -> ()
    %cst_119 = arith.constant dense<0.000000e+00> : vector<2x8x8xf32>
    %279 = tpu.matmul %273, %277, %cst_119 {dimension_numbers = #tpu.dot_dimension_numbers<[2], [2], [1], [1], [0, 0, 0, 1, 1, 1], [0], [0]>} : vector<2x8x32xf32>, vector<2x8x32xf32>, vector<2x8x8xf32> -> vector<2x8x8xf32>
    "tpu.trace_stop"() : () -> ()
    %cst_120 = arith.constant 0.176776692 : f32
    %280 = vector.broadcast %cst_120 : f32 to vector<2x8x8xf32>
    %281 = arith.mulf %279, %280 : vector<2x8x8xf32>
    %282 = arith.addf %281, %3 : vector<2x8x8xf32>
    %cst_121 = arith.constant dense<0xFF800000> : vector<2x8xf32>
    %283 = vector.multi_reduction <maximumf>, %282, %cst_121 [2] : vector<2x8x8xf32> to vector<2x8xf32>
    %284 = vector.shape_cast %283 : vector<2x8xf32> to vector<2x8x1xf32>
    %285 = vector.broadcast %284 : vector<2x8x1xf32> to vector<2x8x8xf32>
    %286 = arith.subf %282, %285 : vector<2x8x8xf32>
    %287 = math.exp %286 : vector<2x8x8xf32>
    %cst_122 = arith.constant dense<0.000000e+00> : vector<2x8xf32>
    %288 = vector.multi_reduction <add>, %287, %cst_122 [2] : vector<2x8x8xf32> to vector<2x8xf32>
    %289 = vector.shape_cast %288 : vector<2x8xf32> to vector<2x8x1xf32>
    %290 = tpu.reciprocal %289 {approx = true} : vector<2x8x1xf32> -> vector<2x8x1xf32>
    %291 = vector.broadcast %290 : vector<2x8x1xf32> to vector<2x8x8xf32>
    %292 = arith.mulf %287, %291 : vector<2x8x8xf32>
    "tpu.trace_start"() <{level = 10 : i32, message = "bmn,bnd->bmd"}> : () -> ()
    %cst_123 = arith.constant dense<0.000000e+00> : vector<2x8x32xf32>
    %293 = tpu.matmul %292, %278, %cst_123 {dimension_numbers = #tpu.dot_dimension_numbers<[2], [1], [1], [2], [0, 0, 0, 1, 1, 2], [0], [0]>} : vector<2x8x8xf32>, vector<2x8x32xf32>, vector<2x8x32xf32> -> vector<2x8x32xf32>
    "tpu.trace_stop"() : () -> ()
    %294 = vector.shape_cast %293 : vector<2x8x32xf32> to vector<16x32xf32>
    %cst_124 = arith.constant dense<0.000000e+00> : vector<16x32xf32>
    %295 = tpu.matmul %294, %268, %cst_124 {dimension_numbers = #tpu.dot_dimension_numbers<[1], [0], [0], [1], [0, 0, 1, 1], [], []>} : vector<16x32xf32>, vector<32x32xf32>, vector<16x32xf32> -> vector<16x32xf32>
    %296 = vector.broadcast %269 : vector<1x32xf32> to vector<16x32xf32>
    %297 = arith.addf %295, %296 : vector<16x32xf32>
    %298 = arith.addf %235, %297 : vector<16x32xf32>
    %299 = vector.extract_strided_slice %172 {offsets = [10, 0], sizes = [1, 32], strides = [1, 1]} : vector<13x32xf32> to vector<1x32xf32>
    %300 = vector.extract_strided_slice %172 {offsets = [11, 0], sizes = [1, 32], strides = [1, 1]} : vector<13x32xf32> to vector<1x32xf32>
    %cst_125 = arith.constant dense<0.000000e+00> : vector<16xf32>
    %301 = vector.multi_reduction <add>, %298, %cst_125 [1] : vector<16x32xf32> to vector<16xf32>
    %302 = vector.shape_cast %301 : vector<16xf32> to vector<16x1xf32>
    %cst_126 = arith.constant 3.200000e+01 : f32
    %303 = vector.broadcast %cst_126 : f32 to vector<16x1xf32>
    %304 = arith.divf %302, %303 : vector<16x1xf32>
    %305 = vector.broadcast %304 : vector<16x1xf32> to vector<16x32xf32>
    %306 = arith.subf %298, %305 : vector<16x32xf32>
    %307 = arith.mulf %306, %306 : vector<16x32xf32>
    %cst_127 = arith.constant dense<0.000000e+00> : vector<16xf32>
    %308 = vector.multi_reduction <add>, %307, %cst_127 [1] : vector<16x32xf32> to vector<16xf32>
    %309 = vector.shape_cast %308 : vector<16xf32> to vector<16x1xf32>
    %cst_128 = arith.constant 0.0322580636 : f32
    %310 = vector.broadcast %cst_128 : f32 to vector<16x1xf32>
    %311 = arith.mulf %309, %310 : vector<16x1xf32>
    %312 = math.sqrt %311 : vector<16x1xf32>
    %cst_129 = arith.constant 9.99999997E-7 : f32
    %313 = vector.broadcast %cst_129 : f32 to vector<16x1xf32>
    %314 = arith.addf %312, %313 : vector<16x1xf32>
    %315 = tpu.reciprocal %314 : vector<16x1xf32> -> vector<16x1xf32>
    %316 = vector.broadcast %304 : vector<16x1xf32> to vector<16x32xf32>
    %317 = arith.subf %298, %316 : vector<16x32xf32>
    %318 = vector.broadcast %299 : vector<1x32xf32> to vector<16x32xf32>
    %319 = arith.mulf %318, %317 : vector<16x32xf32>
    %320 = vector.broadcast %315 : vector<16x1xf32> to vector<16x32xf32>
    %321 = arith.mulf %319, %320 : vector<16x32xf32>
    %322 = vector.broadcast %300 : vector<1x32xf32> to vector<16x32xf32>
    %323 = arith.addf %321, %322 : vector<16x32xf32>
    %c1_130 = arith.constant 1 : index
    %c0_131 = arith.constant 0 : index
    %c0_132 = arith.constant 0 : index
    %324 = vector.load %arg6[%c1_130, %c0_131, %c0_132] : memref<2x32x64xf32, #tpu.memory_space<vmem>>, vector<1x32x64xf32>
    %325 = vector.shape_cast %324 : vector<1x32x64xf32> to vector<32x64xf32>
    %cst_133 = arith.constant dense<0.000000e+00> : vector<16x64xf32>
    %326 = tpu.matmul %323, %325, %cst_133 {dimension_numbers = #tpu.dot_dimension_numbers<[1], [0], [0], [1], [0, 0, 1, 1], [], []>} : vector<16x32xf32>, vector<32x64xf32>, vector<16x64xf32> -> vector<16x64xf32>
    %c1_134 = arith.constant 1 : index
    %c0_135 = arith.constant 0 : index
    %c0_136 = arith.constant 0 : index
    %327 = vector.load %arg7[%c1_134, %c0_135, %c0_136] : memref<2x1x64xf32, #tpu.memory_space<vmem>>, vector<1x1x64xf32>
    %328 = vector.shape_cast %327 : vector<1x1x64xf32> to vector<1x64xf32>
    %329 = vector.broadcast %328 : vector<1x64xf32> to vector<16x64xf32>
    %330 = arith.addf %326, %329 : vector<16x64xf32>
    %c1_137 = arith.constant 1 : index
    %c0_138 = arith.constant 0 : index
    %c0_139 = arith.constant 0 : index
    %331 = vector.load %arg8[%c1_137, %c0_138, %c0_139] : memref<2x64x32xf32, #tpu.memory_space<vmem>>, vector<1x64x32xf32>
    %332 = vector.shape_cast %331 : vector<1x64x32xf32> to vector<64x32xf32>
    %cst_140 = arith.constant dense<0.000000e+00> : vector<16x32xf32>
    %333 = tpu.matmul %330, %332, %cst_140 {dimension_numbers = #tpu.dot_dimension_numbers<[1], [0], [0], [1], [0, 0, 1, 1], [], []>} : vector<16x64xf32>, vector<64x32xf32>, vector<16x32xf32> -> vector<16x32xf32>
    %334 = arith.addf %298, %333 : vector<16x32xf32>
    %335 = vector.extract_strided_slice %172 {offsets = [12, 0], sizes = [1, 32], strides = [1, 1]} : vector<13x32xf32> to vector<1x32xf32>
    %336 = vector.broadcast %335 : vector<1x32xf32> to vector<16x32xf32>
    %337 = arith.addf %334, %336 : vector<16x32xf32>
    %c0_141 = arith.constant 0 : index
    %c0_142 = arith.constant 0 : index
    %338 = vector.load %arg9[%c0_141, %c0_142] : memref<2x32xf32, #tpu.memory_space<vmem>>, vector<2x32xf32>
    %339 = vector.extract_strided_slice %338 {offsets = [0, 0], sizes = [1, 32], strides = [1, 1]} : vector<2x32xf32> to vector<1x32xf32>
    %340 = vector.extract_strided_slice %338 {offsets = [1, 0], sizes = [1, 32], strides = [1, 1]} : vector<2x32xf32> to vector<1x32xf32>
    %cst_143 = arith.constant dense<0.000000e+00> : vector<16xf32>
    %341 = vector.multi_reduction <add>, %337, %cst_143 [1] : vector<16x32xf32> to vector<16xf32>
    %342 = vector.shape_cast %341 : vector<16xf32> to vector<16x1xf32>
    %cst_144 = arith.constant 3.200000e+01 : f32
    %343 = vector.broadcast %cst_144 : f32 to vector<16x1xf32>
    %344 = arith.divf %342, %343 : vector<16x1xf32>
    %345 = vector.broadcast %344 : vector<16x1xf32> to vector<16x32xf32>
    %346 = arith.subf %337, %345 : vector<16x32xf32>
    %347 = arith.mulf %346, %346 : vector<16x32xf32>
    %cst_145 = arith.constant dense<0.000000e+00> : vector<16xf32>
    %348 = vector.multi_reduction <add>, %347, %cst_145 [1] : vector<16x32xf32> to vector<16xf32>
    %349 = vector.shape_cast %348 : vector<16xf32> to vector<16x1xf32>
    %cst_146 = arith.constant 0.0322580636 : f32
    %350 = vector.broadcast %cst_146 : f32 to vector<16x1xf32>
    %351 = arith.mulf %349, %350 : vector<16x1xf32>
    %352 = math.sqrt %351 : vector<16x1xf32>
    %cst_147 = arith.constant 9.99999997E-7 : f32
    %353 = vector.broadcast %cst_147 : f32 to vector<16x1xf32>
    %354 = arith.addf %352, %353 : vector<16x1xf32>
    %355 = tpu.reciprocal %354 : vector<16x1xf32> -> vector<16x1xf32>
    %356 = vector.broadcast %344 : vector<16x1xf32> to vector<16x32xf32>
    %357 = arith.subf %337, %356 : vector<16x32xf32>
    %358 = vector.broadcast %339 : vector<1x32xf32> to vector<16x32xf32>
    %359 = arith.mulf %358, %357 : vector<16x32xf32>
    %360 = vector.broadcast %355 : vector<16x1xf32> to vector<16x32xf32>
    %361 = arith.mulf %359, %360 : vector<16x32xf32>
    %362 = vector.broadcast %340 : vector<1x32xf32> to vector<16x32xf32>
    %363 = arith.addf %361, %362 : vector<16x32xf32>
    %c0_148 = arith.constant 0 : index
    %c0_149 = arith.constant 0 : index
    %364 = vector.load %arg10[%c0_148, %c0_149] : memref<16x32xf32, #tpu.memory_space<vmem>>, vector<16x32xf32>
    tpu.vector_store %arg10[%c0_148, %c0_149], %363 {strides = array<i32>} : memref<16x32xf32, #tpu.memory_space<vmem>>, vector<16x32xf32>,
    return
  }
}

</mosaic_0001>

<llo_original>
// kernel: decoder_forward.1
$region0: #{decoder_forward.1}
  #allocation0 [shape = 'u32[]', space=smem, size = 0x4, offset = 0x4, fixed_abs, tag = 'smem constant byte address 0x4 - core index']
  #allocation1 [shape = 'u32[144,128]{1,0:T(1,128)}', space=vmem, size = 0x12000, scoped, tag = 'internal scratch']
  %s0 = inlined_call_operand.vmem [shape: f32[16,32], index: 0, kind: input, shape index: {}, may-alias: {0,10}]
  %s1 = inlined_call_operand.vmem [shape: f32[16,32], index: 1, kind: input, shape index: {}]
  %s2 = inlined_call_operand.vmem [shape: f32[2,8,8], index: 2, kind: input, shape index: {}]
  %s3 = inlined_call_operand.vmem [shape: f32[2,8,8], index: 3, kind: input, shape index: {}]
  %s4 = inlined_call_operand.vmem [shape: f32[2,6,32,32], index: 4, kind: input, shape index: {}]
  %s5 = inlined_call_operand.vmem [shape: f32[2,13,32], index: 5, kind: input, shape index: {}]
  %s6 = inlined_call_operand.vmem [shape: f32[2,32,64], index: 6, kind: input, shape index: {}]
  %s7 = inlined_call_operand.vmem [shape: f32[2,1,64], index: 7, kind: input, shape index: {}]
  %s8 = inlined_call_operand.vmem [shape: f32[2,64,32], index: 8, kind: input, shape index: {}]
  %s9 = inlined_call_operand.vmem [shape: f32[2,32], index: 9, kind: input, shape index: {}]
  %s10 = inlined_call_operand.vmem [shape: f32[16,32], index: 10, kind: output, shape index: {}, may-alias: {0,10}]
  %s11 = sld [smem:[#allocation0]]
  $region50: #{decoder_forward.1} parent=0
    _
  %s13 = ssub.s32 1, %s11
  %s14 = scalar_select 0, %s13, %s11
  // Predicated region
  $region2: #{decoder_forward.1} parent=0 // pred_check
    _
  $region3: #{decoder_forward.1} parent=0 // pred_check_branch
    %16 = sbr.rel (0) target = $region5
  $region4: #{decoder_forward.1} parent=0 // pred_region
    _
  $region5: #{decoder_forward.1} parent=0 // pred_fallthru
    _
  // Predicated region
  $region6: #{decoder_forward.1} parent=0 // pred_check
    _
  $region7: #{decoder_forward.1} parent=0 // pred_check_branch
    %18 = sbr.rel (0) target = $region9
  $region8: #{decoder_forward.1} parent=0 // pred_region
    _
  $region9: #{decoder_forward.1} parent=0 // pred_fallthru
    _
  // Predicated region
  $region10: #{decoder_forward.1} parent=0 // pred_check
    _
  $region11: #{decoder_forward.1} parent=0 // pred_check_branch
    %20 = sbr.rel (0) target = $region13
  $region12: #{decoder_forward.1} parent=0 // pred_region
    _
  $region13: #{decoder_forward.1} parent=0 // pred_fallthru
    _
  // Predicated region
  $region14: #{decoder_forward.1} parent=0 // pred_check
    _
  $region15: #{decoder_forward.1} parent=0 // pred_check_branch
    %22 = sbr.rel (0) target = $region17
  $region16: #{decoder_forward.1} parent=0 // pred_region
    _
  $region17: #{decoder_forward.1} parent=0 // pred_fallthru
    _
  // Predicated region
  $region18: #{decoder_forward.1} parent=0 // pred_check
    _
  $region19: #{decoder_forward.1} parent=0 // pred_check_branch
    %24 = sbr.rel (0) target = $region21
  $region20: #{decoder_forward.1} parent=0 // pred_region
    _
  $region21: #{decoder_forward.1} parent=0 // pred_fallthru
    _
  // Predicated region
  $region22: #{decoder_forward.1} parent=0 // pred_check
    _
  $region23: #{decoder_forward.1} parent=0 // pred_check_branch
    %26 = sbr.rel (0) target = $region25
  $region24: #{decoder_forward.1} parent=0 // pred_region
    _
  $region25: #{decoder_forward.1} parent=0 // pred_fallthru
    _
  // Predicated region
  $region26: #{decoder_forward.1} parent=0 // pred_check
    _
  $region27: #{decoder_forward.1} parent=0 // pred_check_branch
    %28 = sbr.rel (0) target = $region29
  $region28: #{decoder_forward.1} parent=0 // pred_region
    _
  $region29: #{decoder_forward.1} parent=0 // pred_fallthru
    _
  // Predicated region
  $region30: #{decoder_forward.1} parent=0 // pred_check
    _
  $region31: #{decoder_forward.1} parent=0 // pred_check_branch
    %30 = sbr.rel (0) target = $region33
  $region32: #{decoder_forward.1} parent=0 // pred_region
    _
  $region33: #{decoder_forward.1} parent=0 // pred_fallthru
    _
  // Predicated region
  $region34: #{decoder_forward.1} parent=0 // pred_check
    _
  $region35: #{decoder_forward.1} parent=0 // pred_check_branch
    %32 = sbr.rel (0) target = $region37
  $region36: #{decoder_forward.1} parent=0 // pred_region
    _
  $region37: #{decoder_forward.1} parent=0 // pred_fallthru
    _
  // Predicated region
  $region38: #{decoder_forward.1} parent=0 // pred_check
    _
  $region39: #{decoder_forward.1} parent=0 // pred_check_branch
    %34 = sbr.rel (0) target = $region41
  $region40: #{decoder_forward.1} parent=0 // pred_region
    _
  $region41: #{decoder_forward.1} parent=0 // pred_fallthru
    _
  %v35 = vld [vmem:[%s0] sm:$0xff]
  %v36 = vld [vmem:[%s0 + $0x8] sm:$0xff]
  %v37 = vld [vmem:[%s1] sm:$0xff]
  %v38 = vld [vmem:[%s1 + $0x8] sm:$0xff]
  %v39 = vld [vmem:[%s2] sm:$0xff]
  %v40 = vld [vmem:[%s2 + $0x8] sm:$0xff]
  %v41 = vld [vmem:[%s3] sm:$0xff]
  %v42 = vld [vmem:[%s3 + $0x8] sm:$0xff]
  %v43 = vld [vmem:[%s5] sm:$0xff]
  %v44 = vld [vmem:[%s5 + $0x8] sm:$0x1f]
  %vm45 = vcmask 261120
  %v46 = vsel %vm45, %v35, 0.0
  %47 = vadd.xlane.f32.xlu0 %v46
  %v48 = vpop.xlane.xlu0 %47
  %v49 = vsel %vm45, %v36, 0.0
  %50 = vadd.xlane.f32.xlu0 %v49
  %v51 = vpop.xlane.xlu0 %50
  %v52 = vrcp.pop 32.0
  %v53 = vmul.f32 %v48, %v52
  %v54 = vmul.f32 %v51, %v52
  %v55 = vsub.f32 %v35, %v53
  %v56 = vsub.f32 %v36, %v54
  %v57 = vmul.f32 %v55, %v55
  %v58 = vmul.f32 %v56, %v56
  %v59 = vsel %vm45, %v57, 0.0
  %60 = vadd.xlane.f32.xlu0 %v59
  %v61 = vpop.xlane.xlu0 %60
  %v62 = vsel %vm45, %v58, 0.0
  %63 = vadd.xlane.f32.xlu0 %v62
  %v64 = vpop.xlane.xlu0 %63
  %v65 = vmul.f32 %v61, 0.032258064
  %v66 = vmul.f32 %v64, 0.032258064
  %v67 = vrsqrt.pop %v65
  %v68 = vmul.f32 %v65, %v67
  %vm69 = vcmp.eq.f32.partialorder %v65, inf
  %v70 = vsel %vm69, %v65, %v68
  %vm71 = vcmp.eq.f32.partialorder %v65, 0.0
  %v72 = vand.u32 %v65, 2147483648
  %v73 = vsel %vm71, %v72, %v70
  %v74 = vrsqrt.pop %v66
  %v75 = vmul.f32 %v66, %v74
  %vm76 = vcmp.eq.f32.partialorder %v66, inf
  %v77 = vsel %vm76, %v66, %v75
  %vm78 = vcmp.eq.f32.partialorder %v66, 0.0
  %v79 = vand.u32 %v66, 2147483648
  %v80 = vsel %vm78, %v79, %v77
  %v81 = vadd.f32 %v73, 1e-06
  %v82 = vadd.f32 %v80, 1e-06
  %v83 = vrcp.pop %v81
  %v84 = vrcp.pop %v82
  %v85 = vlaneseq
  %v86 = vshrl.u32 %v85, 7
  %v87 = vsub.s32 0, %v86
  %v88 = vrot.slane %v43, %v87
  %v89 = vmul.f32 %v88, %v55
  %v90 = vmul.f32 %v88, %v56
  %v91 = vmul.f32 %v89, %v83
  %v92 = vmul.f32 %v90, %v84
  %v93 = vlaneseq
  %v94 = vshrl.u32 %v93, 7
  %v95 = vsub.s32 1, %v94
  %v96 = vrot.slane %v43, %v95
  %v97 = vadd.f32 %v91, %v96
  %v98 = vadd.f32 %v92, %v96
  %v99 = vld [vmem:[%s4] sm:$0xff]
  %v100 = vld [vmem:[%s4 + $0x8] sm:$0xff]
  %v101 = vld [vmem:[%s4 + $0x10] sm:$0xff]
  %v102 = vld [vmem:[%s4 + $0x18] sm:$0xff]
  %s103 = scalar_lea.vmem %s4, 32
  %v104 = vld [vmem:[%s103] sm:$0xff]
  %v105 = vld [vmem:[%s103 + $0x8] sm:$0xff]
  %v106 = vld [vmem:[%s103 + $0x10] sm:$0xff]
  %v107 = vld [vmem:[%s103 + $0x18] sm:$0xff]
  %s108 = scalar_lea.vmem %s4, 64
  %v109 = vld [vmem:[%s108] sm:$0xff]
  %v110 = vld [vmem:[%s108 + $0x8] sm:$0xff]
  %v111 = vld [vmem:[%s108 + $0x10] sm:$0xff]
  %v112 = vld [vmem:[%s108 + $0x18] sm:$0xff]
  %v113 = vlaneseq
  %v114 = vshrl.u32 %v113, 7
  %v115 = vsub.s32 2, %v114
  %v116 = vrot.slane %v43, %v115
  %v118 = vsel %vm45, %v97, 0
  %v121 = vsel %vm45, %v98, 0
  %123 = vmatprep.subr.mxu0 0.0
  %124 = vmatpush1.msra.mxu0 0.0
  %125 = vmatprep.subr.mxu0 0.0
  %126 = vmatpush1.msra.mxu0 0.0
  %127 = vmatprep.subr.mxu0 0.0
  %128 = vmatpush1.msra.mxu0 0.0
  %129 = vmatprep.subr.mxu0 0.0
  %130 = vmatpush1.msra.mxu0 0.0
  %131 = vmatprep.subr.mxu0 0.0
  %132 = vmatpush1.msra.mxu0 0.0
  %133 = vmatprep.subr.mxu0 0.0
  %134 = vmatpush1.msra.mxu0 0.0
  %135 = vmatprep.subr.mxu0 0.0
  %136 = vmatpush1.msra.mxu0 0.0
  %137 = vmatprep.subr.mxu0 0.0
  %138 = vmatpush1.msra.mxu0 0.0
  %139 = vmatprep.subr.mxu0 0.0
  %140 = vmatpush1.msra.mxu0 0.0
  %141 = vmatprep.subr.mxu0 0.0
  %142 = vmatpush1.msra.mxu0 0.0
  %143 = vmatprep.subr.mxu0 0.0
  %144 = vmatpush1.msra.mxu0 0.0
  %145 = vmatprep.subr.mxu0 0.0
  %146 = vmatpush1.msra.mxu0 0.0
  %147 = vmatprep.subr.mxu0 0.0
  %148 = vmatpush1.msra.mxu0 %v102
  %149 = vmatprep.subr.mxu0 0.0
  %150 = vmatpush1.msra.mxu0 %v101
  %151 = vmatprep.subr.mxu0 0.0
  %152 = vmatpush1.msra.mxu0 %v100
  %153 = vmatprep.subr.mxu0 0.0
  %154 = vmatpush1.msra.mxu0 %v99
  %155 = vmatprep.subr.mxu0 0.0
  %156 = vmatpush2.msra.mxu0 0.0
  %157 = vmatprep.subr.mxu0 0.0
  %158 = vmatpush2.msra.mxu0 0.0
  %159 = vmatprep.subr.mxu0 0.0
  %160 = vmatpush2.msra.mxu0 0.0
  %161 = vmatprep.subr.mxu0 0.0
  %162 = vmatpush2.msra.mxu0 0.0
  %163 = vmatprep.subr.mxu0 0.0
  %164 = vmatpush2.msra.mxu0 0.0
  %165 = vmatprep.subr.mxu0 0.0
  %166 = vmatpush2.msra.mxu0 0.0
  %167 = vmatprep.subr.mxu0 0.0
  %168 = vmatpush2.msra.mxu0 0.0
  %169 = vmatprep.subr.mxu0 0.0
  %170 = vmatpush2.msra.mxu0 0.0
  %171 = vmatprep.subr.mxu0 0.0
  %172 = vmatpush2.msra.mxu0 0.0
  %173 = vmatprep.subr.mxu0 0.0
  %174 = vmatpush2.msra.mxu0 0.0
  %175 = vmatprep.subr.mxu0 0.0
  %176 = vmatpush2.msra.mxu0 0.0
  %177 = vmatprep.subr.mxu0 0.0
  %178 = vmatpush2.msra.mxu0 0.0
  %179 = vmatprep.subr.mxu0 0.0
  %180 = vmatpush2.msra.mxu0 0.0
  %181 = vmatprep.subr.mxu0 0.0
  %182 = vmatpush2.msra.mxu0 0.0
  %183 = vmatprep.subr.mxu0 0.0
  %184 = vmatpush2.msra.mxu0 0.0
  %185 = vmatprep.subr.mxu0 0.0
  %186 = vmatpush2.msra.mxu0 0.0
  %187 = vmatprep.mubr.f32.mxu0 0.0
  %188 = vmatmul.mubr.f32.gmra.mxu0 %v118
  %v189 = vpop.f32.mrf.mxu0
  %v190 = vadd.f32 %v116, %v189
  %v191 = vpop.f32.mrf.mxu0
  %192 = vmatprep.mubr.f32.mxu0 0.0
  %193 = vmatmul.mubr.f32.gmra.mxu0 %v121
  %v194 = vpop.f32.mrf.mxu0
  %v195 = vadd.f32 %v116, %v194
  %v196 = vpop.f32.mrf.mxu0
  %197 = vdwg.mxu0
  %v198 = vlaneseq
  %v199 = vshrl.u32 %v198, 7
  %v200 = vsub.s32 3, %v199
  %v201 = vrot.slane %v43, %v200
  %202 = vmatprep.subr.mxu0 0.0
  %203 = vmatpush1.msra.mxu0 0.0
  %204 = vmatprep.subr.mxu0 0.0
  %205 = vmatpush1.msra.mxu0 0.0
  %206 = vmatprep.subr.mxu0 0.0
  %207 = vmatpush1.msra.mxu0 0.0
  %208 = vmatprep.subr.mxu0 0.0
  %209 = vmatpush1.msra.mxu0 0.0
  %210 = vmatprep.subr.mxu0 0.0
  %211 = vmatpush1.msra.mxu0 0.0
  %212 = vmatprep.subr.mxu0 0.0
  %213 = vmatpush1.msra.mxu0 0.0
  %214 = vmatprep.subr.mxu0 0.0
  %215 = vmatpush1.msra.mxu0 0.0
  %216 = vmatprep.subr.mxu0 0.0
  %217 = vmatpush1.msra.mxu0 0.0
  %218 = vmatprep.subr.mxu0 0.0
  %219 = vmatpush1.msra.mxu0 0.0
  %220 = vmatprep.subr.mxu0 0.0
  %221 = vmatpush1.msra.mxu0 0.0
  %222 = vmatprep.subr.mxu0 0.0
  %223 = vmatpush1.msra.mxu0 0.0
  %224 = vmatprep.subr.mxu0 0.0
  %225 = vmatpush1.msra.mxu0 0.0
  %226 = vmatprep.subr.mxu0 0.0
  %227 = vmatpush1.msra.mxu0 %v107
  %228 = vmatprep.subr.mxu0 0.0
  %229 = vmatpush1.msra.mxu0 %v106
  %230 = vmatprep.subr.mxu0 0.0
  %231 = vmatpush1.msra.mxu0 %v105
  %232 = vmatprep.subr.mxu0 0.0
  %233 = vmatpush1.msra.mxu0 %v104
  %234 = vmatprep.subr.mxu0 0.0
  %235 = vmatpush2.msra.mxu0 0.0
  %236 = vmatprep.subr.mxu0 0.0
  %237 = vmatpush2.msra.mxu0 0.0
  %238 = vmatprep.subr.mxu0 0.0
  %239 = vmatpush2.msra.mxu0 0.0
  %240 = vmatprep.subr.mxu0 0.0
  %241 = vmatpush2.msra.mxu0 0.0
  %242 = vmatprep.subr.mxu0 0.0
  %243 = vmatpush2.msra.mxu0 0.0
  %244 = vmatprep.subr.mxu0 0.0
  %245 = vmatpush2.msra.mxu0 0.0
  %246 = vmatprep.subr.mxu0 0.0
  %247 = vmatpush2.msra.mxu0 0.0
  %248 = vmatprep.subr.mxu0 0.0
  %249 = vmatpush2.msra.mxu0 0.0
  %250 = vmatprep.subr.mxu0 0.0
  %251 = vmatpush2.msra.mxu0 0.0
  %252 = vmatprep.subr.mxu0 0.0
  %253 = vmatpush2.msra.mxu0 0.0
  %254 = vmatprep.subr.mxu0 0.0
  %255 = vmatpush2.msra.mxu0 0.0
  %256 = vmatprep.subr.mxu0 0.0
  %257 = vmatpush2.msra.mxu0 0.0
  %258 = vmatprep.subr.mxu0 0.0
  %259 = vmatpush2.msra.mxu0 0.0
  %260 = vmatprep.subr.mxu0 0.0
  %261 = vmatpush2.msra.mxu0 0.0
  %262 = vmatprep.subr.mxu0 0.0
  %263 = vmatpush2.msra.mxu0 0.0
  %264 = vmatprep.subr.mxu0 0.0
  %265 = vmatpush2.msra.mxu0 0.0
  %266 = vmatprep.mubr.f32.mxu0 0.0
  %267 = vmatmul.mubr.f32.gmra.mxu0 %v118
  %v268 = vpop.f32.mrf.mxu0
  %v269 = vadd.f32 %v201, %v268
  %v270 = vpop.f32.mrf.mxu0
  %271 = vmatprep.mubr.f32.mxu0 0.0
  %272 = vmatmul.mubr.f32.gmra.mxu0 %v121
  %v273 = vpop.f32.mrf.mxu0
  %v274 = vadd.f32 %v201, %v273
  %v275 = vpop.f32.mrf.mxu0
  %276 = vdwg.mxu0
  %v278 = vsel %vm45, %v190, 0
  %v281 = vsel %vm45, %v269, 0
  %283 = vmatprep.subr.mxu0 0.0
  %284 = vmatpush1.xpose.msra.mxu0 0.0
  %285 = vmatprep.subr.mxu0 0.0
  %286 = vmatpush1.xpose.msra.mxu0 0.0
  %287 = vmatprep.subr.mxu0 0.0
  %288 = vmatpush1.xpose.msra.mxu0 0.0
  %289 = vmatprep.subr.mxu0 0.0
  %290 = vmatpush1.xpose.msra.mxu0 0.0
  %291 = vmatprep.subr.mxu0 0.0
  %292 = vmatpush1.xpose.msra.mxu0 0.0
  %293 = vmatprep.subr.mxu0 0.0
  %294 = vmatpush1.xpose.msra.mxu0 0.0
  %295 = vmatprep.subr.mxu0 0.0
  %296 = vmatpush1.xpose.msra.mxu0 0.0
  %297 = vmatprep.subr.mxu0 0.0
  %298 = vmatpush1.xpose.msra.mxu0 0.0
  %299 = vmatprep.subr.mxu0 0.0
  %300 = vmatpush1.xpose.msra.mxu0 0.0
  %301 = vmatprep.subr.mxu0 0.0
  %302 = vmatpush1.xpose.msra.mxu0 0.0
  %303 = vmatprep.subr.mxu0 0.0
  %304 = vmatpush1.xpose.msra.mxu0 0.0
  %305 = vmatprep.subr.mxu0 0.0
  %306 = vmatpush1.xpose.msra.mxu0 0.0
  %307 = vmatprep.subr.mxu0 0.0
  %308 = vmatpush1.xpose.msra.mxu0 0.0
  %309 = vmatprep.subr.mxu0 0.0
  %310 = vmatpush1.xpose.msra.mxu0 0.0
  %311 = vmatprep.subr.mxu0 0.0
  %312 = vmatpush1.xpose.msra.mxu0 0.0
  %313 = vmatprep.subr.mxu0 0.0
  %314 = vmatpush1.xpose.msra.mxu0 %v281
  %315 = vmatprep.subr.mxu0 0.0
  %316 = vmatpush2.xpose.msra.mxu0 0.0
  %317 = vmatprep.subr.mxu0 0.0
  %318 = vmatpush2.xpose.msra.mxu0 0.0
  %319 = vmatprep.subr.mxu0 0.0
  %320 = vmatpush2.xpose.msra.mxu0 0.0
  %321 = vmatprep.subr.mxu0 0.0
  %322 = vmatpush2.xpose.msra.mxu0 0.0
  %323 = vmatprep.subr.mxu0 0.0
  %324 = vmatpush2.xpose.msra.mxu0 0.0
  %325 = vmatprep.subr.mxu0 0.0
  %326 = vmatpush2.xpose.msra.mxu0 0.0
  %327 = vmatprep.subr.mxu0 0.0
  %328 = vmatpush2.xpose.msra.mxu0 0.0
  %329 = vmatprep.subr.mxu0 0.0
  %330 = vmatpush2.xpose.msra.mxu0 0.0
  %331 = vmatprep.subr.mxu0 0.0
  %332 = vmatpush2.xpose.msra.mxu0 0.0
  %333 = vmatprep.subr.mxu0 0.0
  %334 = vmatpush2.xpose.msra.mxu0 0.0
  %335 = vmatprep.subr.mxu0 0.0
  %336 = vmatpush2.xpose.msra.mxu0 0.0
  %337 = vmatprep.subr.mxu0 0.0
  %338 = vmatpush2.xpose.msra.mxu0 0.0
  %339 = vmatprep.subr.mxu0 0.0
  %340 = vmatpush2.xpose.msra.mxu0 0.0
  %341 = vmatprep.subr.mxu0 0.0
  %342 = vmatpush2.xpose.msra.mxu0 0.0
  %343 = vmatprep.subr.mxu0 0.0
  %344 = vmatpush2.xpose.msra.mxu0 0.0
  %345 = vmatprep.subr.mxu0 0.0
  %346 = vmatpush2.xpose.msra.mxu0 0.0
  %347 = vmatprep.mubr.f32.mxu0 0.0
  %348 = vmatmul.mubr.f32.gmra.mxu0 %v278
  %v349 = vpop.f32.mrf.mxu0
  %v350 = vadd.f32 0.0, %v349
  %v351 = vpop.f32.mrf.mxu0
  %352 = vdwg.mxu0
  %v354 = vsel %vm45, %v195, 0
  %v357 = vsel %vm45, %v274, 0
  %359 = vmatprep.subr.mxu0 0.0
  %360 = vmatpush1.xpose.msra.mxu0 0.0
  %361 = vmatprep.subr.mxu0 0.0
  %362 = vmatpush1.xpose.msra.mxu0 0.0
  %363 = vmatprep.subr.mxu0 0.0
  %364 = vmatpush1.xpose.msra.mxu0 0.0
  %365 = vmatprep.subr.mxu0 0.0
  %366 = vmatpush1.xpose.msra.mxu0 0.0
  %367 = vmatprep.subr.mxu0 0.0
  %368 = vmatpush1.xpose.msra.mxu0 0.0
  %369 = vmatprep.subr.mxu0 0.0
  %370 = vmatpush1.xpose.msra.mxu0 0.0
  %371 = vmatprep.subr.mxu0 0.0
  %372 = vmatpush1.xpose.msra.mxu0 0.0
  %373 = vmatprep.subr.mxu0 0.0
  %374 = vmatpush1.xpose.msra.mxu0 0.0
  %375 = vmatprep.subr.mxu0 0.0
  %376 = vmatpush1.xpose.msra.mxu0 0.0
  %377 = vmatprep.subr.mxu0 0.0
  %378 = vmatpush1.xpose.msra.mxu0 0.0
  %379 = vmatprep.subr.mxu0 0.0
  %380 = vmatpush1.xpose.msra.mxu0 0.0
  %381 = vmatprep.subr.mxu0 0.0
  %382 = vmatpush1.xpose.msra.mxu0 0.0
  %383 = vmatprep.subr.mxu0 0.0
  %384 = vmatpush1.xpose.msra.mxu0 0.0
  %385 = vmatprep.subr.mxu0 0.0
  %386 = vmatpush1.xpose.msra.mxu0 0.0
  %387 = vmatprep.subr.mxu0 0.0
  %388 = vmatpush1.xpose.msra.mxu0 0.0
  %389 = vmatprep.subr.mxu0 0.0
  %390 = vmatpush1.xpose.msra.mxu0 %v357
  %391 = vmatprep.subr.mxu0 0.0
  %392 = vmatpush2.xpose.msra.mxu0 0.0
  %393 = vmatprep.subr.mxu0 0.0
  %394 = vmatpush2.xpose.msra.mxu0 0.0
  %395 = vmatprep.subr.mxu0 0.0
  %396 = vmatpush2.xpose.msra.mxu0 0.0
  %397 = vmatprep.subr.mxu0 0.0
  %398 = vmatpush2.xpose.msra.mxu0 0.0
  %399 = vmatprep.subr.mxu0 0.0
  %400 = vmatpush2.xpose.msra.mxu0 0.0
  %401 = vmatprep.subr.mxu0 0.0
  %402 = vmatpush2.xpose.msra.mxu0 0.0
  %403 = vmatprep.subr.mxu0 0.0
  %404 = vmatpush2.xpose.msra.mxu0 0.0
  %405 = vmatprep.subr.mxu0 0.0
  %406 = vmatpush2.xpose.msra.mxu0 0.0
  %407 = vmatprep.subr.mxu0 0.0
  %408 = vmatpush2.xpose.msra.mxu0 0.0
  %409 = vmatprep.subr.mxu0 0.0
  %410 = vmatpush2.xpose.msra.mxu0 0.0
  %411 = vmatprep.subr.mxu0 0.0
  %412 = vmatpush2.xpose.msra.mxu0 0.0
  %413 = vmatprep.subr.mxu0 0.0
  %414 = vmatpush2.xpose.msra.mxu0 0.0
  %415 = vmatprep.subr.mxu0 0.0
  %416 = vmatpush2.xpose.msra.mxu0 0.0
  %417 = vmatprep.subr.mxu0 0.0
  %418 = vmatpush2.xpose.msra.mxu0 0.0
  %419 = vmatprep.subr.mxu0 0.0
  %420 = vmatpush2.xpose.msra.mxu0 0.0
  %421 = vmatprep.subr.mxu0 0.0
  %422 = vmatpush2.xpose.msra.mxu0 0.0
  %423 = vmatprep.mubr.f32.mxu0 0.0
  %424 = vmatmul.mubr.f32.gmra.mxu0 %v354
  %v425 = vpop.f32.mrf.mxu0
  %v426 = vadd.f32 0.0, %v425
  %v427 = vpop.f32.mrf.mxu0
  %428 = vdwg.mxu0
  %v429 = vmul.f32 %v350, 0.17677669
  %v430 = vmul.f32 %v426, 0.17677669
  %v431 = vadd.f32 %v429, %v39
  %v432 = vadd.f32 %v430, %v40
  %vm433 = vcmask 64512
  %v434 = vsel %vm433, %v431, -inf
  %435 = vmax.xlane.f32.xlu0 %v434
  %v436 = vpop.xlane.xlu0 %435
  %v437 = vsel %vm433, %v432, -inf
  %438 = vmax.xlane.f32.xlu0 %v437
  %v439 = vpop.xlane.xlu0 %438
  %v440 = vsub.f32 %v431, %v436
  %v441 = vsub.f32 %v432, %v439
  %v442 = vmul.f32 %v440, 1.442695
  %v443 = vpow.pop %v442
  %v444 = vmul.f32 %v441, 1.442695
  %v445 = vpow.pop %v444
  %v446 = vsel %vm433, %v443, 0.0
  %447 = vadd.xlane.f32.xlu0 %v446
  %v448 = vpop.xlane.xlu0 %447
  %v449 = vsel %vm433, %v445, 0.0
  %450 = vadd.xlane.f32.xlu0 %v449
  %v451 = vpop.xlane.xlu0 %450
  %v452 = vrcp.pop %v448
  %v453 = vrcp.pop %v451
  %v454 = vmul.f32 %v443, %v452
  %v455 = vmul.f32 %v445, %v453
  %v457 = vsel %vm433, %v454, 0
  %459 = vmatprep.subr.mxu0 0.0
  %460 = vmatpush1.msra.mxu0 0.0
  %461 = vmatprep.subr.mxu0 0.0
  %462 = vmatpush1.msra.mxu0 0.0
  %463 = vmatprep.subr.mxu0 0.0
  %464 = vmatpush1.msra.mxu0 0.0
  %465 = vmatprep.subr.mxu0 0.0
  %466 = vmatpush1.msra.mxu0 0.0
  %467 = vmatprep.subr.mxu0 0.0
  %468 = vmatpush1.msra.mxu0 0.0
  %469 = vmatprep.subr.mxu0 0.0
  %470 = vmatpush1.msra.mxu0 0.0
  %471 = vmatprep.subr.mxu0 0.0
  %472 = vmatpush1.msra.mxu0 0.0
  %473 = vmatprep.subr.mxu0 0.0
  %474 = vmatpush1.msra.mxu0 0.0
  %475 = vmatprep.subr.mxu0 0.0
  %476 = vmatpush1.msra.mxu0 0.0
  %477 = vmatprep.subr.mxu0 0.0
  %478 = vmatpush1.msra.mxu0 0.0
  %479 = vmatprep.subr.mxu0 0.0
  %480 = vmatpush1.msra.mxu0 0.0
  %481 = vmatprep.subr.mxu0 0.0
  %482 = vmatpush1.msra.mxu0 0.0
  %483 = vmatprep.subr.mxu0 0.0
  %484 = vmatpush1.msra.mxu0 0.0
  %485 = vmatprep.subr.mxu0 0.0
  %486 = vmatpush1.msra.mxu0 0.0
  %487 = vmatprep.subr.mxu0 0.0
  %488 = vmatpush1.msra.mxu0 0.0
  %489 = vmatprep.subr.mxu0 0.0
  %490 = vmatpush1.msra.mxu0 %v97
  %491 = vmatprep.subr.mxu0 0.0
  %492 = vmatpush2.msra.mxu0 0.0
  %493 = vmatprep.subr.mxu0 0.0
  %494 = vmatpush2.msra.mxu0 0.0
  %495 = vmatprep.subr.mxu0 0.0
  %496 = vmatpush2.msra.mxu0 0.0
  %497 = vmatprep.subr.mxu0 0.0
  %498 = vmatpush2.msra.mxu0 0.0
  %499 = vmatprep.subr.mxu0 0.0
  %500 = vmatpush2.msra.mxu0 0.0
  %501 = vmatprep.subr.mxu0 0.0
  %502 = vmatpush2.msra.mxu0 0.0
  %503 = vmatprep.subr.mxu0 0.0
  %504 = vmatpush2.msra.mxu0 0.0
  %505 = vmatprep.subr.mxu0 0.0
  %506 = vmatpush2.msra.mxu0 0.0
  %507 = vmatprep.subr.mxu0 0.0
  %508 = vmatpush2.msra.mxu0 0.0
  %509 = vmatprep.subr.mxu0 0.0
  %510 = vmatpush2.msra.mxu0 0.0
  %511 = vmatprep.subr.mxu0 0.0
  %512 = vmatpush2.msra.mxu0 0.0
  %513 = vmatprep.subr.mxu0 0.0
  %514 = vmatpush2.msra.mxu0 0.0
  %515 = vmatprep.subr.mxu0 0.0
  %516 = vmatpush2.msra.mxu0 0.0
  %517 = vmatprep.subr.mxu0 0.0
  %518 = vmatpush2.msra.mxu0 0.0
  %519 = vmatprep.subr.mxu0 0.0
  %520 = vmatpush2.msra.mxu0 0.0
  %521 = vmatprep.subr.mxu0 0.0
  %522 = vmatpush2.msra.mxu0 0.0
  %523 = vmatprep.mubr.f32.mxu0 0.0
  %524 = vmatmul.mubr.f32.gmra.mxu0 %v457
  %v525 = vpop.f32.mrf.mxu0
  %v526 = vadd.f32 0.0, %v525
  %v527 = vpop.f32.mrf.mxu0
  %528 = vdwg.mxu0
  %v530 = vsel %vm433, %v455, 0
  %532 = vmatprep.subr.mxu0 0.0
  %533 = vmatpush1.msra.mxu0 0.0
  %534 = vmatprep.subr.mxu0 0.0
  %535 = vmatpush1.msra.mxu0 0.0
  %536 = vmatprep.subr.mxu0 0.0
  %537 = vmatpush1.msra.mxu0 0.0
  %538 = vmatprep.subr.mxu0 0.0
  %539 = vmatpush1.msra.mxu0 0.0
  %540 = vmatprep.subr.mxu0 0.0
  %541 = vmatpush1.msra.mxu0 0.0
  %542 = vmatprep.subr.mxu0 0.0
  %543 = vmatpush1.msra.mxu0 0.0
  %544 = vmatprep.subr.mxu0 0.0
  %545 = vmatpush1.msra.mxu0 0.0
  %546 = vmatprep.subr.mxu0 0.0
  %547 = vmatpush1.msra.mxu0 0.0
  %548 = vmatprep.subr.mxu0 0.0
  %549 = vmatpush1.msra.mxu0 0.0
  %550 = vmatprep.subr.mxu0 0.0
  %551 = vmatpush1.msra.mxu0 0.0
  %552 = vmatprep.subr.mxu0 0.0
  %553 = vmatpush1.msra.mxu0 0.0
  %554 = vmatprep.subr.mxu0 0.0
  %555 = vmatpush1.msra.mxu0 0.0
  %556 = vmatprep.subr.mxu0 0.0
  %557 = vmatpush1.msra.mxu0 0.0
  %558 = vmatprep.subr.mxu0 0.0
  %559 = vmatpush1.msra.mxu0 0.0
  %560 = vmatprep.subr.mxu0 0.0
  %561 = vmatpush1.msra.mxu0 0.0
  %562 = vmatprep.subr.mxu0 0.0
  %563 = vmatpush1.msra.mxu0 %v98
  %564 = vmatprep.subr.mxu0 0.0
  %565 = vmatpush2.msra.mxu0 0.0
  %566 = vmatprep.subr.mxu0 0.0
  %567 = vmatpush2.msra.mxu0 0.0
  %568 = vmatprep.subr.mxu0 0.0
  %569 = vmatpush2.msra.mxu0 0.0
  %570 = vmatprep.subr.mxu0 0.0
  %571 = vmatpush2.msra.mxu0 0.0
  %572 = vmatprep.subr.mxu0 0.0
  %573 = vmatpush2.msra.mxu0 0.0
  %574 = vmatprep.subr.mxu0 0.0
  %575 = vmatpush2.msra.mxu0 0.0
  %576 = vmatprep.subr.mxu0 0.0
  %577 = vmatpush2.msra.mxu0 0.0
  %578 = vmatprep.subr.mxu0 0.0
  %579 = vmatpush2.msra.mxu0 0.0
  %580 = vmatprep.subr.mxu0 0.0
  %581 = vmatpush2.msra.mxu0 0.0
  %582 = vmatprep.subr.mxu0 0.0
  %583 = vmatpush2.msra.mxu0 0.0
  %584 = vmatprep.subr.mxu0 0.0
  %585 = vmatpush2.msra.mxu0 0.0
  %586 = vmatprep.subr.mxu0 0.0
  %587 = vmatpush2.msra.mxu0 0.0
  %588 = vmatprep.subr.mxu0 0.0
  %589 = vmatpush2.msra.mxu0 0.0
  %590 = vmatprep.subr.mxu0 0.0
  %591 = vmatpush2.msra.mxu0 0.0
  %592 = vmatprep.subr.mxu0 0.0
  %593 = vmatpush2.msra.mxu0 0.0
  %594 = vmatprep.subr.mxu0 0.0
  %595 = vmatpush2.msra.mxu0 0.0
  %596 = vmatprep.mubr.f32.mxu0 0.0
  %597 = vmatmul.mubr.f32.gmra.mxu0 %v530
  %v598 = vpop.f32.mrf.mxu0
  %v599 = vadd.f32 0.0, %v598
  %v600 = vpop.f32.mrf.mxu0
  %601 = vdwg.mxu0
  %v602 = vlaneseq
  %v603 = vshrl.u32 %v602, 7
  %v604 = vsub.s32 4, %v603
  %v605 = vrot.slane %v43, %v604
  %v607 = vsel %vm45, %v526, 0
  %v610 = vsel %vm45, %v599, 0
  %612 = vmatprep.subr.mxu0 0.0
  %613 = vmatpush1.msra.mxu0 0.0
  %614 = vmatprep.subr.mxu0 0.0
  %615 = vmatpush1.msra.mxu0 0.0
  %616 = vmatprep.subr.mxu0 0.0
  %617 = vmatpush1.msra.mxu0 0.0
  %618 = vmatprep.subr.mxu0 0.0
  %619 = vmatpush1.msra.mxu0 0.0
  %620 = vmatprep.subr.mxu0 0.0
  %621 = vmatpush1.msra.mxu0 0.0
  %622 = vmatprep.subr.mxu0 0.0
  %623 = vmatpush1.msra.mxu0 0.0
  %624 = vmatprep.subr.mxu0 0.0
  %625 = vmatpush1.msra.mxu0 0.0
  %626 = vmatprep.subr.mxu0 0.0
  %627 = vmatpush1.msra.mxu0 0.0
  %628 = vmatprep.subr.mxu0 0.0
  %629 = vmatpush1.msra.mxu0 0.0
  %630 = vmatprep.subr.mxu0 0.0
  %631 = vmatpush1.msra.mxu0 0.0
  %632 = vmatprep.subr.mxu0 0.0
  %633 = vmatpush1.msra.mxu0 0.0
  %634 = vmatprep.subr.mxu0 0.0
  %635 = vmatpush1.msra.mxu0 0.0
  %636 = vmatprep.subr.mxu0 0.0
  %637 = vmatpush1.msra.mxu0 %v112
  %638 = vmatprep.subr.mxu0 0.0
  %639 = vmatpush1.msra.mxu0 %v111
  %640 = vmatprep.subr.mxu0 0.0
  %641 = vmatpush1.msra.mxu0 %v110
  %642 = vmatprep.subr.mxu0 0.0
  %643 = vmatpush1.msra.mxu0 %v109
  %644 = vmatprep.subr.mxu0 0.0
  %645 = vmatpush2.msra.mxu0 0.0
  %646 = vmatprep.subr.mxu0 0.0
  %647 = vmatpush2.msra.mxu0 0.0
  %648 = vmatprep.subr.mxu0 0.0
  %649 = vmatpush2.msra.mxu0 0.0
  %650 = vmatprep.subr.mxu0 0.0
  %651 = vmatpush2.msra.mxu0 0.0
  %652 = vmatprep.subr.mxu0 0.0
  %653 = vmatpush2.msra.mxu0 0.0
  %654 = vmatprep.subr.mxu0 0.0
  %655 = vmatpush2.msra.mxu0 0.0
  %656 = vmatprep.subr.mxu0 0.0
  %657 = vmatpush2.msra.mxu0 0.0
  %658 = vmatprep.subr.mxu0 0.0
  %659 = vmatpush2.msra.mxu0 0.0
  %660 = vmatprep.subr.mxu0 0.0
  %661 = vmatpush2.msra.mxu0 0.0
  %662 = vmatprep.subr.mxu0 0.0
  %663 = vmatpush2.msra.mxu0 0.0
  %664 = vmatprep.subr.mxu0 0.0
  %665 = vmatpush2.msra.mxu0 0.0
  %666 = vmatprep.subr.mxu0 0.0
  %667 = vmatpush2.msra.mxu0 0.0
  %668 = vmatprep.subr.mxu0 0.0
  %669 = vmatpush2.msra.mxu0 0.0
  %670 = vmatprep.subr.mxu0 0.0
  %671 = vmatpush2.msra.mxu0 0.0
  %672 = vmatprep.subr.mxu0 0.0
  %673 = vmatpush2.msra.mxu0 0.0
  %674 = vmatprep.subr.mxu0 0.0
  %675 = vmatpush2.msra.mxu0 0.0
  %676 = vmatprep.mubr.f32.mxu0 0.0
  %677 = vmatmul.mubr.f32.gmra.mxu0 %v607
  %v678 = vpop.f32.mrf.mxu0
  %v679 = vadd.f32 %v605, %v678
  %v680 = vpop.f32.mrf.mxu0
  %681 = vmatprep.mubr.f32.mxu0 0.0
  %682 = vmatmul.mubr.f32.gmra.mxu0 %v610
  %v683 = vpop.f32.mrf.mxu0
  %v684 = vadd.f32 %v605, %v683
  %v685 = vpop.f32.mrf.mxu0
  %686 = vdwg.mxu0
  %v687 = vadd.f32 %v35, %v679
  %v688 = vadd.f32 %v36, %v684
  %v689 = vsel %vm45, %v687, 0.0
  %690 = vadd.xlane.f32.xlu0 %v689
  %v691 = vpop.xlane.xlu0 %690
  %v692 = vsel %vm45, %v688, 0.0
  %693 = vadd.xlane.f32.xlu0 %v692
  %v694 = vpop.xlane.xlu0 %693
  %v695 = vmul.f32 %v691, %v52
  %v696 = vmul.f32 %v694, %v52
  %v697 = vsub.f32 %v687, %v695
  %v698 = vsub.f32 %v688, %v696
  %v699 = vmul.f32 %v697, %v697
  %v700 = vmul.f32 %v698, %v698
  %v701 = vsel %vm45, %v699, 0.0
  %702 = vadd.xlane.f32.xlu0 %v701
  %v703 = vpop.xlane.xlu0 %702
  %v704 = vsel %vm45, %v700, 0.0
  %705 = vadd.xlane.f32.xlu0 %v704
  %v706 = vpop.xlane.xlu0 %705
  %v707 = vmul.f32 %v703, 0.032258064
  %v708 = vmul.f32 %v706, 0.032258064
  %v709 = vrsqrt.pop %v707
  %v710 = vmul.f32 %v707, %v709
  %vm711 = vcmp.eq.f32.partialorder %v707, inf
  %v712 = vsel %vm711, %v707, %v710
  %vm713 = vcmp.eq.f32.partialorder %v707, 0.0
  %v714 = vand.u32 %v707, 2147483648
  %v715 = vsel %vm713, %v714, %v712
  %v716 = vrsqrt.pop %v708
  %v717 = vmul.f32 %v708, %v716
  %vm718 = vcmp.eq.f32.partialorder %v708, inf
  %v719 = vsel %vm718, %v708, %v717
  %vm720 = vcmp.eq.f32.partialorder %v708, 0.0
  %v721 = vand.u32 %v708, 2147483648
  %v722 = vsel %vm720, %v721, %v719
  %v723 = vadd.f32 %v715, 1e-06
  %v724 = vadd.f32 %v722, 1e-06
  %v725 = vrcp.pop %v723
  %v726 = vrcp.pop %v724
  %v727 = vlaneseq
  %v728 = vshrl.u32 %v727, 7
  %v729 = vsub.s32 5, %v728
  %v730 = vrot.slane %v43, %v729
  %v731 = vmul.f32 %v730, %v697
  %v732 = vmul.f32 %v730, %v698
  %v733 = vmul.f32 %v731, %v725
  %v734 = vmul.f32 %v732, %v726
  %v735 = vlaneseq
  %v736 = vshrl.u32 %v735, 7
  %v737 = vsub.s32 6, %v736
  %v738 = vrot.slane %v43, %v737
  %v739 = vadd.f32 %v733, %v738
  %v740 = vadd.f32 %v734, %v738
  %s741 = scalar_lea.vmem %s4, 96
  %v742 = vld [vmem:[%s741] sm:$0xff]
  %v743 = vld [vmem:[%s741 + $0x8] sm:$0xff]
  %v744 = vld [vmem:[%s741 + $0x10] sm:$0xff]
  %v745 = vld [vmem:[%s741 + $0x18] sm:$0xff]
  %s746 = scalar_lea.vmem %s4, 128
  %v747 = vld [vmem:[%s746] sm:$0xff]
  %v748 = vld [vmem:[%s746 + $0x8] sm:$0xff]
  %v749 = vld [vmem:[%s746 + $0x10] sm:$0xff]
  %v750 = vld [vmem:[%s746 + $0x18] sm:$0xff]
  %s751 = scalar_lea.vmem %s4, 160
  %v752 = vld [vmem:[%s751] sm:$0xff]
  %v753 = vld [vmem:[%s751 + $0x8] sm:$0xff]
  %v754 = vld [vmem:[%s751 + $0x10] sm:$0xff]
  %v755 = vld [vmem:[%s751 + $0x18] sm:$0xff]
  %v756 = vlaneseq
  %v757 = vshrl.u32 %v756, 7
  %v758 = vsub.s32 7, %v757
  %v759 = vrot.slane %v43, %v758
  %v761 = vsel %vm45, %v739, 0
  %v764 = vsel %vm45, %v740, 0
  %766 = vmatprep.subr.mxu0 0.0
  %767 = vmatpush1.msra.mxu0 0.0
  %768 = vmatprep.subr.mxu0 0.0
  %769 = vmatpush1.msra.mxu0 0.0
  %770 = vmatprep.subr.mxu0 0.0
  %771 = vmatpush1.msra.mxu0 0.0
  %772 = vmatprep.subr.mxu0 0.0
  %773 = vmatpush1.msra.mxu0 0.0
  %774 = vmatprep.subr.mxu0 0.0
  %775 = vmatpush1.msra.mxu0 0.0
  %776 = vmatprep.subr.mxu0 0.0
  %777 = vmatpush1.msra.mxu0 0.0
  %778 = vmatprep.subr.mxu0 0.0
  %779 = vmatpush1.msra.mxu0 0.0
  %780 = vmatprep.subr.mxu0 0.0
  %781 = vmatpush1.msra.mxu0 0.0
  %782 = vmatprep.subr.mxu0 0.0
  %783 = vmatpush1.msra.mxu0 0.0
  %784 = vmatprep.subr.mxu0 0.0
  %785 = vmatpush1.msra.mxu0 0.0
  %786 = vmatprep.subr.mxu0 0.0
  %787 = vmatpush1.msra.mxu0 0.0
  %788 = vmatprep.subr.mxu0 0.0
  %789 = vmatpush1.msra.mxu0 0.0
  %790 = vmatprep.subr.mxu0 0.0
  %791 = vmatpush1.msra.mxu0 %v745
  %792 = vmatprep.subr.mxu0 0.0
  %793 = vmatpush1.msra.mxu0 %v744
  %794 = vmatprep.subr.mxu0 0.0
  %795 = vmatpush1.msra.mxu0 %v743
  %796 = vmatprep.subr.mxu0 0.0
  %797 = vmatpush1.msra.mxu0 %v742
  %798 = vmatprep.subr.mxu0 0.0
  %799 = vmatpush2.msra.mxu0 0.0
  %800 = vmatprep.subr.mxu0 0.0
  %801 = vmatpush2.msra.mxu0 0.0
  %802 = vmatprep.subr.mxu0 0.0
  %803 = vmatpush2.msra.mxu0 0.0
  %804 = vmatprep.subr.mxu0 0.0
  %805 = vmatpush2.msra.mxu0 0.0
  %806 = vmatprep.subr.mxu0 0.0
  %807 = vmatpush2.msra.mxu0 0.0
  %808 = vmatprep.subr.mxu0 0.0
  %809 = vmatpush2.msra.mxu0 0.0
  %810 = vmatprep.subr.mxu0 0.0
  %811 = vmatpush2.msra.mxu0 0.0
  %812 = vmatprep.subr.mxu0 0.0
  %813 = vmatpush2.msra.mxu0 0.0
  %814 = vmatprep.subr.mxu0 0.0
  %815 = vmatpush2.msra.mxu0 0.0
  %816 = vmatprep.subr.mxu0 0.0
  %817 = vmatpush2.msra.mxu0 0.0
  %818 = vmatprep.subr.mxu0 0.0
  %819 = vmatpush2.msra.mxu0 0.0
  %820 = vmatprep.subr.mxu0 0.0
  %821 = vmatpush2.msra.mxu0 0.0
  %822 = vmatprep.subr.mxu0 0.0
  %823 = vmatpush2.msra.mxu0 0.0
  %824 = vmatprep.subr.mxu0 0.0
  %825 = vmatpush2.msra.mxu0 0.0
  %826 = vmatprep.subr.mxu0 0.0
  %827 = vmatpush2.msra.mxu0 0.0
  %828 = vmatprep.subr.mxu0 0.0
  %829 = vmatpush2.msra.mxu0 0.0
  %830 = vmatprep.mubr.f32.mxu0 0.0
  %831 = vmatmul.mubr.f32.gmra.mxu0 %v761
  %v832 = vpop.f32.mrf.mxu0
  %v833 = vadd.f32 %v759, %v832
  %v834 = vpop.f32.mrf.mxu0
  %835 = vmatprep.mubr.f32.mxu0 0.0
  %836 = vmatmul.mubr.f32.gmra.mxu0 %v764
  %v837 = vpop.f32.mrf.mxu0
  %v838 = vadd.f32 %v759, %v837
  %v839 = vpop.f32.mrf.mxu0
  %840 = vdwg.mxu0
  %v841 = vlaneseq
  %v842 = vshrl.u32 %v841, 7
  %v843 = vsub.s32 0, %v842
  %v844 = vrot.slane %v44, %v843
  %v846 = vsel %vm45, %v37, 0
  %v849 = vsel %vm45, %v38, 0
  %851 = vmatprep.subr.mxu0 0.0
  %852 = vmatpush1.msra.mxu0 0.0
  %853 = vmatprep.subr.mxu0 0.0
  %854 = vmatpush1.msra.mxu0 0.0
  %855 = vmatprep.subr.mxu0 0.0
  %856 = vmatpush1.msra.mxu0 0.0
  %857 = vmatprep.subr.mxu0 0.0
  %858 = vmatpush1.msra.mxu0 0.0
  %859 = vmatprep.subr.mxu0 0.0
  %860 = vmatpush1.msra.mxu0 0.0
  %861 = vmatprep.subr.mxu0 0.0
  %862 = vmatpush1.msra.mxu0 0.0
  %863 = vmatprep.subr.mxu0 0.0
  %864 = vmatpush1.msra.mxu0 0.0
  %865 = vmatprep.subr.mxu0 0.0
  %866 = vmatpush1.msra.mxu0 0.0
  %867 = vmatprep.subr.mxu0 0.0
  %868 = vmatpush1.msra.mxu0 0.0
  %869 = vmatprep.subr.mxu0 0.0
  %870 = vmatpush1.msra.mxu0 0.0
  %871 = vmatprep.subr.mxu0 0.0
  %872 = vmatpush1.msra.mxu0 0.0
  %873 = vmatprep.subr.mxu0 0.0
  %874 = vmatpush1.msra.mxu0 0.0
  %875 = vmatprep.subr.mxu0 0.0
  %876 = vmatpush1.msra.mxu0 %v750
  %877 = vmatprep.subr.mxu0 0.0
  %878 = vmatpush1.msra.mxu0 %v749
  %879 = vmatprep.subr.mxu0 0.0
  %880 = vmatpush1.msra.mxu0 %v748
  %881 = vmatprep.subr.mxu0 0.0
  %882 = vmatpush1.msra.mxu0 %v747
  %883 = vmatprep.subr.mxu0 0.0
  %884 = vmatpush2.msra.mxu0 0.0
  %885 = vmatprep.subr.mxu0 0.0
  %886 = vmatpush2.msra.mxu0 0.0
  %887 = vmatprep.subr.mxu0 0.0
  %888 = vmatpush2.msra.mxu0 0.0
  %889 = vmatprep.subr.mxu0 0.0
  %890 = vmatpush2.msra.mxu0 0.0
  %891 = vmatprep.subr.mxu0 0.0
  %892 = vmatpush2.msra.mxu0 0.0
  %893 = vmatprep.subr.mxu0 0.0
  %894 = vmatpush2.msra.mxu0 0.0
  %895 = vmatprep.subr.mxu0 0.0
  %896 = vmatpush2.msra.mxu0 0.0
  %897 = vmatprep.subr.mxu0 0.0
  %898 = vmatpush2.msra.mxu0 0.0
  %899 = vmatprep.subr.mxu0 0.0
  %900 = vmatpush2.msra.mxu0 0.0
  %901 = vmatprep.subr.mxu0 0.0
  %902 = vmatpush2.msra.mxu0 0.0
  %903 = vmatprep.subr.mxu0 0.0
  %904 = vmatpush2.msra.mxu0 0.0
  %905 = vmatprep.subr.mxu0 0.0
  %906 = vmatpush2.msra.mxu0 0.0
  %907 = vmatprep.subr.mxu0 0.0
  %908 = vmatpush2.msra.mxu0 0.0
  %909 = vmatprep.subr.mxu0 0.0
  %910 = vmatpush2.msra.mxu0 0.0
  %911 = vmatprep.subr.mxu0 0.0
  %912 = vmatpush2.msra.mxu0 0.0
  %913 = vmatprep.subr.mxu0 0.0
  %914 = vmatpush2.msra.mxu0 0.0
  %915 = vmatprep.mubr.f32.mxu0 0.0
  %916 = vmatmul.mubr.f32.gmra.mxu0 %v846
  %v917 = vpop.f32.mrf.mxu0
  %v918 = vadd.f32 %v844, %v917
  %v919 = vpop.f32.mrf.mxu0
  %920 = vmatprep.mubr.f32.mxu0 0.0
  %921 = vmatmul.mubr.f32.gmra.mxu0 %v849
  %v922 = vpop.f32.mrf.mxu0
  %v923 = vadd.f32 %v844, %v922
  %v924 = vpop.f32.mrf.mxu0
  %925 = vdwg.mxu0
  %v927 = vsel %vm45, %v833, 0
  %v930 = vsel %vm45, %v918, 0
  %932 = vmatprep.subr.mxu0 0.0
  %933 = vmatpush1.xpose.msra.mxu0 0.0
  %934 = vmatprep.subr.mxu0 0.0
  %935 = vmatpush1.xpose.msra.mxu0 0.0
  %936 = vmatprep.subr.mxu0 0.0
  %937 = vmatpush1.xpose.msra.mxu0 0.0
  %938 = vmatprep.subr.mxu0 0.0
  %939 = vmatpush1.xpose.msra.mxu0 0.0
  %940 = vmatprep.subr.mxu0 0.0
  %941 = vmatpush1.xpose.msra.mxu0 0.0
  %942 = vmatprep.subr.mxu0 0.0
  %943 = vmatpush1.xpose.msra.mxu0 0.0
  %944 = vmatprep.subr.mxu0 0.0
  %945 = vmatpush1.xpose.msra.mxu0 0.0
  %946 = vmatprep.subr.mxu0 0.0
  %947 = vmatpush1.xpose.msra.mxu0 0.0
  %948 = vmatprep.subr.mxu0 0.0
  %949 = vmatpush1.xpose.msra.mxu0 0.0
  %950 = vmatprep.subr.mxu0 0.0
  %951 = vmatpush1.xpose.msra.mxu0 0.0
  %952 = vmatprep.subr.mxu0 0.0
  %953 = vmatpush1.xpose.msra.mxu0 0.0
  %954 = vmatprep.subr.mxu0 0.0
  %955 = vmatpush1.xpose.msra.mxu0 0.0
  %956 = vmatprep.subr.mxu0 0.0
  %957 = vmatpush1.xpose.msra.mxu0 0.0
  %958 = vmatprep.subr.mxu0 0.0
  %959 = vmatpush1.xpose.msra.mxu0 0.0
  %960 = vmatprep.subr.mxu0 0.0
  %961 = vmatpush1.xpose.msra.mxu0 0.0
  %962 = vmatprep.subr.mxu0 0.0
  %963 = vmatpush1.xpose.msra.mxu0 %v930
  %964 = vmatprep.subr.mxu0 0.0
  %965 = vmatpush2.xpose.msra.mxu0 0.0
  %966 = vmatprep.subr.mxu0 0.0
  %967 = vmatpush2.xpose.msra.mxu0 0.0
  %968 = vmatprep.subr.mxu0 0.0
  %969 = vmatpush2.xpose.msra.mxu0 0.0
  %970 = vmatprep.subr.mxu0 0.0
  %971 = vmatpush2.xpose.msra.mxu0 0.0
  %972 = vmatprep.subr.mxu0 0.0
  %973 = vmatpush2.xpose.msra.mxu0 0.0
  %974 = vmatprep.subr.mxu0 0.0
  %975 = vmatpush2.xpose.msra.mxu0 0.0
  %976 = vmatprep.subr.mxu0 0.0
  %977 = vmatpush2.xpose.msra.mxu0 0.0
  %978 = vmatprep.subr.mxu0 0.0
  %979 = vmatpush2.xpose.msra.mxu0 0.0
  %980 = vmatprep.subr.mxu0 0.0
  %981 = vmatpush2.xpose.msra.mxu0 0.0
  %982 = vmatprep.subr.mxu0 0.0
  %983 = vmatpush2.xpose.msra.mxu0 0.0
  %984 = vmatprep.subr.mxu0 0.0
  %985 = vmatpush2.xpose.msra.mxu0 0.0
  %986 = vmatprep.subr.mxu0 0.0
  %987 = vmatpush2.xpose.msra.mxu0 0.0
  %988 = vmatprep.subr.mxu0 0.0
  %989 = vmatpush2.xpose.msra.mxu0 0.0
  %990 = vmatprep.subr.mxu0 0.0
  %991 = vmatpush2.xpose.msra.mxu0 0.0
  %992 = vmatprep.subr.mxu0 0.0
  %993 = vmatpush2.xpose.msra.mxu0 0.0
  %994 = vmatprep.subr.mxu0 0.0
  %995 = vmatpush2.xpose.msra.mxu0 0.0
  %996 = vmatprep.mubr.f32.mxu0 0.0
  %997 = vmatmul.mubr.f32.gmra.mxu0 %v927
  %v998 = vpop.f32.mrf.mxu0
  %v999 = vadd.f32 0.0, %v998
  %v1000 = vpop.f32.mrf.mxu0
  %1001 = vdwg.mxu0
  %v1003 = vsel %vm45, %v838, 0
  %v1006 = vsel %vm45, %v923, 0
  %1008 = vmatprep.subr.mxu0 0.0
  %1009 = vmatpush1.xpose.msra.mxu0 0.0
  %1010 = vmatprep.subr.mxu0 0.0
  %1011 = vmatpush1.xpose.msra.mxu0 0.0
  %1012 = vmatprep.subr.mxu0 0.0
  %1013 = vmatpush1.xpose.msra.mxu0 0.0
  %1014 = vmatprep.subr.mxu0 0.0
  %1015 = vmatpush1.xpose.msra.mxu0 0.0
  %1016 = vmatprep.subr.mxu0 0.0
  %1017 = vmatpush1.xpose.msra.mxu0 0.0
  %1018 = vmatprep.subr.mxu0 0.0
  %1019 = vmatpush1.xpose.msra.mxu0 0.0
  %1020 = vmatprep.subr.mxu0 0.0
  %1021 = vmatpush1.xpose.msra.mxu0 0.0
  %1022 = vmatprep.subr.mxu0 0.0
  %1023 = vmatpush1.xpose.msra.mxu0 0.0
  %1024 = vmatprep.subr.mxu0 0.0
  %1025 = vmatpush1.xpose.msra.mxu0 0.0
  %1026 = vmatprep.subr.mxu0 0.0
  %1027 = vmatpush1.xpose.msra.mxu0 0.0
  %1028 = vmatprep.subr.mxu0 0.0
  %1029 = vmatpush1.xpose.msra.mxu0 0.0
  %1030 = vmatprep.subr.mxu0 0.0
  %1031 = vmatpush1.xpose.msra.mxu0 0.0
  %1032 = vmatprep.subr.mxu0 0.0
  %1033 = vmatpush1.xpose.msra.mxu0 0.0
  %1034 = vmatprep.subr.mxu0 0.0
  %1035 = vmatpush1.xpose.msra.mxu0 0.0
  %1036 = vmatprep.subr.mxu0 0.0
  %1037 = vmatpush1.xpose.msra.mxu0 0.0
  %1038 = vmatprep.subr.mxu0 0.0
  %1039 = vmatpush1.xpose.msra.mxu0 %v1006
  %1040 = vmatprep.subr.mxu0 0.0
  %1041 = vmatpush2.xpose.msra.mxu0 0.0
  %1042 = vmatprep.subr.mxu0 0.0
  %1043 = vmatpush2.xpose.msra.mxu0 0.0
  %1044 = vmatprep.subr.mxu0 0.0
  %1045 = vmatpush2.xpose.msra.mxu0 0.0
  %1046 = vmatprep.subr.mxu0 0.0
  %1047 = vmatpush2.xpose.msra.mxu0 0.0
  %1048 = vmatprep.subr.mxu0 0.0
  %1049 = vmatpush2.xpose.msra.mxu0 0.0
  %1050 = vmatprep.subr.mxu0 0.0
  %1051 = vmatpush2.xpose.msra.mxu0 0.0
  %1052 = vmatprep.subr.mxu0 0.0
  %1053 = vmatpush2.xpose.msra.mxu0 0.0
  %1054 = vmatprep.subr.mxu0 0.0
  %1055 = vmatpush2.xpose.msra.mxu0 0.0
  %1056 = vmatprep.subr.mxu0 0.0
  %1057 = vmatpush2.xpose.msra.mxu0 0.0
  %1058 = vmatprep.subr.mxu0 0.0
  %1059 = vmatpush2.xpose.msra.mxu0 0.0
  %1060 = vmatprep.subr.mxu0 0.0
  %1061 = vmatpush2.xpose.msra.mxu0 0.0
  %1062 = vmatprep.subr.mxu0 0.0
  %1063 = vmatpush2.xpose.msra.mxu0 0.0
  %1064 = vmatprep.subr.mxu0 0.0
  %1065 = vmatpush2.xpose.msra.mxu0 0.0
  %1066 = vmatprep.subr.mxu0 0.0
  %1067 = vmatpush2.xpose.msra.mxu0 0.0
  %1068 = vmatprep.subr.mxu0 0.0
  %1069 = vmatpush2.xpose.msra.mxu0 0.0
  %1070 = vmatprep.subr.mxu0 0.0
  %1071 = vmatpush2.xpose.msra.mxu0 0.0
  %1072 = vmatprep.mubr.f32.mxu0 0.0
  %1073 = vmatmul.mubr.f32.gmra.mxu0 %v1003
  %v1074 = vpop.f32.mrf.mxu0
  %v1075 = vadd.f32 0.0, %v1074
  %v1076 = vpop.f32.mrf.mxu0
  %1077 = vdwg.mxu0
  %v1078 = vmul.f32 %v999, 0.17677669
  %v1079 = vmul.f32 %v1075, 0.17677669
  %v1080 = vadd.f32 %v1078, %v41
  %v1081 = vadd.f32 %v1079, %v42
  %v1082 = vsel %vm433, %v1080, -inf
  %1083 = vmax.xlane.f32.xlu0 %v1082
  %v1084 = vpop.xlane.xlu0 %1083
  %v1085 = vsel %vm433, %v1081, -inf
  %1086 = vmax.xlane.f32.xlu0 %v1085
  %v1087 = vpop.xlane.xlu0 %1086
  %v1088 = vsub.f32 %v1080, %v1084
  %v1089 = vsub.f32 %v1081, %v1087
  %v1090 = vmul.f32 %v1088, 1.442695
  %v1091 = vpow.pop %v1090
  %v1092 = vmul.f32 %v1089, 1.442695
  %v1093 = vpow.pop %v1092
  %v1094 = vsel %vm433, %v1091, 0.0
  %1095 = vadd.xlane.f32.xlu0 %v1094
  %v1096 = vpop.xlane.xlu0 %1095
  %v1097 = vsel %vm433, %v1093, 0.0
  %1098 = vadd.xlane.f32.xlu0 %v1097
  %v1099 = vpop.xlane.xlu0 %1098
  %v1100 = vrcp.pop %v1096
  %v1101 = vrcp.pop %v1099
  %v1102 = vmul.f32 %v1091, %v1100
  %v1103 = vmul.f32 %v1093, %v1101
  %v1105 = vsel %vm433, %v1102, 0
  %1107 = vmatprep.subr.mxu0 0.0
  %1108 = vmatpush1.msra.mxu0 0.0
  %1109 = vmatprep.subr.mxu0 0.0
  %1110 = vmatpush1.msra.mxu0 0.0
  %1111 = vmatprep.subr.mxu0 0.0
  %1112 = vmatpush1.msra.mxu0 0.0
  %1113 = vmatprep.subr.mxu0 0.0
  %1114 = vmatpush1.msra.mxu0 0.0
  %1115 = vmatprep.subr.mxu0 0.0
  %1116 = vmatpush1.msra.mxu0 0.0
  %1117 = vmatprep.subr.mxu0 0.0
  %1118 = vmatpush1.msra.mxu0 0.0
  %1119 = vmatprep.subr.mxu0 0.0
  %1120 = vmatpush1.msra.mxu0 0.0
  %1121 = vmatprep.subr.mxu0 0.0
  %1122 = vmatpush1.msra.mxu0 0.0
  %1123 = vmatprep.subr.mxu0 0.0
  %1124 = vmatpush1.msra.mxu0 0.0
  %1125 = vmatprep.subr.mxu0 0.0
  %1126 = vmatpush1.msra.mxu0 0.0
  %1127 = vmatprep.subr.mxu0 0.0
  %1128 = vmatpush1.msra.mxu0 0.0
  %1129 = vmatprep.subr.mxu0 0.0
  %1130 = vmatpush1.msra.mxu0 0.0
  %1131 = vmatprep.subr.mxu0 0.0
  %1132 = vmatpush1.msra.mxu0 0.0
  %1133 = vmatprep.subr.mxu0 0.0
  %1134 = vmatpush1.msra.mxu0 0.0
  %1135 = vmatprep.subr.mxu0 0.0
  %1136 = vmatpush1.msra.mxu0 0.0
  %1137 = vmatprep.subr.mxu0 0.0
  %1138 = vmatpush1.msra.mxu0 %v37
  %1139 = vmatprep.subr.mxu0 0.0
  %1140 = vmatpush2.msra.mxu0 0.0
  %1141 = vmatprep.subr.mxu0 0.0
  %1142 = vmatpush2.msra.mxu0 0.0
  %1143 = vmatprep.subr.mxu0 0.0
  %1144 = vmatpush2.msra.mxu0 0.0
  %1145 = vmatprep.subr.mxu0 0.0
  %1146 = vmatpush2.msra.mxu0 0.0
  %1147 = vmatprep.subr.mxu0 0.0
  %1148 = vmatpush2.msra.mxu0 0.0
  %1149 = vmatprep.subr.mxu0 0.0
  %1150 = vmatpush2.msra.mxu0 0.0
  %1151 = vmatprep.subr.mxu0 0.0
  %1152 = vmatpush2.msra.mxu0 0.0
  %1153 = vmatprep.subr.mxu0 0.0
  %1154 = vmatpush2.msra.mxu0 0.0
  %1155 = vmatprep.subr.mxu0 0.0
  %1156 = vmatpush2.msra.mxu0 0.0
  %1157 = vmatprep.subr.mxu0 0.0
  %1158 = vmatpush2.msra.mxu0 0.0
  %1159 = vmatprep.subr.mxu0 0.0
  %1160 = vmatpush2.msra.mxu0 0.0
  %1161 = vmatprep.subr.mxu0 0.0
  %1162 = vmatpush2.msra.mxu0 0.0
  %1163 = vmatprep.subr.mxu0 0.0
  %1164 = vmatpush2.msra.mxu0 0.0
  %1165 = vmatprep.subr.mxu0 0.0
  %1166 = vmatpush2.msra.mxu0 0.0
  %1167 = vmatprep.subr.mxu0 0.0
  %1168 = vmatpush2.msra.mxu0 0.0
  %1169 = vmatprep.subr.mxu0 0.0
  %1170 = vmatpush2.msra.mxu0 0.0
  %1171 = vmatprep.mubr.f32.mxu0 0.0
  %1172 = vmatmul.mubr.f32.gmra.mxu0 %v1105
  %v1173 = vpop.f32.mrf.mxu0
  %v1174 = vadd.f32 0.0, %v1173
  %v1175 = vpop.f32.mrf.mxu0
  %1176 = vdwg.mxu0
  %v1178 = vsel %vm433, %v1103, 0
  %1180 = vmatprep.subr.mxu0 0.0
  %1181 = vmatpush1.msra.mxu0 0.0
  %1182 = vmatprep.subr.mxu0 0.0
  %1183 = vmatpush1.msra.mxu0 0.0
  %1184 = vmatprep.subr.mxu0 0.0
  %1185 = vmatpush1.msra.mxu0 0.0
  %1186 = vmatprep.subr.mxu0 0.0
  %1187 = vmatpush1.msra.mxu0 0.0
  %1188 = vmatprep.subr.mxu0 0.0
  %1189 = vmatpush1.msra.mxu0 0.0
  %1190 = vmatprep.subr.mxu0 0.0
  %1191 = vmatpush1.msra.mxu0 0.0
  %1192 = vmatprep.subr.mxu0 0.0
  %1193 = vmatpush1.msra.mxu0 0.0
  %1194 = vmatprep.subr.mxu0 0.0
  %1195 = vmatpush1.msra.mxu0 0.0
  %1196 = vmatprep.subr.mxu0 0.0
  %1197 = vmatpush1.msra.mxu0 0.0
  %1198 = vmatprep.subr.mxu0 0.0
  %1199 = vmatpush1.msra.mxu0 0.0
  %1200 = vmatprep.subr.mxu0 0.0
  %1201 = vmatpush1.msra.mxu0 0.0
  %1202 = vmatprep.subr.mxu0 0.0
  %1203 = vmatpush1.msra.mxu0 0.0
  %1204 = vmatprep.subr.mxu0 0.0
  %1205 = vmatpush1.msra.mxu0 0.0
  %1206 = vmatprep.subr.mxu0 0.0
  %1207 = vmatpush1.msra.mxu0 0.0
  %1208 = vmatprep.subr.mxu0 0.0
  %1209 = vmatpush1.msra.mxu0 0.0
  %1210 = vmatprep.subr.mxu0 0.0
  %1211 = vmatpush1.msra.mxu0 %v38
  %1212 = vmatprep.subr.mxu0 0.0
  %1213 = vmatpush2.msra.mxu0 0.0
  %1214 = vmatprep.subr.mxu0 0.0
  %1215 = vmatpush2.msra.mxu0 0.0
  %1216 = vmatprep.subr.mxu0 0.0
  %1217 = vmatpush2.msra.mxu0 0.0
  %1218 = vmatprep.subr.mxu0 0.0
  %1219 = vmatpush2.msra.mxu0 0.0
  %1220 = vmatprep.subr.mxu0 0.0
  %1221 = vmatpush2.msra.mxu0 0.0
  %1222 = vmatprep.subr.mxu0 0.0
  %1223 = vmatpush2.msra.mxu0 0.0
  %1224 = vmatprep.subr.mxu0 0.0
  %1225 = vmatpush2.msra.mxu0 0.0
  %1226 = vmatprep.subr.mxu0 0.0
  %1227 = vmatpush2.msra.mxu0 0.0
  %1228 = vmatprep.subr.mxu0 0.0
  %1229 = vmatpush2.msra.mxu0 0.0
  %1230 = vmatprep.subr.mxu0 0.0
  %1231 = vmatpush2.msra.mxu0 0.0
  %1232 = vmatprep.subr.mxu0 0.0
  %1233 = vmatpush2.msra.mxu0 0.0
  %1234 = vmatprep.subr.mxu0 0.0
  %1235 = vmatpush2.msra.mxu0 0.0
  %1236 = vmatprep.subr.mxu0 0.0
  %1237 = vmatpush2.msra.mxu0 0.0
  %1238 = vmatprep.subr.mxu0 0.0
  %1239 = vmatpush2.msra.mxu0 0.0
  %1240 = vmatprep.subr.mxu0 0.0
  %1241 = vmatpush2.msra.mxu0 0.0
  %1242 = vmatprep.subr.mxu0 0.0
  %1243 = vmatpush2.msra.mxu0 0.0
  %1244 = vmatprep.mubr.f32.mxu0 0.0
  %1245 = vmatmul.mubr.f32.gmra.mxu0 %v1178
  %v1246 = vpop.f32.mrf.mxu0
  %v1247 = vadd.f32 0.0, %v1246
  %v1248 = vpop.f32.mrf.mxu0
  %1249 = vdwg.mxu0
  %v1250 = vlaneseq
  %v1251 = vshrl.u32 %v1250, 7
  %v1252 = vsub.s32 1, %v1251
  %v1253 = vrot.slane %v44, %v1252
  %v1255 = vsel %vm45, %v1174, 0
  %v1258 = vsel %vm45, %v1247, 0
  %1260 = vmatprep.subr.mxu0 0.0
  %1261 = vmatpush1.msra.mxu0 0.0
  %1262 = vmatprep.subr.mxu0 0.0
  %1263 = vmatpush1.msra.mxu0 0.0
  %1264 = vmatprep.subr.mxu0 0.0
  %1265 = vmatpush1.msra.mxu0 0.0
  %1266 = vmatprep.subr.mxu0 0.0
  %1267 = vmatpush1.msra.mxu0 0.0
  %1268 = vmatprep.subr.mxu0 0.0
  %1269 = vmatpush1.msra.mxu0 0.0
  %1270 = vmatprep.subr.mxu0 0.0
  %1271 = vmatpush1.msra.mxu0 0.0
  %1272 = vmatprep.subr.mxu0 0.0
  %1273 = vmatpush1.msra.mxu0 0.0
  %1274 = vmatprep.subr.mxu0 0.0
  %1275 = vmatpush1.msra.mxu0 0.0
  %1276 = vmatprep.subr.mxu0 0.0
  %1277 = vmatpush1.msra.mxu0 0.0
  %1278 = vmatprep.subr.mxu0 0.0
  %1279 = vmatpush1.msra.mxu0 0.0
  %1280 = vmatprep.subr.mxu0 0.0
  %1281 = vmatpush1.msra.mxu0 0.0
  %1282 = vmatprep.subr.mxu0 0.0
  %1283 = vmatpush1.msra.mxu0 0.0
  %1284 = vmatprep.subr.mxu0 0.0
  %1285 = vmatpush1.msra.mxu0 %v755
  %1286 = vmatprep.subr.mxu0 0.0
  %1287 = vmatpush1.msra.mxu0 %v754
  %1288 = vmatprep.subr.mxu0 0.0
  %1289 = vmatpush1.msra.mxu0 %v753
  %1290 = vmatprep.subr.mxu0 0.0
  %1291 = vmatpush1.msra.mxu0 %v752
  %1292 = vmatprep.subr.mxu0 0.0
  %1293 = vmatpush2.msra.mxu0 0.0
  %1294 = vmatprep.subr.mxu0 0.0
  %1295 = vmatpush2.msra.mxu0 0.0
  %1296 = vmatprep.subr.mxu0 0.0
  %1297 = vmatpush2.msra.mxu0 0.0
  %1298 = vmatprep.subr.mxu0 0.0
  %1299 = vmatpush2.msra.mxu0 0.0
  %1300 = vmatprep.subr.mxu0 0.0
  %1301 = vmatpush2.msra.mxu0 0.0
  %1302 = vmatprep.subr.mxu0 0.0
  %1303 = vmatpush2.msra.mxu0 0.0
  %1304 = vmatprep.subr.mxu0 0.0
  %1305 = vmatpush2.msra.mxu0 0.0
  %1306 = vmatprep.subr.mxu0 0.0
  %1307 = vmatpush2.msra.mxu0 0.0
  %1308 = vmatprep.subr.mxu0 0.0
  %1309 = vmatpush2.msra.mxu0 0.0
  %1310 = vmatprep.subr.mxu0 0.0
  %1311 = vmatpush2.msra.mxu0 0.0
  %1312 = vmatprep.subr.mxu0 0.0
  %1313 = vmatpush2.msra.mxu0 0.0
  %1314 = vmatprep.subr.mxu0 0.0
  %1315 = vmatpush2.msra.mxu0 0.0
  %1316 = vmatprep.subr.mxu0 0.0
  %1317 = vmatpush2.msra.mxu0 0.0
  %1318 = vmatprep.subr.mxu0 0.0
  %1319 = vmatpush2.msra.mxu0 0.0
  %1320 = vmatprep.subr.mxu0 0.0
  %1321 = vmatpush2.msra.mxu0 0.0
  %1322 = vmatprep.subr.mxu0 0.0
  %1323 = vmatpush2.msra.mxu0 0.0
  %1324 = vmatprep.mubr.f32.mxu0 0.0
  %1325 = vmatmul.mubr.f32.gmra.mxu0 %v1255
  %v1326 = vpop.f32.mrf.mxu0
  %v1327 = vadd.f32 %v1253, %v1326
  %v1328 = vpop.f32.mrf.mxu0
  %1329 = vmatprep.mubr.f32.mxu0 0.0
  %1330 = vmatmul.mubr.f32.gmra.mxu0 %v1258
  %v1331 = vpop.f32.mrf.mxu0
  %v1332 = vadd.f32 %v1253, %v1331
  %v1333 = vpop.f32.mrf.mxu0
  %1334 = vdwg.mxu0
  %v1335 = vadd.f32 %v687, %v1327
  %v1336 = vadd.f32 %v688, %v1332
  %v1337 = vsel %vm45, %v1335, 0.0
  %1338 = vadd.xlane.f32.xlu0 %v1337
  %v1339 = vpop.xlane.xlu0 %1338
  %v1340 = vsel %vm45, %v1336, 0.0
  %1341 = vadd.xlane.f32.xlu0 %v1340
  %v1342 = vpop.xlane.xlu0 %1341
  %v1343 = vmul.f32 %v1339, %v52
  %v1344 = vmul.f32 %v1342, %v52
  %v1345 = vsub.f32 %v1335, %v1343
  %v1346 = vsub.f32 %v1336, %v1344
  %v1347 = vmul.f32 %v1345, %v1345
  %v1348 = vmul.f32 %v1346, %v1346
  %v1349 = vsel %vm45, %v1347, 0.0
  %1350 = vadd.xlane.f32.xlu0 %v1349
  %v1351 = vpop.xlane.xlu0 %1350
  %v1352 = vsel %vm45, %v1348, 0.0
  %1353 = vadd.xlane.f32.xlu0 %v1352
  %v1354 = vpop.xlane.xlu0 %1353
  %v1355 = vmul.f32 %v1351, 0.032258064
  %v1356 = vmul.f32 %v1354, 0.032258064
  %v1357 = vrsqrt.pop %v1355
  %v1358 = vmul.f32 %v1355, %v1357
  %vm1359 = vcmp.eq.f32.partialorder %v1355, inf
  %v1360 = vsel %vm1359, %v1355, %v1358
  %vm1361 = vcmp.eq.f32.partialorder %v1355, 0.0
  %v1362 = vand.u32 %v1355, 2147483648
  %v1363 = vsel %vm1361, %v1362, %v1360
  %v1364 = vrsqrt.pop %v1356
  %v1365 = vmul.f32 %v1356, %v1364
  %vm1366 = vcmp.eq.f32.partialorder %v1356, inf
  %v1367 = vsel %vm1366, %v1356, %v1365
  %vm1368 = vcmp.eq.f32.partialorder %v1356, 0.0
  %v1369 = vand.u32 %v1356, 2147483648
  %v1370 = vsel %vm1368, %v1369, %v1367
  %v1371 = vadd.f32 %v1363, 1e-06
  %v1372 = vadd.f32 %v1370, 1e-06
  %v1373 = vrcp.pop %v1371
  %v1374 = vrcp.pop %v1372
  %v1375 = vlaneseq
  %v1376 = vshrl.u32 %v1375, 7
  %v1377 = vsub.s32 2, %v1376
  %v1378 = vrot.slane %v44, %v1377
  %v1379 = vmul.f32 %v1378, %v1345
  %v1380 = vmul.f32 %v1378, %v1346
  %v1381 = vmul.f32 %v1379, %v1373
  %v1382 = vmul.f32 %v1380, %v1374
  %v1383 = vlaneseq
  %v1384 = vshrl.u32 %v1383, 7
  %v1385 = vsub.s32 3, %v1384
  %v1386 = vrot.slane %v44, %v1385
  %v1387 = vadd.f32 %v1381, %v1386
  %v1388 = vadd.f32 %v1382, %v1386
  %v1389 = vld [vmem:[%s6] sm:$0xff]
  %v1390 = vld [vmem:[%s6 + $0x8] sm:$0xff]
  %v1391 = vld [vmem:[%s6 + $0x10] sm:$0xff]
  %v1392 = vld [vmem:[%s6 + $0x18] sm:$0xff]
  %v1393 = vld [vmem:[%s7] sm:$0x1]
  %v1395 = vlaneseq
  %v1396 = vshrl.u32 %v1395, 7
  %v1397 = vsub.s32 0, %v1396
  %v1398 = vrot.slane %v1393, %v1397
  %v1401 = vsel %vm45, %v1387, 0
  %v1404 = vsel %vm45, %v1388, 0
  %1406 = vmatprep.subr.mxu0 0.0
  %1407 = vmatpush1.msra.mxu0 0.0
  %1408 = vmatprep.subr.mxu0 0.0
  %1409 = vmatpush1.msra.mxu0 0.0
  %1410 = vmatprep.subr.mxu0 0.0
  %1411 = vmatpush1.msra.mxu0 0.0
  %1412 = vmatprep.subr.mxu0 0.0
  %1413 = vmatpush1.msra.mxu0 0.0
  %1414 = vmatprep.subr.mxu0 0.0
  %1415 = vmatpush1.msra.mxu0 0.0
  %1416 = vmatprep.subr.mxu0 0.0
  %1417 = vmatpush1.msra.mxu0 0.0
  %1418 = vmatprep.subr.mxu0 0.0
  %1419 = vmatpush1.msra.mxu0 0.0
  %1420 = vmatprep.subr.mxu0 0.0
  %1421 = vmatpush1.msra.mxu0 0.0
  %1422 = vmatprep.subr.mxu0 0.0
  %1423 = vmatpush1.msra.mxu0 0.0
  %1424 = vmatprep.subr.mxu0 0.0
  %1425 = vmatpush1.msra.mxu0 0.0
  %1426 = vmatprep.subr.mxu0 0.0
  %1427 = vmatpush1.msra.mxu0 0.0
  %1428 = vmatprep.subr.mxu0 0.0
  %1429 = vmatpush1.msra.mxu0 0.0
  %1430 = vmatprep.subr.mxu0 0.0
  %1431 = vmatpush1.msra.mxu0 %v1392
  %1432 = vmatprep.subr.mxu0 0.0
  %1433 = vmatpush1.msra.mxu0 %v1391
  %1434 = vmatprep.subr.mxu0 0.0
  %1435 = vmatpush1.msra.mxu0 %v1390
  %1436 = vmatprep.subr.mxu0 0.0
  %1437 = vmatpush1.msra.mxu0 %v1389
  %1438 = vmatprep.subr.mxu0 0.0
  %1439 = vmatpush2.msra.mxu0 0.0
  %1440 = vmatprep.subr.mxu0 0.0
  %1441 = vmatpush2.msra.mxu0 0.0
  %1442 = vmatprep.subr.mxu0 0.0
  %1443 = vmatpush2.msra.mxu0 0.0
  %1444 = vmatprep.subr.mxu0 0.0
  %1445 = vmatpush2.msra.mxu0 0.0
  %1446 = vmatprep.subr.mxu0 0.0
  %1447 = vmatpush2.msra.mxu0 0.0
  %1448 = vmatprep.subr.mxu0 0.0
  %1449 = vmatpush2.msra.mxu0 0.0
  %1450 = vmatprep.subr.mxu0 0.0
  %1451 = vmatpush2.msra.mxu0 0.0
  %1452 = vmatprep.subr.mxu0 0.0
  %1453 = vmatpush2.msra.mxu0 0.0
  %1454 = vmatprep.subr.mxu0 0.0
  %1455 = vmatpush2.msra.mxu0 0.0
  %1456 = vmatprep.subr.mxu0 0.0
  %1457 = vmatpush2.msra.mxu0 0.0
  %1458 = vmatprep.subr.mxu0 0.0
  %1459 = vmatpush2.msra.mxu0 0.0
  %1460 = vmatprep.subr.mxu0 0.0
  %1461 = vmatpush2.msra.mxu0 0.0
  %1462 = vmatprep.subr.mxu0 0.0
  %1463 = vmatpush2.msra.mxu0 0.0
  %1464 = vmatprep.subr.mxu0 0.0
  %1465 = vmatpush2.msra.mxu0 0.0
  %1466 = vmatprep.subr.mxu0 0.0
  %1467 = vmatpush2.msra.mxu0 0.0
  %1468 = vmatprep.subr.mxu0 0.0
  %1469 = vmatpush2.msra.mxu0 0.0
  %1470 = vmatprep.mubr.f32.mxu0 0.0
  %1471 = vmatmul.mubr.f32.gmra.mxu0 %v1401
  %v1472 = vpop.f32.mrf.mxu0
  %v1473 = vadd.f32 %v1398, %v1472
  %v1474 = vpop.f32.mrf.mxu0
  %1475 = vmatprep.mubr.f32.mxu0 0.0
  %1476 = vmatmul.mubr.f32.gmra.mxu0 %v1404
  %v1477 = vpop.f32.mrf.mxu0
  %v1478 = vadd.f32 %v1398, %v1477
  %v1479 = vpop.f32.mrf.mxu0
  %1480 = vdwg.mxu0
  %v1481 = vld [vmem:[%s8] sm:$0xff]
  %v1482 = vld [vmem:[%s8 + $0x8] sm:$0xff]
  %v1483 = vld [vmem:[%s8 + $0x10] sm:$0xff]
  %v1484 = vld [vmem:[%s8 + $0x18] sm:$0xff]
  %v1485 = vld [vmem:[%s8 + $0x20] sm:$0xff]
  %v1486 = vld [vmem:[%s8 + $0x28] sm:$0xff]
  %v1487 = vld [vmem:[%s8 + $0x30] sm:$0xff]
  %v1488 = vld [vmem:[%s8 + $0x38] sm:$0xff]
  %vm1489 = vcmask 523264
  %v1491 = vsel %vm1489, %v1473, 0
  %v1494 = vsel %vm1489, %v1478, 0
  %1496 = vmatprep.subr.mxu0 0.0
  %1497 = vmatpush1.msra.mxu0 0.0
  %1498 = vmatprep.subr.mxu0 0.0
  %1499 = vmatpush1.msra.mxu0 0.0
  %1500 = vmatprep.subr.mxu0 0.0
  %1501 = vmatpush1.msra.mxu0 0.0
  %1502 = vmatprep.subr.mxu0 0.0
  %1503 = vmatpush1.msra.mxu0 0.0
  %1504 = vmatprep.subr.mxu0 0.0
  %1505 = vmatpush1.msra.mxu0 0.0
  %1506 = vmatprep.subr.mxu0 0.0
  %1507 = vmatpush1.msra.mxu0 0.0
  %1508 = vmatprep.subr.mxu0 0.0
  %1509 = vmatpush1.msra.mxu0 0.0
  %1510 = vmatprep.subr.mxu0 0.0
  %1511 = vmatpush1.msra.mxu0 0.0
  %1512 = vmatprep.subr.mxu0 0.0
  %1513 = vmatpush1.msra.mxu0 %v1488
  %1514 = vmatprep.subr.mxu0 0.0
  %1515 = vmatpush1.msra.mxu0 %v1487
  %1516 = vmatprep.subr.mxu0 0.0
  %1517 = vmatpush1.msra.mxu0 %v1486
  %1518 = vmatprep.subr.mxu0 0.0
  %1519 = vmatpush1.msra.mxu0 %v1485
  %1520 = vmatprep.subr.mxu0 0.0
  %1521 = vmatpush1.msra.mxu0 %v1484
  %1522 = vmatprep.subr.mxu0 0.0
  %1523 = vmatpush1.msra.mxu0 %v1483
  %1524 = vmatprep.subr.mxu0 0.0
  %1525 = vmatpush1.msra.mxu0 %v1482
  %1526 = vmatprep.subr.mxu0 0.0
  %1527 = vmatpush1.msra.mxu0 %v1481
  %1528 = vmatprep.subr.mxu0 0.0
  %1529 = vmatpush2.msra.mxu0 0.0
  %1530 = vmatprep.subr.mxu0 0.0
  %1531 = vmatpush2.msra.mxu0 0.0
  %1532 = vmatprep.subr.mxu0 0.0
  %1533 = vmatpush2.msra.mxu0 0.0
  %1534 = vmatprep.subr.mxu0 0.0
  %1535 = vmatpush2.msra.mxu0 0.0
  %1536 = vmatprep.subr.mxu0 0.0
  %1537 = vmatpush2.msra.mxu0 0.0
  %1538 = vmatprep.subr.mxu0 0.0
  %1539 = vmatpush2.msra.mxu0 0.0
  %1540 = vmatprep.subr.mxu0 0.0
  %1541 = vmatpush2.msra.mxu0 0.0
  %1542 = vmatprep.subr.mxu0 0.0
  %1543 = vmatpush2.msra.mxu0 0.0
  %1544 = vmatprep.subr.mxu0 0.0
  %1545 = vmatpush2.msra.mxu0 0.0
  %1546 = vmatprep.subr.mxu0 0.0
  %1547 = vmatpush2.msra.mxu0 0.0
  %1548 = vmatprep.subr.mxu0 0.0
  %1549 = vmatpush2.msra.mxu0 0.0
  %1550 = vmatprep.subr.mxu0 0.0
  %1551 = vmatpush2.msra.mxu0 0.0
  %1552 = vmatprep.subr.mxu0 0.0
  %1553 = vmatpush2.msra.mxu0 0.0
  %1554 = vmatprep.subr.mxu0 0.0
  %1555 = vmatpush2.msra.mxu0 0.0
  %1556 = vmatprep.subr.mxu0 0.0
  %1557 = vmatpush2.msra.mxu0 0.0
  %1558 = vmatprep.subr.mxu0 0.0
  %1559 = vmatpush2.msra.mxu0 0.0
  %1560 = vmatprep.mubr.f32.mxu0 0.0
  %1561 = vmatmul.mubr.f32.gmra.mxu0 %v1491
  %v1562 = vpop.f32.mrf.mxu0
  %v1563 = vadd.f32 0.0, %v1562
  %v1564 = vpop.f32.mrf.mxu0
  %1565 = vmatprep.mubr.f32.mxu0 0.0
  %1566 = vmatmul.mubr.f32.gmra.mxu0 %v1494
  %v1567 = vpop.f32.mrf.mxu0
  %v1568 = vadd.f32 0.0, %v1567
  %v1569 = vpop.f32.mrf.mxu0
  %1570 = vdwg.mxu0
  %v1571 = vadd.f32 %v1335, %v1563
  %v1572 = vadd.f32 %v1336, %v1568
  %v1573 = vlaneseq
  %v1574 = vshrl.u32 %v1573, 7
  %v1575 = vsub.s32 4, %v1574
  %v1576 = vrot.slane %v44, %v1575
  %v1577 = vadd.f32 %v1571, %v1576
  %v1578 = vadd.f32 %v1572, %v1576
  %s1579 = scalar_lea.vmem %s5, 16
  %v1580 = vld [vmem:[%s1579] sm:$0xff]
  %v1581 = vld [vmem:[%s1579 + $0x8] sm:$0x1f]
  %v1582 = vsel %vm45, %v1577, 0.0
  %1583 = vadd.xlane.f32.xlu0 %v1582
  %v1584 = vpop.xlane.xlu0 %1583
  %v1585 = vsel %vm45, %v1578, 0.0
  %1586 = vadd.xlane.f32.xlu0 %v1585
  %v1587 = vpop.xlane.xlu0 %1586
  %v1588 = vmul.f32 %v1584, %v52
  %v1589 = vmul.f32 %v1587, %v52
  %v1590 = vsub.f32 %v1577, %v1588
  %v1591 = vsub.f32 %v1578, %v1589
  %v1592 = vmul.f32 %v1590, %v1590
  %v1593 = vmul.f32 %v1591, %v1591
  %v1594 = vsel %vm45, %v1592, 0.0
  %1595 = vadd.xlane.f32.xlu0 %v1594
  %v1596 = vpop.xlane.xlu0 %1595
  %v1597 = vsel %vm45, %v1593, 0.0
  %1598 = vadd.xlane.f32.xlu0 %v1597
  %v1599 = vpop.xlane.xlu0 %1598
  %v1600 = vmul.f32 %v1596, 0.032258064
  %v1601 = vmul.f32 %v1599, 0.032258064
  %v1602 = vrsqrt.pop %v1600
  %v1603 = vmul.f32 %v1600, %v1602
  %vm1604 = vcmp.eq.f32.partialorder %v1600, inf
  %v1605 = vsel %vm1604, %v1600, %v1603
  %vm1606 = vcmp.eq.f32.partialorder %v1600, 0.0
  %v1607 = vand.u32 %v1600, 2147483648
  %v1608 = vsel %vm1606, %v1607, %v1605
  %v1609 = vrsqrt.pop %v1601
  %v1610 = vmul.f32 %v1601, %v1609
  %vm1611 = vcmp.eq.f32.partialorder %v1601, inf
  %v1612 = vsel %vm1611, %v1601, %v1610
  %vm1613 = vcmp.eq.f32.partialorder %v1601, 0.0
  %v1614 = vand.u32 %v1601, 2147483648
  %v1615 = vsel %vm1613, %v1614, %v1612
  %v1616 = vadd.f32 %v1608, 1e-06
  %v1617 = vadd.f32 %v1615, 1e-06
  %v1618 = vrcp.pop %v1616
  %v1619 = vrcp.pop %v1617
  %v1620 = vlaneseq
  %v1621 = vshrl.u32 %v1620, 7
  %v1622 = vsub.s32 0, %v1621
  %v1623 = vrot.slane %v1580, %v1622
  %v1624 = vmul.f32 %v1623, %v1590
  %v1625 = vmul.f32 %v1623, %v1591
  %v1626 = vmul.f32 %v1624, %v1618
  %v1627 = vmul.f32 %v1625, %v1619
  %v1628 = vlaneseq
  %v1629 = vshrl.u32 %v1628, 7
  %v1630 = vsub.s32 1, %v1629
  %v1631 = vrot.slane %v1580, %v1630
  %v1632 = vadd.f32 %v1626, %v1631
  %v1633 = vadd.f32 %v1627, %v1631
  %s1634 = scalar_lea.vmem %s4, 192
  %v1635 = vld [vmem:[%s1634] sm:$0xff]
  %v1636 = vld [vmem:[%s1634 + $0x8] sm:$0xff]
  %v1637 = vld [vmem:[%s1634 + $0x10] sm:$0xff]
  %v1638 = vld [vmem:[%s1634 + $0x18] sm:$0xff]
  %s1639 = scalar_lea.vmem %s4, 224
  %v1640 = vld [vmem:[%s1639] sm:$0xff]
  %v1641 = vld [vmem:[%s1639 + $0x8] sm:$0xff]
  %v1642 = vld [vmem:[%s1639 + $0x10] sm:$0xff]
  %v1643 = vld [vmem:[%s1639 + $0x18] sm:$0xff]
  %s1644 = scalar_lea.vmem %s4, 256
  %v1645 = vld [vmem:[%s1644] sm:$0xff]
  %v1646 = vld [vmem:[%s1644 + $0x8] sm:$0xff]
  %v1647 = vld [vmem:[%s1644 + $0x10] sm:$0xff]
  %v1648 = vld [vmem:[%s1644 + $0x18] sm:$0xff]
  %v1649 = vlaneseq
  %v1650 = vshrl.u32 %v1649, 7
  %v1651 = vsub.s32 2, %v1650
  %v1652 = vrot.slane %v1580, %v1651
  %v1654 = vsel %vm45, %v1632, 0
  %v1657 = vsel %vm45, %v1633, 0
  %1659 = vmatprep.subr.mxu0 0.0
  %1660 = vmatpush1.msra.mxu0 0.0
  %1661 = vmatprep.subr.mxu0 0.0
  %1662 = vmatpush1.msra.mxu0 0.0
  %1663 = vmatprep.subr.mxu0 0.0
  %1664 = vmatpush1.msra.mxu0 0.0
  %1665 = vmatprep.subr.mxu0 0.0
  %1666 = vmatpush1.msra.mxu0 0.0
  %1667 = vmatprep.subr.mxu0 0.0
  %1668 = vmatpush1.msra.mxu0 0.0
  %1669 = vmatprep.subr.mxu0 0.0
  %1670 = vmatpush1.msra.mxu0 0.0
  %1671 = vmatprep.subr.mxu0 0.0
  %1672 = vmatpush1.msra.mxu0 0.0
  %1673 = vmatprep.subr.mxu0 0.0
  %1674 = vmatpush1.msra.mxu0 0.0
  %1675 = vmatprep.subr.mxu0 0.0
  %1676 = vmatpush1.msra.mxu0 0.0
  %1677 = vmatprep.subr.mxu0 0.0
  %1678 = vmatpush1.msra.mxu0 0.0
  %1679 = vmatprep.subr.mxu0 0.0
  %1680 = vmatpush1.msra.mxu0 0.0
  %1681 = vmatprep.subr.mxu0 0.0
  %1682 = vmatpush1.msra.mxu0 0.0
  %1683 = vmatprep.subr.mxu0 0.0
  %1684 = vmatpush1.msra.mxu0 %v1638
  %1685 = vmatprep.subr.mxu0 0.0
  %1686 = vmatpush1.msra.mxu0 %v1637
  %1687 = vmatprep.subr.mxu0 0.0
  %1688 = vmatpush1.msra.mxu0 %v1636
  %1689 = vmatprep.subr.mxu0 0.0
  %1690 = vmatpush1.msra.mxu0 %v1635
  %1691 = vmatprep.subr.mxu0 0.0
  %1692 = vmatpush2.msra.mxu0 0.0
  %1693 = vmatprep.subr.mxu0 0.0
  %1694 = vmatpush2.msra.mxu0 0.0
  %1695 = vmatprep.subr.mxu0 0.0
  %1696 = vmatpush2.msra.mxu0 0.0
  %1697 = vmatprep.subr.mxu0 0.0
  %1698 = vmatpush2.msra.mxu0 0.0
  %1699 = vmatprep.subr.mxu0 0.0
  %1700 = vmatpush2.msra.mxu0 0.0
  %1701 = vmatprep.subr.mxu0 0.0
  %1702 = vmatpush2.msra.mxu0 0.0
  %1703 = vmatprep.subr.mxu0 0.0
  %1704 = vmatpush2.msra.mxu0 0.0
  %1705 = vmatprep.subr.mxu0 0.0
  %1706 = vmatpush2.msra.mxu0 0.0
  %1707 = vmatprep.subr.mxu0 0.0
  %1708 = vmatpush2.msra.mxu0 0.0
  %1709 = vmatprep.subr.mxu0 0.0
  %1710 = vmatpush2.msra.mxu0 0.0
  %1711 = vmatprep.subr.mxu0 0.0
  %1712 = vmatpush2.msra.mxu0 0.0
  %1713 = vmatprep.subr.mxu0 0.0
  %1714 = vmatpush2.msra.mxu0 0.0
  %1715 = vmatprep.subr.mxu0 0.0
  %1716 = vmatpush2.msra.mxu0 0.0
  %1717 = vmatprep.subr.mxu0 0.0
  %1718 = vmatpush2.msra.mxu0 0.0
  %1719 = vmatprep.subr.mxu0 0.0
  %1720 = vmatpush2.msra.mxu0 0.0
  %1721 = vmatprep.subr.mxu0 0.0
  %1722 = vmatpush2.msra.mxu0 0.0
  %1723 = vmatprep.mubr.f32.mxu0 0.0
  %1724 = vmatmul.mubr.f32.gmra.mxu0 %v1654
  %v1725 = vpop.f32.mrf.mxu0
  %v1726 = vadd.f32 %v1652, %v1725
  %v1727 = vpop.f32.mrf.mxu0
  %1728 = vmatprep.mubr.f32.mxu0 0.0
  %1729 = vmatmul.mubr.f32.gmra.mxu0 %v1657
  %v1730 = vpop.f32.mrf.mxu0
  %v1731 = vadd.f32 %v1652, %v1730
  %v1732 = vpop.f32.mrf.mxu0
  %1733 = vdwg.mxu0
  %v1734 = vlaneseq
  %v1735 = vshrl.u32 %v1734, 7
  %v1736 = vsub.s32 3, %v1735
  %v1737 = vrot.slane %v1580, %v1736
  %1738 = vmatprep.subr.mxu0 0.0
  %1739 = vmatpush1.msra.mxu0 0.0
  %1740 = vmatprep.subr.mxu0 0.0
  %1741 = vmatpush1.msra.mxu0 0.0
  %1742 = vmatprep.subr.mxu0 0.0
  %1743 = vmatpush1.msra.mxu0 0.0
  %1744 = vmatprep.subr.mxu0 0.0
  %1745 = vmatpush1.msra.mxu0 0.0
  %1746 = vmatprep.subr.mxu0 0.0
  %1747 = vmatpush1.msra.mxu0 0.0
  %1748 = vmatprep.subr.mxu0 0.0
  %1749 = vmatpush1.msra.mxu0 0.0
  %1750 = vmatprep.subr.mxu0 0.0
  %1751 = vmatpush1.msra.mxu0 0.0
  %1752 = vmatprep.subr.mxu0 0.0
  %1753 = vmatpush1.msra.mxu0 0.0
  %1754 = vmatprep.subr.mxu0 0.0
  %1755 = vmatpush1.msra.mxu0 0.0
  %1756 = vmatprep.subr.mxu0 0.0
  %1757 = vmatpush1.msra.mxu0 0.0
  %1758 = vmatprep.subr.mxu0 0.0
  %1759 = vmatpush1.msra.mxu0 0.0
  %1760 = vmatprep.subr.mxu0 0.0
  %1761 = vmatpush1.msra.mxu0 0.0
  %1762 = vmatprep.subr.mxu0 0.0
  %1763 = vmatpush1.msra.mxu0 %v1643
  %1764 = vmatprep.subr.mxu0 0.0
  %1765 = vmatpush1.msra.mxu0 %v1642
  %1766 = vmatprep.subr.mxu0 0.0
  %1767 = vmatpush1.msra.mxu0 %v1641
  %1768 = vmatprep.subr.mxu0 0.0
  %1769 = vmatpush1.msra.mxu0 %v1640
  %1770 = vmatprep.subr.mxu0 0.0
  %1771 = vmatpush2.msra.mxu0 0.0
  %1772 = vmatprep.subr.mxu0 0.0
  %1773 = vmatpush2.msra.mxu0 0.0
  %1774 = vmatprep.subr.mxu0 0.0
  %1775 = vmatpush2.msra.mxu0 0.0
  %1776 = vmatprep.subr.mxu0 0.0
  %1777 = vmatpush2.msra.mxu0 0.0
  %1778 = vmatprep.subr.mxu0 0.0
  %1779 = vmatpush2.msra.mxu0 0.0
  %1780 = vmatprep.subr.mxu0 0.0
  %1781 = vmatpush2.msra.mxu0 0.0
  %1782 = vmatprep.subr.mxu0 0.0
  %1783 = vmatpush2.msra.mxu0 0.0
  %1784 = vmatprep.subr.mxu0 0.0
  %1785 = vmatpush2.msra.mxu0 0.0
  %1786 = vmatprep.subr.mxu0 0.0
  %1787 = vmatpush2.msra.mxu0 0.0
  %1788 = vmatprep.subr.mxu0 0.0
  %1789 = vmatpush2.msra.mxu0 0.0
  %1790 = vmatprep.subr.mxu0 0.0
  %1791 = vmatpush2.msra.mxu0 0.0
  %1792 = vmatprep.subr.mxu0 0.0
  %1793 = vmatpush2.msra.mxu0 0.0
  %1794 = vmatprep.subr.mxu0 0.0
  %1795 = vmatpush2.msra.mxu0 0.0
  %1796 = vmatprep.subr.mxu0 0.0
  %1797 = vmatpush2.msra.mxu0 0.0
  %1798 = vmatprep.subr.mxu0 0.0
  %1799 = vmatpush2.msra.mxu0 0.0
  %1800 = vmatprep.subr.mxu0 0.0
  %1801 = vmatpush2.msra.mxu0 0.0
  %1802 = vmatprep.mubr.f32.mxu0 0.0
  %1803 = vmatmul.mubr.f32.gmra.mxu0 %v1654
  %v1804 = vpop.f32.mrf.mxu0
  %v1805 = vadd.f32 %v1737, %v1804
  %v1806 = vpop.f32.mrf.mxu0
  %1807 = vmatprep.mubr.f32.mxu0 0.0
  %1808 = vmatmul.mubr.f32.gmra.mxu0 %v1657
  %v1809 = vpop.f32.mrf.mxu0
  %v1810 = vadd.f32 %v1737, %v1809
  %v1811 = vpop.f32.mrf.mxu0
  %1812 = vdwg.mxu0
  %v1814 = vsel %vm45, %v1726, 0
  %v1817 = vsel %vm45, %v1805, 0
  %1819 = vmatprep.subr.mxu0 0.0
  %1820 = vmatpush1.xpose.msra.mxu0 0.0
  %1821 = vmatprep.subr.mxu0 0.0
  %1822 = vmatpush1.xpose.msra.mxu0 0.0
  %1823 = vmatprep.subr.mxu0 0.0
  %1824 = vmatpush1.xpose.msra.mxu0 0.0
  %1825 = vmatprep.subr.mxu0 0.0
  %1826 = vmatpush1.xpose.msra.mxu0 0.0
  %1827 = vmatprep.subr.mxu0 0.0
  %1828 = vmatpush1.xpose.msra.mxu0 0.0
  %1829 = vmatprep.subr.mxu0 0.0
  %1830 = vmatpush1.xpose.msra.mxu0 0.0
  %1831 = vmatprep.subr.mxu0 0.0
  %1832 = vmatpush1.xpose.msra.mxu0 0.0
  %1833 = vmatprep.subr.mxu0 0.0
  %1834 = vmatpush1.xpose.msra.mxu0 0.0
  %1835 = vmatprep.subr.mxu0 0.0
  %1836 = vmatpush1.xpose.msra.mxu0 0.0
  %1837 = vmatprep.subr.mxu0 0.0
  %1838 = vmatpush1.xpose.msra.mxu0 0.0
  %1839 = vmatprep.subr.mxu0 0.0
  %1840 = vmatpush1.xpose.msra.mxu0 0.0
  %1841 = vmatprep.subr.mxu0 0.0
  %1842 = vmatpush1.xpose.msra.mxu0 0.0
  %1843 = vmatprep.subr.mxu0 0.0
  %1844 = vmatpush1.xpose.msra.mxu0 0.0
  %1845 = vmatprep.subr.mxu0 0.0
  %1846 = vmatpush1.xpose.msra.mxu0 0.0
  %1847 = vmatprep.subr.mxu0 0.0
  %1848 = vmatpush1.xpose.msra.mxu0 0.0
  %1849 = vmatprep.subr.mxu0 0.0
  %1850 = vmatpush1.xpose.msra.mxu0 %v1817
  %1851 = vmatprep.subr.mxu0 0.0
  %1852 = vmatpush2.xpose.msra.mxu0 0.0
  %1853 = vmatprep.subr.mxu0 0.0
  %1854 = vmatpush2.xpose.msra.mxu0 0.0
  %1855 = vmatprep.subr.mxu0 0.0
  %1856 = vmatpush2.xpose.msra.mxu0 0.0
  %1857 = vmatprep.subr.mxu0 0.0
  %1858 = vmatpush2.xpose.msra.mxu0 0.0
  %1859 = vmatprep.subr.mxu0 0.0
  %1860 = vmatpush2.xpose.msra.mxu0 0.0
  %1861 = vmatprep.subr.mxu0 0.0
  %1862 = vmatpush2.xpose.msra.mxu0 0.0
  %1863 = vmatprep.subr.mxu0 0.0
  %1864 = vmatpush2.xpose.msra.mxu0 0.0
  %1865 = vmatprep.subr.mxu0 0.0
  %1866 = vmatpush2.xpose.msra.mxu0 0.0
  %1867 = vmatprep.subr.mxu0 0.0
  %1868 = vmatpush2.xpose.msra.mxu0 0.0
  %1869 = vmatprep.subr.mxu0 0.0
  %1870 = vmatpush2.xpose.msra.mxu0 0.0
  %1871 = vmatprep.subr.mxu0 0.0
  %1872 = vmatpush2.xpose.msra.mxu0 0.0
  %1873 = vmatprep.subr.mxu0 0.0
  %1874 = vmatpush2.xpose.msra.mxu0 0.0
  %1875 = vmatprep.subr.mxu0 0.0
  %1876 = vmatpush2.xpose.msra.mxu0 0.0
  %1877 = vmatprep.subr.mxu0 0.0
  %1878 = vmatpush2.xpose.msra.mxu0 0.0
  %1879 = vmatprep.subr.mxu0 0.0
  %1880 = vmatpush2.xpose.msra.mxu0 0.0
  %1881 = vmatprep.subr.mxu0 0.0
  %1882 = vmatpush2.xpose.msra.mxu0 0.0
  %1883 = vmatprep.mubr.f32.mxu0 0.0
  %1884 = vmatmul.mubr.f32.gmra.mxu0 %v1814
  %v1885 = vpop.f32.mrf.mxu0
  %v1886 = vadd.f32 0.0, %v1885
  %v1887 = vpop.f32.mrf.mxu0
  %1888 = vdwg.mxu0
  %v1890 = vsel %vm45, %v1731, 0
  %v1893 = vsel %vm45, %v1810, 0
  %1895 = vmatprep.subr.mxu0 0.0
  %1896 = vmatpush1.xpose.msra.mxu0 0.0
  %1897 = vmatprep.subr.mxu0 0.0
  %1898 = vmatpush1.xpose.msra.mxu0 0.0
  %1899 = vmatprep.subr.mxu0 0.0
  %1900 = vmatpush1.xpose.msra.mxu0 0.0
  %1901 = vmatprep.subr.mxu0 0.0
  %1902 = vmatpush1.xpose.msra.mxu0 0.0
  %1903 = vmatprep.subr.mxu0 0.0
  %1904 = vmatpush1.xpose.msra.mxu0 0.0
  %1905 = vmatprep.subr.mxu0 0.0
  %1906 = vmatpush1.xpose.msra.mxu0 0.0
  %1907 = vmatprep.subr.mxu0 0.0
  %1908 = vmatpush1.xpose.msra.mxu0 0.0
  %1909 = vmatprep.subr.mxu0 0.0
  %1910 = vmatpush1.xpose.msra.mxu0 0.0
  %1911 = vmatprep.subr.mxu0 0.0
  %1912 = vmatpush1.xpose.msra.mxu0 0.0
  %1913 = vmatprep.subr.mxu0 0.0
  %1914 = vmatpush1.xpose.msra.mxu0 0.0
  %1915 = vmatprep.subr.mxu0 0.0
  %1916 = vmatpush1.xpose.msra.mxu0 0.0
  %1917 = vmatprep.subr.mxu0 0.0
  %1918 = vmatpush1.xpose.msra.mxu0 0.0
  %1919 = vmatprep.subr.mxu0 0.0
  %1920 = vmatpush1.xpose.msra.mxu0 0.0
  %1921 = vmatprep.subr.mxu0 0.0
  %1922 = vmatpush1.xpose.msra.mxu0 0.0
  %1923 = vmatprep.subr.mxu0 0.0
  %1924 = vmatpush1.xpose.msra.mxu0 0.0
  %1925 = vmatprep.subr.mxu0 0.0
  %1926 = vmatpush1.xpose.msra.mxu0 %v1893
  %1927 = vmatprep.subr.mxu0 0.0
  %1928 = vmatpush2.xpose.msra.mxu0 0.0
  %1929 = vmatprep.subr.mxu0 0.0
  %1930 = vmatpush2.xpose.msra.mxu0 0.0
  %1931 = vmatprep.subr.mxu0 0.0
  %1932 = vmatpush2.xpose.msra.mxu0 0.0
  %1933 = vmatprep.subr.mxu0 0.0
  %1934 = vmatpush2.xpose.msra.mxu0 0.0
  %1935 = vmatprep.subr.mxu0 0.0
  %1936 = vmatpush2.xpose.msra.mxu0 0.0
  %1937 = vmatprep.subr.mxu0 0.0
  %1938 = vmatpush2.xpose.msra.mxu0 0.0
  %1939 = vmatprep.subr.mxu0 0.0
  %1940 = vmatpush2.xpose.msra.mxu0 0.0
  %1941 = vmatprep.subr.mxu0 0.0
  %1942 = vmatpush2.xpose.msra.mxu0 0.0
  %1943 = vmatprep.subr.mxu0 0.0
  %1944 = vmatpush2.xpose.msra.mxu0 0.0
  %1945 = vmatprep.subr.mxu0 0.0
  %1946 = vmatpush2.xpose.msra.mxu0 0.0
  %1947 = vmatprep.subr.mxu0 0.0
  %1948 = vmatpush2.xpose.msra.mxu0 0.0
  %1949 = vmatprep.subr.mxu0 0.0
  %1950 = vmatpush2.xpose.msra.mxu0 0.0
  %1951 = vmatprep.subr.mxu0 0.0
  %1952 = vmatpush2.xpose.msra.mxu0 0.0
  %1953 = vmatprep.subr.mxu0 0.0
  %1954 = vmatpush2.xpose.msra.mxu0 0.0
  %1955 = vmatprep.subr.mxu0 0.0
  %1956 = vmatpush2.xpose.msra.mxu0 0.0
  %1957 = vmatprep.subr.mxu0 0.0
  %1958 = vmatpush2.xpose.msra.mxu0 0.0
  %1959 = vmatprep.mubr.f32.mxu0 0.0
  %1960 = vmatmul.mubr.f32.gmra.mxu0 %v1890
  %v1961 = vpop.f32.mrf.mxu0
  %v1962 = vadd.f32 0.0, %v1961
  %v1963 = vpop.f32.mrf.mxu0
  %1964 = vdwg.mxu0
  %v1965 = vmul.f32 %v1886, 0.17677669
  %v1966 = vmul.f32 %v1962, 0.17677669
  %v1967 = vadd.f32 %v1965, %v39
  %v1968 = vadd.f32 %v1966, %v40
  %v1969 = vsel %vm433, %v1967, -inf
  %1970 = vmax.xlane.f32.xlu0 %v1969
  %v1971 = vpop.xlane.xlu0 %1970
  %v1972 = vsel %vm433, %v1968, -inf
  %1973 = vmax.xlane.f32.xlu0 %v1972
  %v1974 = vpop.xlane.xlu0 %1973
  %v1975 = vsub.f32 %v1967, %v1971
  %v1976 = vsub.f32 %v1968, %v1974
  %v1977 = vmul.f32 %v1975, 1.442695
  %v1978 = vpow.pop %v1977
  %v1979 = vmul.f32 %v1976, 1.442695
  %v1980 = vpow.pop %v1979
  %v1981 = vsel %vm433, %v1978, 0.0
  %1982 = vadd.xlane.f32.xlu0 %v1981
  %v1983 = vpop.xlane.xlu0 %1982
  %v1984 = vsel %vm433, %v1980, 0.0
  %1985 = vadd.xlane.f32.xlu0 %v1984
  %v1986 = vpop.xlane.xlu0 %1985
  %v1987 = vrcp.pop %v1983
  %v1988 = vrcp.pop %v1986
  %v1989 = vmul.f32 %v1978, %v1987
  %v1990 = vmul.f32 %v1980, %v1988
  %v1992 = vsel %vm433, %v1989, 0
  %1994 = vmatprep.subr.mxu0 0.0
  %1995 = vmatpush1.msra.mxu0 0.0
  %1996 = vmatprep.subr.mxu0 0.0
  %1997 = vmatpush1.msra.mxu0 0.0
  %1998 = vmatprep.subr.mxu0 0.0
  %1999 = vmatpush1.msra.mxu0 0.0
  %2000 = vmatprep.subr.mxu0 0.0
  %2001 = vmatpush1.msra.mxu0 0.0
  %2002 = vmatprep.subr.mxu0 0.0
  %2003 = vmatpush1.msra.mxu0 0.0
  %2004 = vmatprep.subr.mxu0 0.0
  %2005 = vmatpush1.msra.mxu0 0.0
  %2006 = vmatprep.subr.mxu0 0.0
  %2007 = vmatpush1.msra.mxu0 0.0
  %2008 = vmatprep.subr.mxu0 0.0
  %2009 = vmatpush1.msra.mxu0 0.0
  %2010 = vmatprep.subr.mxu0 0.0
  %2011 = vmatpush1.msra.mxu0 0.0
  %2012 = vmatprep.subr.mxu0 0.0
  %2013 = vmatpush1.msra.mxu0 0.0
  %2014 = vmatprep.subr.mxu0 0.0
  %2015 = vmatpush1.msra.mxu0 0.0
  %2016 = vmatprep.subr.mxu0 0.0
  %2017 = vmatpush1.msra.mxu0 0.0
  %2018 = vmatprep.subr.mxu0 0.0
  %2019 = vmatpush1.msra.mxu0 0.0
  %2020 = vmatprep.subr.mxu0 0.0
  %2021 = vmatpush1.msra.mxu0 0.0
  %2022 = vmatprep.subr.mxu0 0.0
  %2023 = vmatpush1.msra.mxu0 0.0
  %2024 = vmatprep.subr.mxu0 0.0
  %2025 = vmatpush1.msra.mxu0 %v1632
  %2026 = vmatprep.subr.mxu0 0.0
  %2027 = vmatpush2.msra.mxu0 0.0
  %2028 = vmatprep.subr.mxu0 0.0
  %2029 = vmatpush2.msra.mxu0 0.0
  %2030 = vmatprep.subr.mxu0 0.0
  %2031 = vmatpush2.msra.mxu0 0.0
  %2032 = vmatprep.subr.mxu0 0.0
  %2033 = vmatpush2.msra.mxu0 0.0
  %2034 = vmatprep.subr.mxu0 0.0
  %2035 = vmatpush2.msra.mxu0 0.0
  %2036 = vmatprep.subr.mxu0 0.0
  %2037 = vmatpush2.msra.mxu0 0.0
  %2038 = vmatprep.subr.mxu0 0.0
  %2039 = vmatpush2.msra.mxu0 0.0
  %2040 = vmatprep.subr.mxu0 0.0
  %2041 = vmatpush2.msra.mxu0 0.0
  %2042 = vmatprep.subr.mxu0 0.0
  %2043 = vmatpush2.msra.mxu0 0.0
  %2044 = vmatprep.subr.mxu0 0.0
  %2045 = vmatpush2.msra.mxu0 0.0
  %2046 = vmatprep.subr.mxu0 0.0
  %2047 = vmatpush2.msra.mxu0 0.0
  %2048 = vmatprep.subr.mxu0 0.0
  %2049 = vmatpush2.msra.mxu0 0.0
  %2050 = vmatprep.subr.mxu0 0.0
  %2051 = vmatpush2.msra.mxu0 0.0
  %2052 = vmatprep.subr.mxu0 0.0
  %2053 = vmatpush2.msra.mxu0 0.0
  %2054 = vmatprep.subr.mxu0 0.0
  %2055 = vmatpush2.msra.mxu0 0.0
  %2056 = vmatprep.subr.mxu0 0.0
  %2057 = vmatpush2.msra.mxu0 0.0
  %2058 = vmatprep.mubr.f32.mxu0 0.0
  %2059 = vmatmul.mubr.f32.gmra.mxu0 %v1992
  %v2060 = vpop.f32.mrf.mxu0
  %v2061 = vadd.f32 0.0, %v2060
  %v2062 = vpop.f32.mrf.mxu0
  %2063 = vdwg.mxu0
  %v2065 = vsel %vm433, %v1990, 0
  %2067 = vmatprep.subr.mxu0 0.0
  %2068 = vmatpush1.msra.mxu0 0.0
  %2069 = vmatprep.subr.mxu0 0.0
  %2070 = vmatpush1.msra.mxu0 0.0
  %2071 = vmatprep.subr.mxu0 0.0
  %2072 = vmatpush1.msra.mxu0 0.0
  %2073 = vmatprep.subr.mxu0 0.0
  %2074 = vmatpush1.msra.mxu0 0.0
  %2075 = vmatprep.subr.mxu0 0.0
  %2076 = vmatpush1.msra.mxu0 0.0
  %2077 = vmatprep.subr.mxu0 0.0
  %2078 = vmatpush1.msra.mxu0 0.0
  %2079 = vmatprep.subr.mxu0 0.0
  %2080 = vmatpush1.msra.mxu0 0.0
  %2081 = vmatprep.subr.mxu0 0.0
  %2082 = vmatpush1.msra.mxu0 0.0
  %2083 = vmatprep.subr.mxu0 0.0
  %2084 = vmatpush1.msra.mxu0 0.0
  %2085 = vmatprep.subr.mxu0 0.0
  %2086 = vmatpush1.msra.mxu0 0.0
  %2087 = vmatprep.subr.mxu0 0.0
  %2088 = vmatpush1.msra.mxu0 0.0
  %2089 = vmatprep.subr.mxu0 0.0
  %2090 = vmatpush1.msra.mxu0 0.0
  %2091 = vmatprep.subr.mxu0 0.0
  %2092 = vmatpush1.msra.mxu0 0.0
  %2093 = vmatprep.subr.mxu0 0.0
  %2094 = vmatpush1.msra.mxu0 0.0
  %2095 = vmatprep.subr.mxu0 0.0
  %2096 = vmatpush1.msra.mxu0 0.0
  %2097 = vmatprep.subr.mxu0 0.0
  %2098 = vmatpush1.msra.mxu0 %v1633
  %2099 = vmatprep.subr.mxu0 0.0
  %2100 = vmatpush2.msra.mxu0 0.0
  %2101 = vmatprep.subr.mxu0 0.0
  %2102 = vmatpush2.msra.mxu0 0.0
  %2103 = vmatprep.subr.mxu0 0.0
  %2104 = vmatpush2.msra.mxu0 0.0
  %2105 = vmatprep.subr.mxu0 0.0
  %2106 = vmatpush2.msra.mxu0 0.0
  %2107 = vmatprep.subr.mxu0 0.0
  %2108 = vmatpush2.msra.mxu0 0.0
  %2109 = vmatprep.subr.mxu0 0.0
  %2110 = vmatpush2.msra.mxu0 0.0
  %2111 = vmatprep.subr.mxu0 0.0
  %2112 = vmatpush2.msra.mxu0 0.0
  %2113 = vmatprep.subr.mxu0 0.0
  %2114 = vmatpush2.msra.mxu0 0.0
  %2115 = vmatprep.subr.mxu0 0.0
  %2116 = vmatpush2.msra.mxu0 0.0
  %2117 = vmatprep.subr.mxu0 0.0
  %2118 = vmatpush2.msra.mxu0 0.0
  %2119 = vmatprep.subr.mxu0 0.0
  %2120 = vmatpush2.msra.mxu0 0.0
  %2121 = vmatprep.subr.mxu0 0.0
  %2122 = vmatpush2.msra.mxu0 0.0
  %2123 = vmatprep.subr.mxu0 0.0
  %2124 = vmatpush2.msra.mxu0 0.0
  %2125 = vmatprep.subr.mxu0 0.0
  %2126 = vmatpush2.msra.mxu0 0.0
  %2127 = vmatprep.subr.mxu0 0.0
  %2128 = vmatpush2.msra.mxu0 0.0
  %2129 = vmatprep.subr.mxu0 0.0
  %2130 = vmatpush2.msra.mxu0 0.0
  %2131 = vmatprep.mubr.f32.mxu0 0.0
  %2132 = vmatmul.mubr.f32.gmra.mxu0 %v2065
  %v2133 = vpop.f32.mrf.mxu0
  %v2134 = vadd.f32 0.0, %v2133
  %v2135 = vpop.f32.mrf.mxu0
  %2136 = vdwg.mxu0
  %v2137 = vlaneseq
  %v2138 = vshrl.u32 %v2137, 7
  %v2139 = vsub.s32 4, %v2138
  %v2140 = vrot.slane %v1580, %v2139
  %v2142 = vsel %vm45, %v2061, 0
  %v2145 = vsel %vm45, %v2134, 0
  %2147 = vmatprep.subr.mxu0 0.0
  %2148 = vmatpush1.msra.mxu0 0.0
  %2149 = vmatprep.subr.mxu0 0.0
  %2150 = vmatpush1.msra.mxu0 0.0
  %2151 = vmatprep.subr.mxu0 0.0
  %2152 = vmatpush1.msra.mxu0 0.0
  %2153 = vmatprep.subr.mxu0 0.0
  %2154 = vmatpush1.msra.mxu0 0.0
  %2155 = vmatprep.subr.mxu0 0.0
  %2156 = vmatpush1.msra.mxu0 0.0
  %2157 = vmatprep.subr.mxu0 0.0
  %2158 = vmatpush1.msra.mxu0 0.0
  %2159 = vmatprep.subr.mxu0 0.0
  %2160 = vmatpush1.msra.mxu0 0.0
  %2161 = vmatprep.subr.mxu0 0.0
  %2162 = vmatpush1.msra.mxu0 0.0
  %2163 = vmatprep.subr.mxu0 0.0
  %2164 = vmatpush1.msra.mxu0 0.0
  %2165 = vmatprep.subr.mxu0 0.0
  %2166 = vmatpush1.msra.mxu0 0.0
  %2167 = vmatprep.subr.mxu0 0.0
  %2168 = vmatpush1.msra.mxu0 0.0
  %2169 = vmatprep.subr.mxu0 0.0
  %2170 = vmatpush1.msra.mxu0 0.0
  %2171 = vmatprep.subr.mxu0 0.0
  %2172 = vmatpush1.msra.mxu0 %v1648
  %2173 = vmatprep.subr.mxu0 0.0
  %2174 = vmatpush1.msra.mxu0 %v1647
  %2175 = vmatprep.subr.mxu0 0.0
  %2176 = vmatpush1.msra.mxu0 %v1646
  %2177 = vmatprep.subr.mxu0 0.0
  %2178 = vmatpush1.msra.mxu0 %v1645
  %2179 = vmatprep.subr.mxu0 0.0
  %2180 = vmatpush2.msra.mxu0 0.0
  %2181 = vmatprep.subr.mxu0 0.0
  %2182 = vmatpush2.msra.mxu0 0.0
  %2183 = vmatprep.subr.mxu0 0.0
  %2184 = vmatpush2.msra.mxu0 0.0
  %2185 = vmatprep.subr.mxu0 0.0
  %2186 = vmatpush2.msra.mxu0 0.0
  %2187 = vmatprep.subr.mxu0 0.0
  %2188 = vmatpush2.msra.mxu0 0.0
  %2189 = vmatprep.subr.mxu0 0.0
  %2190 = vmatpush2.msra.mxu0 0.0
  %2191 = vmatprep.subr.mxu0 0.0
  %2192 = vmatpush2.msra.mxu0 0.0
  %2193 = vmatprep.subr.mxu0 0.0
  %2194 = vmatpush2.msra.mxu0 0.0
  %2195 = vmatprep.subr.mxu0 0.0
  %2196 = vmatpush2.msra.mxu0 0.0
  %2197 = vmatprep.subr.mxu0 0.0
  %2198 = vmatpush2.msra.mxu0 0.0
  %2199 = vmatprep.subr.mxu0 0.0
  %2200 = vmatpush2.msra.mxu0 0.0
  %2201 = vmatprep.subr.mxu0 0.0
  %2202 = vmatpush2.msra.mxu0 0.0
  %2203 = vmatprep.subr.mxu0 0.0
  %2204 = vmatpush2.msra.mxu0 0.0
  %2205 = vmatprep.subr.mxu0 0.0
  %2206 = vmatpush2.msra.mxu0 0.0
  %2207 = vmatprep.subr.mxu0 0.0
  %2208 = vmatpush2.msra.mxu0 0.0
  %2209 = vmatprep.subr.mxu0 0.0
  %2210 = vmatpush2.msra.mxu0 0.0
  %2211 = vmatprep.mubr.f32.mxu0 0.0
  %2212 = vmatmul.mubr.f32.gmra.mxu0 %v2142
  %v2213 = vpop.f32.mrf.mxu0
  %v2214 = vadd.f32 %v2140, %v2213
  %v2215 = vpop.f32.mrf.mxu0
  %2216 = vmatprep.mubr.f32.mxu0 0.0
  %2217 = vmatmul.mubr.f32.gmra.mxu0 %v2145
  %v2218 = vpop.f32.mrf.mxu0
  %v2219 = vadd.f32 %v2140, %v2218
  %v2220 = vpop.f32.mrf.mxu0
  %2221 = vdwg.mxu0
  %v2222 = vadd.f32 %v1577, %v2214
  %v2223 = vadd.f32 %v1578, %v2219
  %v2224 = vsel %vm45, %v2222, 0.0
  %2225 = vadd.xlane.f32.xlu0 %v2224
  %v2226 = vpop.xlane.xlu0 %2225
  %v2227 = vsel %vm45, %v2223, 0.0
  %2228 = vadd.xlane.f32.xlu0 %v2227
  %v2229 = vpop.xlane.xlu0 %2228
  %v2230 = vmul.f32 %v2226, %v52
  %v2231 = vmul.f32 %v2229, %v52
  %v2232 = vsub.f32 %v2222, %v2230
  %v2233 = vsub.f32 %v2223, %v2231
  %v2234 = vmul.f32 %v2232, %v2232
  %v2235 = vmul.f32 %v2233, %v2233
  %v2236 = vsel %vm45, %v2234, 0.0
  %2237 = vadd.xlane.f32.xlu0 %v2236
  %v2238 = vpop.xlane.xlu0 %2237
  %v2239 = vsel %vm45, %v2235, 0.0
  %2240 = vadd.xlane.f32.xlu0 %v2239
  %v2241 = vpop.xlane.xlu0 %2240
  %v2242 = vmul.f32 %v2238, 0.032258064
  %v2243 = vmul.f32 %v2241, 0.032258064
  %v2244 = vrsqrt.pop %v2242
  %v2245 = vmul.f32 %v2242, %v2244
  %vm2246 = vcmp.eq.f32.partialorder %v2242, inf
  %v2247 = vsel %vm2246, %v2242, %v2245
  %vm2248 = vcmp.eq.f32.partialorder %v2242, 0.0
  %v2249 = vand.u32 %v2242, 2147483648
  %v2250 = vsel %vm2248, %v2249, %v2247
  %v2251 = vrsqrt.pop %v2243
  %v2252 = vmul.f32 %v2243, %v2251
  %vm2253 = vcmp.eq.f32.partialorder %v2243, inf
  %v2254 = vsel %vm2253, %v2243, %v2252
  %vm2255 = vcmp.eq.f32.partialorder %v2243, 0.0
  %v2256 = vand.u32 %v2243, 2147483648
  %v2257 = vsel %vm2255, %v2256, %v2254
  %v2258 = vadd.f32 %v2250, 1e-06
  %v2259 = vadd.f32 %v2257, 1e-06
  %v2260 = vrcp.pop %v2258
  %v2261 = vrcp.pop %v2259
  %v2262 = vlaneseq
  %v2263 = vshrl.u32 %v2262, 7
  %v2264 = vsub.s32 5, %v2263
  %v2265 = vrot.slane %v1580, %v2264
  %v2266 = vmul.f32 %v2265, %v2232
  %v2267 = vmul.f32 %v2265, %v2233
  %v2268 = vmul.f32 %v2266, %v2260
  %v2269 = vmul.f32 %v2267, %v2261
  %v2270 = vlaneseq
  %v2271 = vshrl.u32 %v2270, 7
  %v2272 = vsub.s32 6, %v2271
  %v2273 = vrot.slane %v1580, %v2272
  %v2274 = vadd.f32 %v2268, %v2273
  %v2275 = vadd.f32 %v2269, %v2273
  %s2276 = scalar_lea.vmem %s4, 288
  %v2277 = vld [vmem:[%s2276] sm:$0xff]
  %v2278 = vld [vmem:[%s2276 + $0x8] sm:$0xff]
  %v2279 = vld [vmem:[%s2276 + $0x10] sm:$0xff]
  %v2280 = vld [vmem:[%s2276 + $0x18] sm:$0xff]
  %s2281 = scalar_lea.vmem %s4, 320
  %v2282 = vld [vmem:[%s2281] sm:$0xff]
  %v2283 = vld [vmem:[%s2281 + $0x8] sm:$0xff]
  %v2284 = vld [vmem:[%s2281 + $0x10] sm:$0xff]
  %v2285 = vld [vmem:[%s2281 + $0x18] sm:$0xff]
  %s2286 = scalar_lea.vmem %s4, 352
  %v2287 = vld [vmem:[%s2286] sm:$0xff]
  %v2288 = vld [vmem:[%s2286 + $0x8] sm:$0xff]
  %v2289 = vld [vmem:[%s2286 + $0x10] sm:$0xff]
  %v2290 = vld [vmem:[%s2286 + $0x18] sm:$0xff]
  %v2291 = vlaneseq
  %v2292 = vshrl.u32 %v2291, 7
  %v2293 = vsub.s32 7, %v2292
  %v2294 = vrot.slane %v1580, %v2293
  %v2296 = vsel %vm45, %v2274, 0
  %v2299 = vsel %vm45, %v2275, 0
  %2301 = vmatprep.subr.mxu0 0.0
  %2302 = vmatpush1.msra.mxu0 0.0
  %2303 = vmatprep.subr.mxu0 0.0
  %2304 = vmatpush1.msra.mxu0 0.0
  %2305 = vmatprep.subr.mxu0 0.0
  %2306 = vmatpush1.msra.mxu0 0.0
  %2307 = vmatprep.subr.mxu0 0.0
  %2308 = vmatpush1.msra.mxu0 0.0
  %2309 = vmatprep.subr.mxu0 0.0
  %2310 = vmatpush1.msra.mxu0 0.0
  %2311 = vmatprep.subr.mxu0 0.0
  %2312 = vmatpush1.msra.mxu0 0.0
  %2313 = vmatprep.subr.mxu0 0.0
  %2314 = vmatpush1.msra.mxu0 0.0
  %2315 = vmatprep.subr.mxu0 0.0
  %2316 = vmatpush1.msra.mxu0 0.0
  %2317 = vmatprep.subr.mxu0 0.0
  %2318 = vmatpush1.msra.mxu0 0.0
  %2319 = vmatprep.subr.mxu0 0.0
  %2320 = vmatpush1.msra.mxu0 0.0
  %2321 = vmatprep.subr.mxu0 0.0
  %2322 = vmatpush1.msra.mxu0 0.0
  %2323 = vmatprep.subr.mxu0 0.0
  %2324 = vmatpush1.msra.mxu0 0.0
  %2325 = vmatprep.subr.mxu0 0.0
  %2326 = vmatpush1.msra.mxu0 %v2280
  %2327 = vmatprep.subr.mxu0 0.0
  %2328 = vmatpush1.msra.mxu0 %v2279
  %2329 = vmatprep.subr.mxu0 0.0
  %2330 = vmatpush1.msra.mxu0 %v2278
  %2331 = vmatprep.subr.mxu0 0.0
  %2332 = vmatpush1.msra.mxu0 %v2277
  %2333 = vmatprep.subr.mxu0 0.0
  %2334 = vmatpush2.msra.mxu0 0.0
  %2335 = vmatprep.subr.mxu0 0.0
  %2336 = vmatpush2.msra.mxu0 0.0
  %2337 = vmatprep.subr.mxu0 0.0
  %2338 = vmatpush2.msra.mxu0 0.0
  %2339 = vmatprep.subr.mxu0 0.0
  %2340 = vmatpush2.msra.mxu0 0.0
  %2341 = vmatprep.subr.mxu0 0.0
  %2342 = vmatpush2.msra.mxu0 0.0
  %2343 = vmatprep.subr.mxu0 0.0
  %2344 = vmatpush2.msra.mxu0 0.0
  %2345 = vmatprep.subr.mxu0 0.0
  %2346 = vmatpush2.msra.mxu0 0.0
  %2347 = vmatprep.subr.mxu0 0.0
  %2348 = vmatpush2.msra.mxu0 0.0
  %2349 = vmatprep.subr.mxu0 0.0
  %2350 = vmatpush2.msra.mxu0 0.0
  %2351 = vmatprep.subr.mxu0 0.0
  %2352 = vmatpush2.msra.mxu0 0.0
  %2353 = vmatprep.subr.mxu0 0.0
  %2354 = vmatpush2.msra.mxu0 0.0
  %2355 = vmatprep.subr.mxu0 0.0
  %2356 = vmatpush2.msra.mxu0 0.0
  %2357 = vmatprep.subr.mxu0 0.0
  %2358 = vmatpush2.msra.mxu0 0.0
  %2359 = vmatprep.subr.mxu0 0.0
  %2360 = vmatpush2.msra.mxu0 0.0
  %2361 = vmatprep.subr.mxu0 0.0
  %2362 = vmatpush2.msra.mxu0 0.0
  %2363 = vmatprep.subr.mxu0 0.0
  %2364 = vmatpush2.msra.mxu0 0.0
  %2365 = vmatprep.mubr.f32.mxu0 0.0
  %2366 = vmatmul.mubr.f32.gmra.mxu0 %v2296
  %v2367 = vpop.f32.mrf.mxu0
  %v2368 = vadd.f32 %v2294, %v2367
  %v2369 = vpop.f32.mrf.mxu0
  %2370 = vmatprep.mubr.f32.mxu0 0.0
  %2371 = vmatmul.mubr.f32.gmra.mxu0 %v2299
  %v2372 = vpop.f32.mrf.mxu0
  %v2373 = vadd.f32 %v2294, %v2372
  %v2374 = vpop.f32.mrf.mxu0
  %2375 = vdwg.mxu0
  %v2376 = vlaneseq
  %v2377 = vshrl.u32 %v2376, 7
  %v2378 = vsub.s32 0, %v2377
  %v2379 = vrot.slane %v1581, %v2378
  %2380 = vmatprep.subr.mxu0 0.0
  %2381 = vmatpush1.msra.mxu0 0.0
  %2382 = vmatprep.subr.mxu0 0.0
  %2383 = vmatpush1.msra.mxu0 0.0
  %2384 = vmatprep.subr.mxu0 0.0
  %2385 = vmatpush1.msra.mxu0 0.0
  %2386 = vmatprep.subr.mxu0 0.0
  %2387 = vmatpush1.msra.mxu0 0.0
  %2388 = vmatprep.subr.mxu0 0.0
  %2389 = vmatpush1.msra.mxu0 0.0
  %2390 = vmatprep.subr.mxu0 0.0
  %2391 = vmatpush1.msra.mxu0 0.0
  %2392 = vmatprep.subr.mxu0 0.0
  %2393 = vmatpush1.msra.mxu0 0.0
  %2394 = vmatprep.subr.mxu0 0.0
  %2395 = vmatpush1.msra.mxu0 0.0
  %2396 = vmatprep.subr.mxu0 0.0
  %2397 = vmatpush1.msra.mxu0 0.0
  %2398 = vmatprep.subr.mxu0 0.0
  %2399 = vmatpush1.msra.mxu0 0.0
  %2400 = vmatprep.subr.mxu0 0.0
  %2401 = vmatpush1.msra.mxu0 0.0
  %2402 = vmatprep.subr.mxu0 0.0
  %2403 = vmatpush1.msra.mxu0 0.0
  %2404 = vmatprep.subr.mxu0 0.0
  %2405 = vmatpush1.msra.mxu0 %v2285
  %2406 = vmatprep.subr.mxu0 0.0
  %2407 = vmatpush1.msra.mxu0 %v2284
  %2408 = vmatprep.subr.mxu0 0.0
  %2409 = vmatpush1.msra.mxu0 %v2283
  %2410 = vmatprep.subr.mxu0 0.0
  %2411 = vmatpush1.msra.mxu0 %v2282
  %2412 = vmatprep.subr.mxu0 0.0
  %2413 = vmatpush2.msra.mxu0 0.0
  %2414 = vmatprep.subr.mxu0 0.0
  %2415 = vmatpush2.msra.mxu0 0.0
  %2416 = vmatprep.subr.mxu0 0.0
  %2417 = vmatpush2.msra.mxu0 0.0
  %2418 = vmatprep.subr.mxu0 0.0
  %2419 = vmatpush2.msra.mxu0 0.0
  %2420 = vmatprep.subr.mxu0 0.0
  %2421 = vmatpush2.msra.mxu0 0.0
  %2422 = vmatprep.subr.mxu0 0.0
  %2423 = vmatpush2.msra.mxu0 0.0
  %2424 = vmatprep.subr.mxu0 0.0
  %2425 = vmatpush2.msra.mxu0 0.0
  %2426 = vmatprep.subr.mxu0 0.0
  %2427 = vmatpush2.msra.mxu0 0.0
  %2428 = vmatprep.subr.mxu0 0.0
  %2429 = vmatpush2.msra.mxu0 0.0
  %2430 = vmatprep.subr.mxu0 0.0
  %2431 = vmatpush2.msra.mxu0 0.0
  %2432 = vmatprep.subr.mxu0 0.0
  %2433 = vmatpush2.msra.mxu0 0.0
  %2434 = vmatprep.subr.mxu0 0.0
  %2435 = vmatpush2.msra.mxu0 0.0
  %2436 = vmatprep.subr.mxu0 0.0
  %2437 = vmatpush2.msra.mxu0 0.0
  %2438 = vmatprep.subr.mxu0 0.0
  %2439 = vmatpush2.msra.mxu0 0.0
  %2440 = vmatprep.subr.mxu0 0.0
  %2441 = vmatpush2.msra.mxu0 0.0
  %2442 = vmatprep.subr.mxu0 0.0
  %2443 = vmatpush2.msra.mxu0 0.0
  %2444 = vmatprep.mubr.f32.mxu0 0.0
  %2445 = vmatmul.mubr.f32.gmra.mxu0 %v846
  %v2446 = vpop.f32.mrf.mxu0
  %v2447 = vadd.f32 %v2379, %v2446
  %v2448 = vpop.f32.mrf.mxu0
  %2449 = vmatprep.mubr.f32.mxu0 0.0
  %2450 = vmatmul.mubr.f32.gmra.mxu0 %v849
  %v2451 = vpop.f32.mrf.mxu0
  %v2452 = vadd.f32 %v2379, %v2451
  %v2453 = vpop.f32.mrf.mxu0
  %2454 = vdwg.mxu0
  %v2456 = vsel %vm45, %v2368, 0
  %v2459 = vsel %vm45, %v2447, 0
  %2461 = vmatprep.subr.mxu0 0.0
  %2462 = vmatpush1.xpose.msra.mxu0 0.0
  %2463 = vmatprep.subr.mxu0 0.0
  %2464 = vmatpush1.xpose.msra.mxu0 0.0
  %2465 = vmatprep.subr.mxu0 0.0
  %2466 = vmatpush1.xpose.msra.mxu0 0.0
  %2467 = vmatprep.subr.mxu0 0.0
  %2468 = vmatpush1.xpose.msra.mxu0 0.0
  %2469 = vmatprep.subr.mxu0 0.0
  %2470 = vmatpush1.xpose.msra.mxu0 0.0
  %2471 = vmatprep.subr.mxu0 0.0
  %2472 = vmatpush1.xpose.msra.mxu0 0.0
  %2473 = vmatprep.subr.mxu0 0.0
  %2474 = vmatpush1.xpose.msra.mxu0 0.0
  %2475 = vmatprep.subr.mxu0 0.0
  %2476 = vmatpush1.xpose.msra.mxu0 0.0
  %2477 = vmatprep.subr.mxu0 0.0
  %2478 = vmatpush1.xpose.msra.mxu0 0.0
  %2479 = vmatprep.subr.mxu0 0.0
  %2480 = vmatpush1.xpose.msra.mxu0 0.0
  %2481 = vmatprep.subr.mxu0 0.0
  %2482 = vmatpush1.xpose.msra.mxu0 0.0
  %2483 = vmatprep.subr.mxu0 0.0
  %2484 = vmatpush1.xpose.msra.mxu0 0.0
  %2485 = vmatprep.subr.mxu0 0.0
  %2486 = vmatpush1.xpose.msra.mxu0 0.0
  %2487 = vmatprep.subr.mxu0 0.0
  %2488 = vmatpush1.xpose.msra.mxu0 0.0
  %2489 = vmatprep.subr.mxu0 0.0
  %2490 = vmatpush1.xpose.msra.mxu0 0.0
  %2491 = vmatprep.subr.mxu0 0.0
  %2492 = vmatpush1.xpose.msra.mxu0 %v2459
  %2493 = vmatprep.subr.mxu0 0.0
  %2494 = vmatpush2.xpose.msra.mxu0 0.0
  %2495 = vmatprep.subr.mxu0 0.0
  %2496 = vmatpush2.xpose.msra.mxu0 0.0
  %2497 = vmatprep.subr.mxu0 0.0
  %2498 = vmatpush2.xpose.msra.mxu0 0.0
  %2499 = vmatprep.subr.mxu0 0.0
  %2500 = vmatpush2.xpose.msra.mxu0 0.0
  %2501 = vmatprep.subr.mxu0 0.0
  %2502 = vmatpush2.xpose.msra.mxu0 0.0
  %2503 = vmatprep.subr.mxu0 0.0
  %2504 = vmatpush2.xpose.msra.mxu0 0.0
  %2505 = vmatprep.subr.mxu0 0.0
  %2506 = vmatpush2.xpose.msra.mxu0 0.0
  %2507 = vmatprep.subr.mxu0 0.0
  %2508 = vmatpush2.xpose.msra.mxu0 0.0
  %2509 = vmatprep.subr.mxu0 0.0
  %2510 = vmatpush2.xpose.msra.mxu0 0.0
  %2511 = vmatprep.subr.mxu0 0.0
  %2512 = vmatpush2.xpose.msra.mxu0 0.0
  %2513 = vmatprep.subr.mxu0 0.0
  %2514 = vmatpush2.xpose.msra.mxu0 0.0
  %2515 = vmatprep.subr.mxu0 0.0
  %2516 = vmatpush2.xpose.msra.mxu0 0.0
  %2517 = vmatprep.subr.mxu0 0.0
  %2518 = vmatpush2.xpose.msra.mxu0 0.0
  %2519 = vmatprep.subr.mxu0 0.0
  %2520 = vmatpush2.xpose.msra.mxu0 0.0
  %2521 = vmatprep.subr.mxu0 0.0
  %2522 = vmatpush2.xpose.msra.mxu0 0.0
  %2523 = vmatprep.subr.mxu0 0.0
  %2524 = vmatpush2.xpose.msra.mxu0 0.0
  %2525 = vmatprep.mubr.f32.mxu0 0.0
  %2526 = vmatmul.mubr.f32.gmra.mxu0 %v2456
  %v2527 = vpop.f32.mrf.mxu0
  %v2528 = vadd.f32 0.0, %v2527
  %v2529 = vpop.f32.mrf.mxu0
  %2530 = vdwg.mxu0
  %v2532 = vsel %vm45, %v2373, 0
  %v2535 = vsel %vm45, %v2452, 0
  %2537 = vmatprep.subr.mxu0 0.0
  %2538 = vmatpush1.xpose.msra.mxu0 0.0
  %2539 = vmatprep.subr.mxu0 0.0
  %2540 = vmatpush1.xpose.msra.mxu0 0.0
  %2541 = vmatprep.subr.mxu0 0.0
  %2542 = vmatpush1.xpose.msra.mxu0 0.0
  %2543 = vmatprep.subr.mxu0 0.0
  %2544 = vmatpush1.xpose.msra.mxu0 0.0
  %2545 = vmatprep.subr.mxu0 0.0
  %2546 = vmatpush1.xpose.msra.mxu0 0.0
  %2547 = vmatprep.subr.mxu0 0.0
  %2548 = vmatpush1.xpose.msra.mxu0 0.0
  %2549 = vmatprep.subr.mxu0 0.0
  %2550 = vmatpush1.xpose.msra.mxu0 0.0
  %2551 = vmatprep.subr.mxu0 0.0
  %2552 = vmatpush1.xpose.msra.mxu0 0.0
  %2553 = vmatprep.subr.mxu0 0.0
  %2554 = vmatpush1.xpose.msra.mxu0 0.0
  %2555 = vmatprep.subr.mxu0 0.0
  %2556 = vmatpush1.xpose.msra.mxu0 0.0
  %2557 = vmatprep.subr.mxu0 0.0
  %2558 = vmatpush1.xpose.msra.mxu0 0.0
  %2559 = vmatprep.subr.mxu0 0.0
  %2560 = vmatpush1.xpose.msra.mxu0 0.0
  %2561 = vmatprep.subr.mxu0 0.0
  %2562 = vmatpush1.xpose.msra.mxu0 0.0
  %2563 = vmatprep.subr.mxu0 0.0
  %2564 = vmatpush1.xpose.msra.mxu0 0.0
  %2565 = vmatprep.subr.mxu0 0.0
  %2566 = vmatpush1.xpose.msra.mxu0 0.0
  %2567 = vmatprep.subr.mxu0 0.0
  %2568 = vmatpush1.xpose.msra.mxu0 %v2535
  %2569 = vmatprep.subr.mxu0 0.0
  %2570 = vmatpush2.xpose.msra.mxu0 0.0
  %2571 = vmatprep.subr.mxu0 0.0
  %2572 = vmatpush2.xpose.msra.mxu0 0.0
  %2573 = vmatprep.subr.mxu0 0.0
  %2574 = vmatpush2.xpose.msra.mxu0 0.0
  %2575 = vmatprep.subr.mxu0 0.0
  %2576 = vmatpush2.xpose.msra.mxu0 0.0
  %2577 = vmatprep.subr.mxu0 0.0
  %2578 = vmatpush2.xpose.msra.mxu0 0.0
  %2579 = vmatprep.subr.mxu0 0.0
  %2580 = vmatpush2.xpose.msra.mxu0 0.0
  %2581 = vmatprep.subr.mxu0 0.0
  %2582 = vmatpush2.xpose.msra.mxu0 0.0
  %2583 = vmatprep.subr.mxu0 0.0
  %2584 = vmatpush2.xpose.msra.mxu0 0.0
  %2585 = vmatprep.subr.mxu0 0.0
  %2586 = vmatpush2.xpose.msra.mxu0 0.0
  %2587 = vmatprep.subr.mxu0 0.0
  %2588 = vmatpush2.xpose.msra.mxu0 0.0
  %2589 = vmatprep.subr.mxu0 0.0
  %2590 = vmatpush2.xpose.msra.mxu0 0.0
  %2591 = vmatprep.subr.mxu0 0.0
  %2592 = vmatpush2.xpose.msra.mxu0 0.0
  %2593 = vmatprep.subr.mxu0 0.0
  %2594 = vmatpush2.xpose.msra.mxu0 0.0
  %2595 = vmatprep.subr.mxu0 0.0
  %2596 = vmatpush2.xpose.msra.mxu0 0.0
  %2597 = vmatprep.subr.mxu0 0.0
  %2598 = vmatpush2.xpose.msra.mxu0 0.0
  %2599 = vmatprep.subr.mxu0 0.0
  %2600 = vmatpush2.xpose.msra.mxu0 0.0
  %2601 = vmatprep.mubr.f32.mxu0 0.0
  %2602 = vmatmul.mubr.f32.gmra.mxu0 %v2532
  %v2603 = vpop.f32.mrf.mxu0
  %v2604 = vadd.f32 0.0, %v2603
  %v2605 = vpop.f32.mrf.mxu0
  %2606 = vdwg.mxu0
  %v2607 = vmul.f32 %v2528, 0.17677669
  %v2608 = vmul.f32 %v2604, 0.17677669
  %v2609 = vadd.f32 %v2607, %v41
  %v2610 = vadd.f32 %v2608, %v42
  %v2611 = vsel %vm433, %v2609, -inf
  %2612 = vmax.xlane.f32.xlu0 %v2611
  %v2613 = vpop.xlane.xlu0 %2612
  %v2614 = vsel %vm433, %v2610, -inf
  %2615 = vmax.xlane.f32.xlu0 %v2614
  %v2616 = vpop.xlane.xlu0 %2615
  %v2617 = vsub.f32 %v2609, %v2613
  %v2618 = vsub.f32 %v2610, %v2616
  %v2619 = vmul.f32 %v2617, 1.442695
  %v2620 = vpow.pop %v2619
  %v2621 = vmul.f32 %v2618, 1.442695
  %v2622 = vpow.pop %v2621
  %v2623 = vsel %vm433, %v2620, 0.0
  %2624 = vadd.xlane.f32.xlu0 %v2623
  %v2625 = vpop.xlane.xlu0 %2624
  %v2626 = vsel %vm433, %v2622, 0.0
  %2627 = vadd.xlane.f32.xlu0 %v2626
  %v2628 = vpop.xlane.xlu0 %2627
  %v2629 = vrcp.pop %v2625
  %v2630 = vrcp.pop %v2628
  %v2631 = vmul.f32 %v2620, %v2629
  %v2632 = vmul.f32 %v2622, %v2630
  %v2634 = vsel %vm433, %v2631, 0
  %2636 = vmatprep.subr.mxu0 0.0
  %2637 = vmatpush1.msra.mxu0 0.0
  %2638 = vmatprep.subr.mxu0 0.0
  %2639 = vmatpush1.msra.mxu0 0.0
  %2640 = vmatprep.subr.mxu0 0.0
  %2641 = vmatpush1.msra.mxu0 0.0
  %2642 = vmatprep.subr.mxu0 0.0
  %2643 = vmatpush1.msra.mxu0 0.0
  %2644 = vmatprep.subr.mxu0 0.0
  %2645 = vmatpush1.msra.mxu0 0.0
  %2646 = vmatprep.subr.mxu0 0.0
  %2647 = vmatpush1.msra.mxu0 0.0
  %2648 = vmatprep.subr.mxu0 0.0
  %2649 = vmatpush1.msra.mxu0 0.0
  %2650 = vmatprep.subr.mxu0 0.0
  %2651 = vmatpush1.msra.mxu0 0.0
  %2652 = vmatprep.subr.mxu0 0.0
  %2653 = vmatpush1.msra.mxu0 0.0
  %2654 = vmatprep.subr.mxu0 0.0
  %2655 = vmatpush1.msra.mxu0 0.0
  %2656 = vmatprep.subr.mxu0 0.0
  %2657 = vmatpush1.msra.mxu0 0.0
  %2658 = vmatprep.subr.mxu0 0.0
  %2659 = vmatpush1.msra.mxu0 0.0
  %2660 = vmatprep.subr.mxu0 0.0
  %2661 = vmatpush1.msra.mxu0 0.0
  %2662 = vmatprep.subr.mxu0 0.0
  %2663 = vmatpush1.msra.mxu0 0.0
  %2664 = vmatprep.subr.mxu0 0.0
  %2665 = vmatpush1.msra.mxu0 0.0
  %2666 = vmatprep.subr.mxu0 0.0
  %2667 = vmatpush1.msra.mxu0 %v37
  %2668 = vmatprep.subr.mxu0 0.0
  %2669 = vmatpush2.msra.mxu0 0.0
  %2670 = vmatprep.subr.mxu0 0.0
  %2671 = vmatpush2.msra.mxu0 0.0
  %2672 = vmatprep.subr.mxu0 0.0
  %2673 = vmatpush2.msra.mxu0 0.0
  %2674 = vmatprep.subr.mxu0 0.0
  %2675 = vmatpush2.msra.mxu0 0.0
  %2676 = vmatprep.subr.mxu0 0.0
  %2677 = vmatpush2.msra.mxu0 0.0
  %2678 = vmatprep.subr.mxu0 0.0
  %2679 = vmatpush2.msra.mxu0 0.0
  %2680 = vmatprep.subr.mxu0 0.0
  %2681 = vmatpush2.msra.mxu0 0.0
  %2682 = vmatprep.subr.mxu0 0.0
  %2683 = vmatpush2.msra.mxu0 0.0
  %2684 = vmatprep.subr.mxu0 0.0
  %2685 = vmatpush2.msra.mxu0 0.0
  %2686 = vmatprep.subr.mxu0 0.0
  %2687 = vmatpush2.msra.mxu0 0.0
  %2688 = vmatprep.subr.mxu0 0.0
  %2689 = vmatpush2.msra.mxu0 0.0
  %2690 = vmatprep.subr.mxu0 0.0
  %2691 = vmatpush2.msra.mxu0 0.0
  %2692 = vmatprep.subr.mxu0 0.0
  %2693 = vmatpush2.msra.mxu0 0.0
  %2694 = vmatprep.subr.mxu0 0.0
  %2695 = vmatpush2.msra.mxu0 0.0
  %2696 = vmatprep.subr.mxu0 0.0
  %2697 = vmatpush2.msra.mxu0 0.0
  %2698 = vmatprep.subr.mxu0 0.0
  %2699 = vmatpush2.msra.mxu0 0.0
  %2700 = vmatprep.mubr.f32.mxu0 0.0
  %2701 = vmatmul.mubr.f32.gmra.mxu0 %v2634
  %v2702 = vpop.f32.mrf.mxu0
  %v2703 = vadd.f32 0.0, %v2702
  %v2704 = vpop.f32.mrf.mxu0
  %2705 = vdwg.mxu0
  %v2707 = vsel %vm433, %v2632, 0
  %2709 = vmatprep.subr.mxu0 0.0
  %2710 = vmatpush1.msra.mxu0 0.0
  %2711 = vmatprep.subr.mxu0 0.0
  %2712 = vmatpush1.msra.mxu0 0.0
  %2713 = vmatprep.subr.mxu0 0.0
  %2714 = vmatpush1.msra.mxu0 0.0
  %2715 = vmatprep.subr.mxu0 0.0
  %2716 = vmatpush1.msra.mxu0 0.0
  %2717 = vmatprep.subr.mxu0 0.0
  %2718 = vmatpush1.msra.mxu0 0.0
  %2719 = vmatprep.subr.mxu0 0.0
  %2720 = vmatpush1.msra.mxu0 0.0
  %2721 = vmatprep.subr.mxu0 0.0
  %2722 = vmatpush1.msra.mxu0 0.0
  %2723 = vmatprep.subr.mxu0 0.0
  %2724 = vmatpush1.msra.mxu0 0.0
  %2725 = vmatprep.subr.mxu0 0.0
  %2726 = vmatpush1.msra.mxu0 0.0
  %2727 = vmatprep.subr.mxu0 0.0
  %2728 = vmatpush1.msra.mxu0 0.0
  %2729 = vmatprep.subr.mxu0 0.0
  %2730 = vmatpush1.msra.mxu0 0.0
  %2731 = vmatprep.subr.mxu0 0.0
  %2732 = vmatpush1.msra.mxu0 0.0
  %2733 = vmatprep.subr.mxu0 0.0
  %2734 = vmatpush1.msra.mxu0 0.0
  %2735 = vmatprep.subr.mxu0 0.0
  %2736 = vmatpush1.msra.mxu0 0.0
  %2737 = vmatprep.subr.mxu0 0.0
  %2738 = vmatpush1.msra.mxu0 0.0
  %2739 = vmatprep.subr.mxu0 0.0
  %2740 = vmatpush1.msra.mxu0 %v38
  %2741 = vmatprep.subr.mxu0 0.0
  %2742 = vmatpush2.msra.mxu0 0.0
  %2743 = vmatprep.subr.mxu0 0.0
  %2744 = vmatpush2.msra.mxu0 0.0
  %2745 = vmatprep.subr.mxu0 0.0
  %2746 = vmatpush2.msra.mxu0 0.0
  %2747 = vmatprep.subr.mxu0 0.0
  %2748 = vmatpush2.msra.mxu0 0.0
  %2749 = vmatprep.subr.mxu0 0.0
  %2750 = vmatpush2.msra.mxu0 0.0
  %2751 = vmatprep.subr.mxu0 0.0
  %2752 = vmatpush2.msra.mxu0 0.0
  %2753 = vmatprep.subr.mxu0 0.0
  %2754 = vmatpush2.msra.mxu0 0.0
  %2755 = vmatprep.subr.mxu0 0.0
  %2756 = vmatpush2.msra.mxu0 0.0
  %2757 = vmatprep.subr.mxu0 0.0
  %2758 = vmatpush2.msra.mxu0 0.0
  %2759 = vmatprep.subr.mxu0 0.0
  %2760 = vmatpush2.msra.mxu0 0.0
  %2761 = vmatprep.subr.mxu0 0.0
  %2762 = vmatpush2.msra.mxu0 0.0
  %2763 = vmatprep.subr.mxu0 0.0
  %2764 = vmatpush2.msra.mxu0 0.0
  %2765 = vmatprep.subr.mxu0 0.0
  %2766 = vmatpush2.msra.mxu0 0.0
  %2767 = vmatprep.subr.mxu0 0.0
  %2768 = vmatpush2.msra.mxu0 0.0
  %2769 = vmatprep.subr.mxu0 0.0
  %2770 = vmatpush2.msra.mxu0 0.0
  %2771 = vmatprep.subr.mxu0 0.0
  %2772 = vmatpush2.msra.mxu0 0.0
  %2773 = vmatprep.mubr.f32.mxu0 0.0
  %2774 = vmatmul.mubr.f32.gmra.mxu0 %v2707
  %v2775 = vpop.f32.mrf.mxu0
  %v2776 = vadd.f32 0.0, %v2775
  %v2777 = vpop.f32.mrf.mxu0
  %2778 = vdwg.mxu0
  %v2779 = vlaneseq
  %v2780 = vshrl.u32 %v2779, 7
  %v2781 = vsub.s32 1, %v2780
  %v2782 = vrot.slane %v1581, %v2781
  %v2784 = vsel %vm45, %v2703, 0
  %v2787 = vsel %vm45, %v2776, 0
  %2789 = vmatprep.subr.mxu0 0.0
  %2790 = vmatpush1.msra.mxu0 0.0
  %2791 = vmatprep.subr.mxu0 0.0
  %2792 = vmatpush1.msra.mxu0 0.0
  %2793 = vmatprep.subr.mxu0 0.0
  %2794 = vmatpush1.msra.mxu0 0.0
  %2795 = vmatprep.subr.mxu0 0.0
  %2796 = vmatpush1.msra.mxu0 0.0
  %2797 = vmatprep.subr.mxu0 0.0
  %2798 = vmatpush1.msra.mxu0 0.0
  %2799 = vmatprep.subr.mxu0 0.0
  %2800 = vmatpush1.msra.mxu0 0.0
  %2801 = vmatprep.subr.mxu0 0.0
  %2802 = vmatpush1.msra.mxu0 0.0
  %2803 = vmatprep.subr.mxu0 0.0
  %2804 = vmatpush1.msra.mxu0 0.0
  %2805 = vmatprep.subr.mxu0 0.0
  %2806 = vmatpush1.msra.mxu0 0.0
  %2807 = vmatprep.subr.mxu0 0.0
  %2808 = vmatpush1.msra.mxu0 0.0
  %2809 = vmatprep.subr.mxu0 0.0
  %2810 = vmatpush1.msra.mxu0 0.0
  %2811 = vmatprep.subr.mxu0 0.0
  %2812 = vmatpush1.msra.mxu0 0.0
  %2813 = vmatprep.subr.mxu0 0.0
  %2814 = vmatpush1.msra.mxu0 %v2290
  %2815 = vmatprep.subr.mxu0 0.0
  %2816 = vmatpush1.msra.mxu0 %v2289
  %2817 = vmatprep.subr.mxu0 0.0
  %2818 = vmatpush1.msra.mxu0 %v2288
  %2819 = vmatprep.subr.mxu0 0.0
  %2820 = vmatpush1.msra.mxu0 %v2287
  %2821 = vmatprep.subr.mxu0 0.0
  %2822 = vmatpush2.msra.mxu0 0.0
  %2823 = vmatprep.subr.mxu0 0.0
  %2824 = vmatpush2.msra.mxu0 0.0
  %2825 = vmatprep.subr.mxu0 0.0
  %2826 = vmatpush2.msra.mxu0 0.0
  %2827 = vmatprep.subr.mxu0 0.0
  %2828 = vmatpush2.msra.mxu0 0.0
  %2829 = vmatprep.subr.mxu0 0.0
  %2830 = vmatpush2.msra.mxu0 0.0
  %2831 = vmatprep.subr.mxu0 0.0
  %2832 = vmatpush2.msra.mxu0 0.0
  %2833 = vmatprep.subr.mxu0 0.0
  %2834 = vmatpush2.msra.mxu0 0.0
  %2835 = vmatprep.subr.mxu0 0.0
  %2836 = vmatpush2.msra.mxu0 0.0
  %2837 = vmatprep.subr.mxu0 0.0
  %2838 = vmatpush2.msra.mxu0 0.0
  %2839 = vmatprep.subr.mxu0 0.0
  %2840 = vmatpush2.msra.mxu0 0.0
  %2841 = vmatprep.subr.mxu0 0.0
  %2842 = vmatpush2.msra.mxu0 0.0
  %2843 = vmatprep.subr.mxu0 0.0
  %2844 = vmatpush2.msra.mxu0 0.0
  %2845 = vmatprep.subr.mxu0 0.0
  %2846 = vmatpush2.msra.mxu0 0.0
  %2847 = vmatprep.subr.mxu0 0.0
  %2848 = vmatpush2.msra.mxu0 0.0
  %2849 = vmatprep.subr.mxu0 0.0
  %2850 = vmatpush2.msra.mxu0 0.0
  %2851 = vmatprep.subr.mxu0 0.0
  %2852 = vmatpush2.msra.mxu0 0.0
  %2853 = vmatprep.mubr.f32.mxu0 0.0
  %2854 = vmatmul.mubr.f32.gmra.mxu0 %v2784
  %v2855 = vpop.f32.mrf.mxu0
  %v2856 = vadd.f32 %v2782, %v2855
  %v2857 = vpop.f32.mrf.mxu0
  %2858 = vmatprep.mubr.f32.mxu0 0.0
  %2859 = vmatmul.mubr.f32.gmra.mxu0 %v2787
  %v2860 = vpop.f32.mrf.mxu0
  %v2861 = vadd.f32 %v2782, %v2860
  %v2862 = vpop.f32.mrf.mxu0
  %2863 = vdwg.mxu0
  %v2864 = vadd.f32 %v2222, %v2856
  %v2865 = vadd.f32 %v2223, %v2861
  %v2866 = vsel %vm45, %v2864, 0.0
  %2867 = vadd.xlane.f32.xlu0 %v2866
  %v2868 = vpop.xlane.xlu0 %2867
  %v2869 = vsel %vm45, %v2865, 0.0
  %2870 = vadd.xlane.f32.xlu0 %v2869
  %v2871 = vpop.xlane.xlu0 %2870
  %v2872 = vmul.f32 %v2868, %v52
  %v2873 = vmul.f32 %v2871, %v52
  %v2874 = vsub.f32 %v2864, %v2872
  %v2875 = vsub.f32 %v2865, %v2873
  %v2876 = vmul.f32 %v2874, %v2874
  %v2877 = vmul.f32 %v2875, %v2875
  %v2878 = vsel %vm45, %v2876, 0.0
  %2879 = vadd.xlane.f32.xlu0 %v2878
  %v2880 = vpop.xlane.xlu0 %2879
  %v2881 = vsel %vm45, %v2877, 0.0
  %2882 = vadd.xlane.f32.xlu0 %v2881
  %v2883 = vpop.xlane.xlu0 %2882
  %v2884 = vmul.f32 %v2880, 0.032258064
  %v2885 = vmul.f32 %v2883, 0.032258064
  %v2886 = vrsqrt.pop %v2884
  %v2887 = vmul.f32 %v2884, %v2886
  %vm2888 = vcmp.eq.f32.partialorder %v2884, inf
  %v2889 = vsel %vm2888, %v2884, %v2887
  %vm2890 = vcmp.eq.f32.partialorder %v2884, 0.0
  %v2891 = vand.u32 %v2884, 2147483648
  %v2892 = vsel %vm2890, %v2891, %v2889
  %v2893 = vrsqrt.pop %v2885
  %v2894 = vmul.f32 %v2885, %v2893
  %vm2895 = vcmp.eq.f32.partialorder %v2885, inf
  %v2896 = vsel %vm2895, %v2885, %v2894
  %vm2897 = vcmp.eq.f32.partialorder %v2885, 0.0
  %v2898 = vand.u32 %v2885, 2147483648
  %v2899 = vsel %vm2897, %v2898, %v2896
  %v2900 = vadd.f32 %v2892, 1e-06
  %v2901 = vadd.f32 %v2899, 1e-06
  %v2902 = vrcp.pop %v2900
  %v2903 = vrcp.pop %v2901
  %v2904 = vlaneseq
  %v2905 = vshrl.u32 %v2904, 7
  %v2906 = vsub.s32 2, %v2905
  %v2907 = vrot.slane %v1581, %v2906
  %v2908 = vmul.f32 %v2907, %v2874
  %v2909 = vmul.f32 %v2907, %v2875
  %v2910 = vmul.f32 %v2908, %v2902
  %v2911 = vmul.f32 %v2909, %v2903
  %v2912 = vlaneseq
  %v2913 = vshrl.u32 %v2912, 7
  %v2914 = vsub.s32 3, %v2913
  %v2915 = vrot.slane %v1581, %v2914
  %v2916 = vadd.f32 %v2910, %v2915
  %v2917 = vadd.f32 %v2911, %v2915
  %s2918 = scalar_lea.vmem %s6, 32
  %v2919 = vld [vmem:[%s2918] sm:$0xff]
  %v2920 = vld [vmem:[%s2918 + $0x8] sm:$0xff]
  %v2921 = vld [vmem:[%s2918 + $0x10] sm:$0xff]
  %v2922 = vld [vmem:[%s2918 + $0x18] sm:$0xff]
  %s2923 = scalar_lea.vmem %s7, 1
  %v2924 = vld [vmem:[%s2923] sm:$0x1]
  %v2926 = vlaneseq
  %v2927 = vshrl.u32 %v2926, 7
  %v2928 = vsub.s32 0, %v2927
  %v2929 = vrot.slane %v2924, %v2928
  %v2932 = vsel %vm45, %v2916, 0
  %v2935 = vsel %vm45, %v2917, 0
  %2937 = vmatprep.subr.mxu0 0.0
  %2938 = vmatpush1.msra.mxu0 0.0
  %2939 = vmatprep.subr.mxu0 0.0
  %2940 = vmatpush1.msra.mxu0 0.0
  %2941 = vmatprep.subr.mxu0 0.0
  %2942 = vmatpush1.msra.mxu0 0.0
  %2943 = vmatprep.subr.mxu0 0.0
  %2944 = vmatpush1.msra.mxu0 0.0
  %2945 = vmatprep.subr.mxu0 0.0
  %2946 = vmatpush1.msra.mxu0 0.0
  %2947 = vmatprep.subr.mxu0 0.0
  %2948 = vmatpush1.msra.mxu0 0.0
  %2949 = vmatprep.subr.mxu0 0.0
  %2950 = vmatpush1.msra.mxu0 0.0
  %2951 = vmatprep.subr.mxu0 0.0
  %2952 = vmatpush1.msra.mxu0 0.0
  %2953 = vmatprep.subr.mxu0 0.0
  %2954 = vmatpush1.msra.mxu0 0.0
  %2955 = vmatprep.subr.mxu0 0.0
  %2956 = vmatpush1.msra.mxu0 0.0
  %2957 = vmatprep.subr.mxu0 0.0
  %2958 = vmatpush1.msra.mxu0 0.0
  %2959 = vmatprep.subr.mxu0 0.0
  %2960 = vmatpush1.msra.mxu0 0.0
  %2961 = vmatprep.subr.mxu0 0.0
  %2962 = vmatpush1.msra.mxu0 %v2922
  %2963 = vmatprep.subr.mxu0 0.0
  %2964 = vmatpush1.msra.mxu0 %v2921
  %2965 = vmatprep.subr.mxu0 0.0
  %2966 = vmatpush1.msra.mxu0 %v2920
  %2967 = vmatprep.subr.mxu0 0.0
  %2968 = vmatpush1.msra.mxu0 %v2919
  %2969 = vmatprep.subr.mxu0 0.0
  %2970 = vmatpush2.msra.mxu0 0.0
  %2971 = vmatprep.subr.mxu0 0.0
  %2972 = vmatpush2.msra.mxu0 0.0
  %2973 = vmatprep.subr.mxu0 0.0
  %2974 = vmatpush2.msra.mxu0 0.0
  %2975 = vmatprep.subr.mxu0 0.0
  %2976 = vmatpush2.msra.mxu0 0.0
  %2977 = vmatprep.subr.mxu0 0.0
  %2978 = vmatpush2.msra.mxu0 0.0
  %2979 = vmatprep.subr.mxu0 0.0
  %2980 = vmatpush2.msra.mxu0 0.0
  %2981 = vmatprep.subr.mxu0 0.0
  %2982 = vmatpush2.msra.mxu0 0.0
  %2983 = vmatprep.subr.mxu0 0.0
  %2984 = vmatpush2.msra.mxu0 0.0
  %2985 = vmatprep.subr.mxu0 0.0
  %2986 = vmatpush2.msra.mxu0 0.0
  %2987 = vmatprep.subr.mxu0 0.0
  %2988 = vmatpush2.msra.mxu0 0.0
  %2989 = vmatprep.subr.mxu0 0.0
  %2990 = vmatpush2.msra.mxu0 0.0
  %2991 = vmatprep.subr.mxu0 0.0
  %2992 = vmatpush2.msra.mxu0 0.0
  %2993 = vmatprep.subr.mxu0 0.0
  %2994 = vmatpush2.msra.mxu0 0.0
  %2995 = vmatprep.subr.mxu0 0.0
  %2996 = vmatpush2.msra.mxu0 0.0
  %2997 = vmatprep.subr.mxu0 0.0
  %2998 = vmatpush2.msra.mxu0 0.0
  %2999 = vmatprep.subr.mxu0 0.0
  %3000 = vmatpush2.msra.mxu0 0.0
  %3001 = vmatprep.mubr.f32.mxu0 0.0
  %3002 = vmatmul.mubr.f32.gmra.mxu0 %v2932
  %v3003 = vpop.f32.mrf.mxu0
  %v3004 = vadd.f32 %v2929, %v3003
  %v3005 = vpop.f32.mrf.mxu0
  %3006 = vmatprep.mubr.f32.mxu0 0.0
  %3007 = vmatmul.mubr.f32.gmra.mxu0 %v2935
  %v3008 = vpop.f32.mrf.mxu0
  %v3009 = vadd.f32 %v2929, %v3008
  %v3010 = vpop.f32.mrf.mxu0
  %3011 = vdwg.mxu0
  %s3012 = scalar_lea.vmem %s8, 64
  %v3013 = vld [vmem:[%s3012] sm:$0xff]
  %v3014 = vld [vmem:[%s3012 + $0x8] sm:$0xff]
  %v3015 = vld [vmem:[%s3012 + $0x10] sm:$0xff]
  %v3016 = vld [vmem:[%s3012 + $0x18] sm:$0xff]
  %v3017 = vld [vmem:[%s3012 + $0x20] sm:$0xff]
  %v3018 = vld [vmem:[%s3012 + $0x28] sm:$0xff]
  %v3019 = vld [vmem:[%s3012 + $0x30] sm:$0xff]
  %v3020 = vld [vmem:[%s3012 + $0x38] sm:$0xff]
  %v3022 = vsel %vm1489, %v3004, 0
  %v3025 = vsel %vm1489, %v3009, 0
  %3027 = vmatprep.subr.mxu0 0.0
  %3028 = vmatpush1.msra.mxu0 0.0
  %3029 = vmatprep.subr.mxu0 0.0
  %3030 = vmatpush1.msra.mxu0 0.0
  %3031 = vmatprep.subr.mxu0 0.0
  %3032 = vmatpush1.msra.mxu0 0.0
  %3033 = vmatprep.subr.mxu0 0.0
  %3034 = vmatpush1.msra.mxu0 0.0
  %3035 = vmatprep.subr.mxu0 0.0
  %3036 = vmatpush1.msra.mxu0 0.0
  %3037 = vmatprep.subr.mxu0 0.0
  %3038 = vmatpush1.msra.mxu0 0.0
  %3039 = vmatprep.subr.mxu0 0.0
  %3040 = vmatpush1.msra.mxu0 0.0
  %3041 = vmatprep.subr.mxu0 0.0
  %3042 = vmatpush1.msra.mxu0 0.0
  %3043 = vmatprep.subr.mxu0 0.0
  %3044 = vmatpush1.msra.mxu0 %v3020
  %3045 = vmatprep.subr.mxu0 0.0
  %3046 = vmatpush1.msra.mxu0 %v3019
  %3047 = vmatprep.subr.mxu0 0.0
  %3048 = vmatpush1.msra.mxu0 %v3018
  %3049 = vmatprep.subr.mxu0 0.0
  %3050 = vmatpush1.msra.mxu0 %v3017
  %3051 = vmatprep.subr.mxu0 0.0
  %3052 = vmatpush1.msra.mxu0 %v3016
  %3053 = vmatprep.subr.mxu0 0.0
  %3054 = vmatpush1.msra.mxu0 %v3015
  %3055 = vmatprep.subr.mxu0 0.0
  %3056 = vmatpush1.msra.mxu0 %v3014
  %3057 = vmatprep.subr.mxu0 0.0
  %3058 = vmatpush1.msra.mxu0 %v3013
  %3059 = vmatprep.subr.mxu0 0.0
  %3060 = vmatpush2.msra.mxu0 0.0
  %3061 = vmatprep.subr.mxu0 0.0
  %3062 = vmatpush2.msra.mxu0 0.0
  %3063 = vmatprep.subr.mxu0 0.0
  %3064 = vmatpush2.msra.mxu0 0.0
  %3065 = vmatprep.subr.mxu0 0.0
  %3066 = vmatpush2.msra.mxu0 0.0
  %3067 = vmatprep.subr.mxu0 0.0
  %3068 = vmatpush2.msra.mxu0 0.0
  %3069 = vmatprep.subr.mxu0 0.0
  %3070 = vmatpush2.msra.mxu0 0.0
  %3071 = vmatprep.subr.mxu0 0.0
  %3072 = vmatpush2.msra.mxu0 0.0
  %3073 = vmatprep.subr.mxu0 0.0
  %3074 = vmatpush2.msra.mxu0 0.0
  %3075 = vmatprep.subr.mxu0 0.0
  %3076 = vmatpush2.msra.mxu0 0.0
  %3077 = vmatprep.subr.mxu0 0.0
  %3078 = vmatpush2.msra.mxu0 0.0
  %3079 = vmatprep.subr.mxu0 0.0
  %3080 = vmatpush2.msra.mxu0 0.0
  %3081 = vmatprep.subr.mxu0 0.0
  %3082 = vmatpush2.msra.mxu0 0.0
  %3083 = vmatprep.subr.mxu0 0.0
  %3084 = vmatpush2.msra.mxu0 0.0
  %3085 = vmatprep.subr.mxu0 0.0
  %3086 = vmatpush2.msra.mxu0 0.0
  %3087 = vmatprep.subr.mxu0 0.0
  %3088 = vmatpush2.msra.mxu0 0.0
  %3089 = vmatprep.subr.mxu0 0.0
  %3090 = vmatpush2.msra.mxu0 0.0
  %3091 = vmatprep.mubr.f32.mxu0 0.0
  %3092 = vmatmul.mubr.f32.gmra.mxu0 %v3022
  %v3093 = vpop.f32.mrf.mxu0
  %v3094 = vadd.f32 0.0, %v3093
  %v3095 = vpop.f32.mrf.mxu0
  %3096 = vmatprep.mubr.f32.mxu0 0.0
  %3097 = vmatmul.mubr.f32.gmra.mxu0 %v3025
  %v3098 = vpop.f32.mrf.mxu0
  %v3099 = vadd.f32 0.0, %v3098
  %v3100 = vpop.f32.mrf.mxu0
  %3101 = vdwg.mxu0
  %v3102 = vadd.f32 %v2864, %v3094
  %v3103 = vadd.f32 %v2865, %v3099
  %v3104 = vlaneseq
  %v3105 = vshrl.u32 %v3104, 7
  %v3106 = vsub.s32 4, %v3105
  %v3107 = vrot.slane %v1581, %v3106
  %v3108 = vadd.f32 %v3102, %v3107
  %v3109 = vadd.f32 %v3103, %v3107
  %v3110 = vld [vmem:[%s9] sm:$0x3]
  %v3111 = vsel %vm45, %v3108, 0.0
  %3112 = vadd.xlane.f32.xlu0 %v3111
  %v3113 = vpop.xlane.xlu0 %3112
  %v3114 = vsel %vm45, %v3109, 0.0
  %3115 = vadd.xlane.f32.xlu0 %v3114
  %v3116 = vpop.xlane.xlu0 %3115
  %v3117 = vmul.f32 %v3113, %v52
  %v3118 = vmul.f32 %v3116, %v52
  %v3119 = vsub.f32 %v3108, %v3117
  %v3120 = vsub.f32 %v3109, %v3118
  %v3121 = vmul.f32 %v3119, %v3119
  %v3122 = vmul.f32 %v3120, %v3120
  %v3123 = vsel %vm45, %v3121, 0.0
  %3124 = vadd.xlane.f32.xlu0 %v3123
  %v3125 = vpop.xlane.xlu0 %3124
  %v3126 = vsel %vm45, %v3122, 0.0
  %3127 = vadd.xlane.f32.xlu0 %v3126
  %v3128 = vpop.xlane.xlu0 %3127
  %v3129 = vmul.f32 %v3125, 0.032258064
  %v3130 = vmul.f32 %v3128, 0.032258064
  %v3131 = vrsqrt.pop %v3129
  %v3132 = vmul.f32 %v3129, %v3131
  %vm3133 = vcmp.eq.f32.partialorder %v3129, inf
  %v3134 = vsel %vm3133, %v3129, %v3132
  %vm3135 = vcmp.eq.f32.partialorder %v3129, 0.0
  %v3136 = vand.u32 %v3129, 2147483648
  %v3137 = vsel %vm3135, %v3136, %v3134
  %v3138 = vrsqrt.pop %v3130
  %v3139 = vmul.f32 %v3130, %v3138
  %vm3140 = vcmp.eq.f32.partialorder %v3130, inf
  %v3141 = vsel %vm3140, %v3130, %v3139
  %vm3142 = vcmp.eq.f32.partialorder %v3130, 0.0
  %v3143 = vand.u32 %v3130, 2147483648
  %v3144 = vsel %vm3142, %v3143, %v3141
  %v3145 = vadd.f32 %v3137, 1e-06
  %v3146 = vadd.f32 %v3144, 1e-06
  %v3147 = vrcp.pop %v3145
  %v3148 = vrcp.pop %v3146
  %v3149 = vlaneseq
  %v3150 = vshrl.u32 %v3149, 7
  %v3151 = vsub.s32 0, %v3150
  %v3152 = vrot.slane %v3110, %v3151
  %v3153 = vmul.f32 %v3152, %v3119
  %v3154 = vmul.f32 %v3152, %v3120
  %v3155 = vmul.f32 %v3153, %v3147
  %v3156 = vmul.f32 %v3154, %v3148
  %v3157 = vlaneseq
  %v3158 = vshrl.u32 %v3157, 7
  %v3159 = vsub.s32 1, %v3158
  %v3160 = vrot.slane %v3110, %v3159
  %v3161 = vadd.f32 %v3155, %v3160
  %v3162 = vadd.f32 %v3156, %v3160
  %3163 = vst.msk [vmem:[%s10] sm:$0xff] %vm45, %v3161
  %3164 = vst.msk [vmem:[%s10 + $0x8] sm:$0xff] %vm45, %v3162
  // Predicated region
  $region42: #{decoder_forward.1} parent=0 // pred_check
    _
  $region43: #{decoder_forward.1} parent=0 // pred_check_branch
    %3166 = sbr.rel (0) target = $region45
  $region44: #{decoder_forward.1} parent=0 // pred_region
    _
  $region45: #{decoder_forward.1} parent=0 // pred_fallthru
    _
  // Predicated region
  $region46: #{decoder_forward.1} parent=0 // pred_check
    _
  $region47: #{decoder_forward.1} parent=0 // pred_check_branch
    %3168 = sbr.rel (0) target = $region49
  $region48: #{decoder_forward.1} parent=0 // pred_region
    _
  $region49: #{decoder_forward.1} parent=0 // pred_fallthru
    _

</llo_original>
